<compile_context>
chip_gen: v7x
topology: tpu7x:2x2x1
jax: 0.10.0
libtpu: 0.0.40
codegen_flags: <defaults>
</compile_context>

<pallas_src>
import math

import jax
import jax.numpy as jnp
from jax import lax
from jax.experimental import pallas as pl
from jax.experimental.pallas import tpu as pltpu

D_MODEL = 128
N_HEAD = 4
HEAD_DIM = D_MODEL // N_HEAD
D_FF = 256
EPS = 1e-5  # torch.nn.LayerNorm default

# Per-head lane masking requires heads to partition the lane axis cleanly.
assert D_MODEL % N_HEAD == 0, "per-head lane masking requires D_MODEL % N_HEAD == 0"


def _layernorm(x, w, b):
    mean = jnp.mean(x, axis=-1, keepdims=True)
    xc = x - mean
    var = jnp.mean(xc * xc, axis=-1, keepdims=True)   # biased var (torch LayerNorm)
    return xc * lax.rsqrt(var + EPS) * w + b


def _mm_t(a, w):
    # a @ w.T (torch.nn.Linear weight layout); MXU inputs in w.dtype, f32 accumulate.
    return lax.dot_general(a.astype(w.dtype), w, (((1,), (1,)), ((), ())),
                           preferred_element_type=jnp.float32)


def _build_kernel(*, block_batch, seq, num_layers, has_final_norm):
    BT, S = block_batch, seq
    R = BT * S

    def kernel(src_ref, pos_ref,
               wqk_ref, bqk_ref, wv_ref, bv_ref, wo_ref, bo_ref,
               w1_ref, b1_ref, w2_ref, b2_ref,
               ln1w_ref, ln1b_ref, ln2w_ref, ln2b_ref,
               *rest):
        if has_final_norm:
            fnw_ref, fnb_ref, out_ref, x_sc = rest
        else:
            out_ref, x_sc = rest

        # TODO(synk): src_mask / src_key_padding_mask are None in this usage; additive
        # attention masking is not implemented here.

        w_dt = wqk_ref.dtype   # MXU input dtype (bf16 in production, f32 for debug)

        # Residual stream for this batch block lives in VMEM across ALL layers.
        x_sc[...] = src_ref[...].astype(jnp.float32).reshape(R, D_MODEL)

        # Per-head lane masks built ONCE per grid step (hoisted out of layer/head loops).
        lane = lax.broadcasted_iota(jnp.int32, (1, 1, D_MODEL), 2)
        head_masks = [((lane >= h * HEAD_DIM) &
                       (lane < (h + 1) * HEAD_DIM)).astype(w_dt)
                      for h in range(N_HEAD)]

        pos = pos_ref[...].astype(jnp.float32).reshape(R, D_MODEL)

        def layer_body(l, carry):
            x = x_sc[...]                                  # (R, D) f32 residual stream
            qk_in = x + pos                                # with_pos_embed(src, pos)

            # Fused (pre-scaled) Q/K projection: one (R, 256) matmul.
            qk = _mm_t(qk_in, wqk_ref[l]) + bqk_ref[l]     # 1/sqrt(hd) folded into W_q,b_q
            v = _mm_t(x, wv_ref[l]) + bv_ref[l]            # value = src (no pos)

            q3 = qk[:, :D_MODEL].reshape(BT, S, D_MODEL).astype(w_dt)
            k3 = qk[:, D_MODEL:].reshape(BT, S, D_MODEL).astype(w_dt)
            v3 = v.reshape(BT, S, D_MODEL).astype(w_dt)

            # Multi-head attention via per-head lane masking, batched over batch rows
            # with einsum (no Python row loop / concatenate); rows never mix.
            acc = jnp.zeros((BT, S, D_MODEL), jnp.float32)
            for m in head_masks:
                s = jnp.einsum('bqd,bkd->bqk', q3 * m, k3,
                               preferred_element_type=jnp.float32)   # (BT, S, S)
                s = s - jnp.max(s, axis=-1, keepdims=True)
                e = jnp.exp(s)
                a = e * pl.reciprocal(jnp.sum(e, axis=-1, keepdims=True), approx=True)
                acc = acc + jnp.einsum('bqk,bkd->bqd', a.astype(w_dt), v3 * m,
                                       preferred_element_type=jnp.float32)
            # TODO(synk): for DETR-scale S (hundreds), replace the full (S,S) scores
            # with a KV-tiled online-softmax (flash-style) inner loop.

            attn = _mm_t(acc.reshape(R, D_MODEL), wo_ref[l]) + bo_ref[l]   # out_proj
            y = _layernorm(x + attn, ln1w_ref[l], ln1b_ref[l])             # norm1

            h1 = jnp.maximum(_mm_t(y, w1_ref[l]) + b1_ref[l], 0.0)         # linear1+relu
            h2 = _mm_t(h1, w2_ref[l]) + b2_ref[l]                          # linear2
            x_sc[...] = _layernorm(y + h2, ln2w_ref[l], ln2b_ref[l])       # norm2 -> carry
            return carry

        lax.fori_loop(0, num_layers, layer_body, 0, unroll=False)

        final = x_sc[...]
        if has_final_norm:
            final = _layernorm(final, fnw_ref[...], fnb_ref[...])
        out_ref[...] = final.reshape(BT, S, D_MODEL).astype(out_ref.dtype)

    return kernel


# ------------------- one-time parameter packing (model build) -------------------
def prepare_encoder_params(layer_params, final_norm=None, *, mxu_dtype=jnp.bfloat16):
    """Stack per-layer params ONCE (outside the per-call path), fold 1/sqrt(head_dim)
    into W_q / b_q, and pre-cast matmul weights to the MXU input dtype."""
    scale = 1.0 / math.sqrt(HEAD_DIM)
    D = D_MODEL
    wq = jnp.stack([lp[0][:D] for lp in layer_params]) * scale
    wk = jnp.stack([lp[0][D:2 * D] for lp in layer_params])
    wqk = jnp.concatenate([wq, wk], axis=1).astype(mxu_dtype)            # (L, 2D, D)
    wv = jnp.stack([lp[0][2 * D:] for lp in layer_params]).astype(mxu_dtype)
    bq = jnp.stack([lp[1][:, :D] for lp in layer_params]) * scale
    bk = jnp.stack([lp[1][:, D:2 * D] for lp in layer_params])
    bqk = jnp.concatenate([bq, bk], axis=2).astype(jnp.float32)          # (L, 1, 2D)
    bv = jnp.stack([lp[1][:, 2 * D:] for lp in layer_params]).astype(jnp.float32)
    wo = jnp.stack([lp[2] for lp in layer_params]).astype(mxu_dtype)
    bo = jnp.stack([lp[3] for lp in layer_params]).astype(jnp.float32)
    w1 = jnp.stack([lp[4] for lp in layer_params]).astype(mxu_dtype)
    b1 = jnp.stack([lp[5] for lp in layer_params]).astype(jnp.float32)
    w2 = jnp.stack([lp[6] for lp in layer_params]).astype(mxu_dtype)
    b2 = jnp.stack([lp[7] for lp in layer_params]).astype(jnp.float32)
    ln1w = jnp.stack([lp[8] for lp in layer_params]).astype(jnp.float32)
    ln1b = jnp.stack([lp[9] for lp in layer_params]).astype(jnp.float32)
    ln2w = jnp.stack([lp[10] for lp in layer_params]).astype(jnp.float32)
    ln2b = jnp.stack([lp[11] for lp in layer_params]).astype(jnp.float32)
    packed = [wqk, bqk, wv, bv, wo, bo, w1, b1, w2, b2, ln1w, ln1b, ln2w, ln2b]
    if final_norm is not None:
        packed += [final_norm[0].astype(jnp.float32), final_norm[1].astype(jnp.float32)]
    return tuple(packed)


def _auto_block_batch(B, S, target_rows=512):
    """Pick block_batch so BT*S feeds the MXU, while keeping >=2 grid steps
    (so v7x's 2 TensorCores both get work via the 'parallel' batch axis)."""
    bb = max(1, min(B, max(1, target_rows // max(S, 1))))
    while bb > 1 and (B % bb != 0 or B // bb < 2):
        bb -= 1
    return bb


def transformer_encoder(src, pos, packed, *, block_batch=None, out_dtype=None):
    """Mirrors TransformerEncoder.forward (mask / key_padding_mask = None).

    One fused pallas_call over grid (B // block_batch,); all layers run inside the
    kernel with weights fully VMEM-resident.  `packed` comes from
    prepare_encoder_params (stack/cast done once at model-build time).
    """
    B, S, D = src.shape
    assert D == D_MODEL
    num_layers = int(packed[0].shape[0])
    has_final_norm = len(packed) == 16
    out_dtype = src.dtype if out_dtype is None else out_dtype
    if block_batch is None:
        block_batch = _auto_block_batch(B, S)
    assert B % block_batch == 0, "block_batch must divide batch"

    act_spec = pl.BlockSpec((block_batch, S, D), lambda b: (b, 0, 0))
    # Weights: one full-array block with a constant index_map -> VMEM-resident;
    # no per-layer / per-step weight streaming DMAs.
    param_specs = [pl.BlockSpec(tuple(p.shape), (lambda b, n=p.ndim: (0,) * n))
                   for p in packed]
    in_specs = [act_spec, act_spec] + param_specs

    # ---- VMEM budget (generation-aware) -------------------------------------
    rows = block_batch * S
    act_block = rows * D
    io_bytes = act_block * (2 * src.dtype.itemsize + jnp.dtype(out_dtype).itemsize)
    weight_bytes = sum(int(p.size) * p.dtype.itemsize for p in packed)
    scratch_bytes = act_block * 4                                   # f32 residual carry
    tmp_bytes = rows * (6 * D + D_FF) * 4 + 2 * block_batch * S * S * 4
    need = 2 * io_bytes + 2 * weight_bytes + scratch_bytes + tmp_bytes + (8 << 20)
    try:
        cap = int(getattr(pltpu.get_tpu_info(), "vmem_capacity_bytes", 64 << 20))
    except Exception:
        cap = 64 << 20                       # conservative: v7x has 64 MiB per TC
    cap_margin = (cap * 3) // 4              # ~48 MiB on v7x, ~96 MiB on v5e/v6e
    vmem_limit = int(max(min(need, cap_margin), min(32 << 20, cap_margin)))

    kernel = _build_kernel(block_batch=block_batch, seq=S,
                           num_layers=num_layers, has_final_norm=has_final_norm)

    return pl.pallas_call(
        kernel,
        out_shape=jax.ShapeDtypeStruct((B, S, D), out_dtype),
        grid_spec=pltpu.PrefetchScalarGridSpec(
            num_scalar_prefetch=0,
            grid=(B // block_batch,),
            in_specs=in_specs,
            out_specs=act_spec,
            scratch_shapes=[pltpu.VMEM((rows, D), jnp.float32)]),
        compiler_params=pltpu.CompilerParams(
            dimension_semantics=("parallel",),
            vmem_limit_bytes=vmem_limit),
    )(src, pos, *packed)


# ----------------------- deterministic parameter init -----------------------
def init_layer_params(key):
    ks = jax.random.split(key, 8)
    n = lambda k, shape: (jax.random.normal(k, shape, jnp.float32) * 0.02)
    wqkv = n(ks[0], (3 * D_MODEL, D_MODEL))
    bqkv = n(ks[1], (1, 3 * D_MODEL))
    wo = n(ks[2], (D_MODEL, D_MODEL))
    bo = n(ks[3], (1, D_MODEL))
    w1 = n(ks[4], (D_FF, D_MODEL))
    b1 = n(ks[5], (1, D_FF))
    w2 = n(ks[6], (D_MODEL, D_FF))
    b2 = n(ks[7], (1, D_MODEL))
    ln1w = jnp.ones((1, D_MODEL), jnp.float32)
    ln1b = jnp.zeros((1, D_MODEL), jnp.float32)
    ln2w = jnp.ones((1, D_MODEL), jnp.float32)
    ln2b = jnp.zeros((1, D_MODEL), jnp.float32)
    return (wqkv, bqkv, wo, bo, w1, b1, w2, b2, ln1w, ln1b, ln2w, ln2b)


# ----------------------------- pure-JAX reference ----------------------------
def ref_encoder(src, pos, layer_params, final_norm=None):
    def ln(x, w, b):
        m = x.mean(-1, keepdims=True)
        v = ((x - m) ** 2).mean(-1, keepdims=True)
        return (x - m) / jnp.sqrt(v + EPS) * w + b

    out = src
    B, S, _ = src.shape
    for (wqkv, bqkv, wo, bo, w1, b1, w2, b2, l1w, l1b, l2w, l2b) in layer_params:
        qk = out + pos
        q = qk @ wqkv[:D_MODEL].T + bqkv[0, :D_MODEL]
        k = qk @ wqkv[D_MODEL:2 * D_MODEL].T + bqkv[0, D_MODEL:2 * D_MODEL]
        v = out @ wqkv[2 * D_MODEL:].T + bqkv[0, 2 * D_MODEL:]
        qh = q.reshape(B, S, N_HEAD, HEAD_DIM).transpose(0, 2, 1, 3)
        kh = k.reshape(B, S, N_HEAD, HEAD_DIM).transpose(0, 2, 1, 3)
        vh = v.reshape(B, S, N_HEAD, HEAD_DIM).transpose(0, 2, 1, 3)
        s = jnp.einsum('bhqd,bhkd->bhqk', qh, kh) / math.sqrt(HEAD_DIM)
        a = jax.nn.softmax(s, -1)
        o = jnp.einsum('bhqk,bhkd->bhqd', a, vh).transpose(0, 2, 1, 3).reshape(B, S, D_MODEL)
        o = o @ wo.T + bo[0]
        y = ln(out + o, l1w[0], l1b[0])
        h1 = jnp.maximum(y @ w1.T + b1[0], 0.0)
        h2 = h1 @ w2.T + b2[0]
        out = ln(y + h2, l2w[0], l2b[0])
    if final_norm is not None:
        out = ln(out, final_norm[0][0], final_norm[1][0])
    return out


if __name__ == "__main__":
    key = jax.random.PRNGKey(0)
    k_src, k_pos, k_par = jax.random.split(key, 3)

    B, S = 4, 16                       # e.g. 4x4 conv feature map flattened
    NUM_LAYERS = 2
    src = jax.random.normal(k_src, (B, S, D_MODEL), jnp.float32)
    pos = jax.random.normal(k_pos, (B, S, D_MODEL), jnp.float32)

    layer_params = [init_layer_params(jax.random.fold_in(k_par, i))
                    for i in range(NUM_LAYERS)]
    final_norm = (jnp.ones((1, D_MODEL), jnp.float32),
                  jnp.zeros((1, D_MODEL), jnp.float32))

    ref = ref_encoder(src, pos, layer_params, final_norm)

    # Production path: bf16 MXU inputs, params packed once, auto block_batch
    # (keeps >= 2 grid steps for the v7x megacore 'parallel' batch axis).
    packed_bf16 = prepare_encoder_params(layer_params, final_norm,
                                         mxu_dtype=jnp.bfloat16)
    out_bf16 = jax.block_until_ready(transformer_encoder(src, pos, packed_bf16))
    err_bf16 = float(jnp.max(jnp.abs(out_bf16 - ref)))
    assert err_bf16 < 5e-2, f"bf16 mismatch vs reference: max abs err {err_bf16}"

    # f32 MXU path: debug / strict-parity mode.
    packed_f32 = prepare_encoder_params(layer_params, final_norm,
                                        mxu_dtype=jnp.float32)
    out_f32 = jax.block_until_ready(
        transformer_encoder(src, pos, packed_f32, block_batch=1))
    err_f32 = float(jnp.max(jnp.abs(out_f32 - ref)))
    assert err_f32 < 5e-3, f"f32 mismatch vs reference: max abs err {err_f32}"

    print("KERNEL_OK")
</pallas_src>

<mosaic_0001>
module attributes {stable_mosaic.version = 11 : i64} {
  func.func @kernel(%arg0: i32, %arg1: memref<2x16x128xf32, #tpu.memory_space<vmem>>, %arg2: memref<2x16x128xf32, #tpu.memory_space<vmem>>, %arg3: memref<2x256x128xbf16, #tpu.memory_space<vmem>>, %arg4: memref<2x1x256xf32, #tpu.memory_space<vmem>>, %arg5: memref<2x128x128xbf16, #tpu.memory_space<vmem>>, %arg6: memref<2x1x128xf32, #tpu.memory_space<vmem>>, %arg7: memref<2x128x128xbf16, #tpu.memory_space<vmem>>, %arg8: memref<2x1x128xf32, #tpu.memory_space<vmem>>, %arg9: memref<2x256x128xbf16, #tpu.memory_space<vmem>>, %arg10: memref<2x1x256xf32, #tpu.memory_space<vmem>>, %arg11: memref<2x128x256xbf16, #tpu.memory_space<vmem>>, %arg12: memref<2x1x128xf32, #tpu.memory_space<vmem>>, %arg13: memref<2x1x128xf32, #tpu.memory_space<vmem>>, %arg14: memref<2x1x128xf32, #tpu.memory_space<vmem>>, %arg15: memref<2x1x128xf32, #tpu.memory_space<vmem>>, %arg16: memref<2x1x128xf32, #tpu.memory_space<vmem>>, %arg17: memref<1x128xf32, #tpu.memory_space<vmem>>, %arg18: memref<1x128xf32, #tpu.memory_space<vmem>>, %arg19: memref<2x16x128xf32, #tpu.memory_space<vmem>>, %arg20: memref<32x128xf32, #tpu.memory_space<vmem>>) attributes {dimension_semantics = [#tpu.dimension_semantics<parallel>], iteration_bounds = array<i64: 2>, scalar_prefetch = 0 : i64, scratch_operands = 1 : i64, tpu.core_type = #tpu.core_type<tc>, window_params = [{transform_indices = @transform_0, window_bounds = array<i64: 2, 16, 128>}, {transform_indices = @transform_1, window_bounds = array<i64: 2, 16, 128>}, {pipeline_mode = #tpu.pipeline_mode<synchronous>, transform_indices = @transform_2, window_bounds = array<i64: 2, 256, 128>}, {pipeline_mode = #tpu.pipeline_mode<synchronous>, transform_indices = @transform_3, window_bounds = array<i64: 2, 1, 256>}, {pipeline_mode = #tpu.pipeline_mode<synchronous>, transform_indices = @transform_4, window_bounds = array<i64: 2, 128, 128>}, {pipeline_mode = #tpu.pipeline_mode<synchronous>, transform_indices = @transform_5, window_bounds = array<i64: 2, 1, 128>}, {pipeline_mode = #tpu.pipeline_mode<synchronous>, transform_indices = @transform_6, window_bounds = array<i64: 2, 128, 128>}, {pipeline_mode = #tpu.pipeline_mode<synchronous>, transform_indices = @transform_7, window_bounds = array<i64: 2, 1, 128>}, {pipeline_mode = #tpu.pipeline_mode<synchronous>, transform_indices = @transform_8, window_bounds = array<i64: 2, 256, 128>}, {pipeline_mode = #tpu.pipeline_mode<synchronous>, transform_indices = @transform_9, window_bounds = array<i64: 2, 1, 256>}, {pipeline_mode = #tpu.pipeline_mode<synchronous>, transform_indices = @transform_10, window_bounds = array<i64: 2, 128, 256>}, {pipeline_mode = #tpu.pipeline_mode<synchronous>, transform_indices = @transform_11, window_bounds = array<i64: 2, 1, 128>}, {pipeline_mode = #tpu.pipeline_mode<synchronous>, transform_indices = @transform_12, window_bounds = array<i64: 2, 1, 128>}, {pipeline_mode = #tpu.pipeline_mode<synchronous>, transform_indices = @transform_13, window_bounds = array<i64: 2, 1, 128>}, {pipeline_mode = #tpu.pipeline_mode<synchronous>, transform_indices = @transform_14, window_bounds = array<i64: 2, 1, 128>}, {pipeline_mode = #tpu.pipeline_mode<synchronous>, transform_indices = @transform_15, window_bounds = array<i64: 2, 1, 128>}, {pipeline_mode = #tpu.pipeline_mode<synchronous>, transform_indices = @transform_16, window_bounds = array<i64: 1, 128>}, {pipeline_mode = #tpu.pipeline_mode<synchronous>, transform_indices = @transform_17, window_bounds = array<i64: 1, 128>}, {transform_indices = @transform_18, window_bounds = array<i64: 2, 16, 128>}]} {
    %c0 = arith.constant 0 : index
    %c0_0 = arith.constant 0 : index
    %c0_1 = arith.constant 0 : index
    %0 = vector.load %arg1[%c0, %c0_0, %c0_1] : memref<2x16x128xf32, #tpu.memory_space<vmem>>, vector<2x16x128xf32>
    %1 = vector.shape_cast %0 : vector<2x16x128xf32> to vector<32x128xf32>
    %c0_2 = arith.constant 0 : index
    %c0_3 = arith.constant 0 : index
    %2 = vector.load %arg20[%c0_2, %c0_3] : memref<32x128xf32, #tpu.memory_space<vmem>>, vector<32x128xf32>
    tpu.vector_store %arg20[%c0_2, %c0_3], %1 {strides = array<i32>} : memref<32x128xf32, #tpu.memory_space<vmem>>, vector<32x128xf32>,
    %3 = tpu.iota {dimensions = array<i32: 2>} : vector<1x1x128xi32>
    %c0_i32 = arith.constant 0 : i32
    %4 = vector.broadcast %c0_i32 : i32 to vector<1x1x128xi32>
    %5 = arith.cmpi sge, %3, %4 : vector<1x1x128xi32>
    %c32_i32 = arith.constant 32 : i32
    %6 = vector.broadcast %c32_i32 : i32 to vector<1x1x128xi32>
    %7 = arith.cmpi slt, %3, %6 : vector<1x1x128xi32>
    %8 = arith.andi %5, %7 : vector<1x1x128xi1>
    %9 = arith.extui %8 : vector<1x1x128xi1> to vector<1x1x128xi32>
    %10 = arith.sitofp %9 : vector<1x1x128xi32> to vector<1x1x128xf32>
    %11 = arith.truncf %10 : vector<1x1x128xf32> to vector<1x1x128xbf16>
    %c32_i32_4 = arith.constant 32 : i32
    %12 = vector.broadcast %c32_i32_4 : i32 to vector<1x1x128xi32>
    %13 = arith.cmpi sge, %3, %12 : vector<1x1x128xi32>
    %c64_i32 = arith.constant 64 : i32
    %14 = vector.broadcast %c64_i32 : i32 to vector<1x1x128xi32>
    %15 = arith.cmpi slt, %3, %14 : vector<1x1x128xi32>
    %16 = arith.andi %13, %15 : vector<1x1x128xi1>
    %17 = arith.extui %16 : vector<1x1x128xi1> to vector<1x1x128xi32>
    %18 = arith.sitofp %17 : vector<1x1x128xi32> to vector<1x1x128xf32>
    %19 = arith.truncf %18 : vector<1x1x128xf32> to vector<1x1x128xbf16>
    %c64_i32_5 = arith.constant 64 : i32
    %20 = vector.broadcast %c64_i32_5 : i32 to vector<1x1x128xi32>
    %21 = arith.cmpi sge, %3, %20 : vector<1x1x128xi32>
    %c96_i32 = arith.constant 96 : i32
    %22 = vector.broadcast %c96_i32 : i32 to vector<1x1x128xi32>
    %23 = arith.cmpi slt, %3, %22 : vector<1x1x128xi32>
    %24 = arith.andi %21, %23 : vector<1x1x128xi1>
    %25 = arith.extui %24 : vector<1x1x128xi1> to vector<1x1x128xi32>
    %26 = arith.sitofp %25 : vector<1x1x128xi32> to vector<1x1x128xf32>
    %27 = arith.truncf %26 : vector<1x1x128xf32> to vector<1x1x128xbf16>
    %c96_i32_6 = arith.constant 96 : i32
    %28 = vector.broadcast %c96_i32_6 : i32 to vector<1x1x128xi32>
    %29 = arith.cmpi sge, %3, %28 : vector<1x1x128xi32>
    %c128_i32 = arith.constant 128 : i32
    %30 = vector.broadcast %c128_i32 : i32 to vector<1x1x128xi32>
    %31 = arith.cmpi slt, %3, %30 : vector<1x1x128xi32>
    %32 = arith.andi %29, %31 : vector<1x1x128xi1>
    %33 = arith.extui %32 : vector<1x1x128xi1> to vector<1x1x128xi32>
    %34 = arith.sitofp %33 : vector<1x1x128xi32> to vector<1x1x128xf32>
    %35 = arith.truncf %34 : vector<1x1x128xf32> to vector<1x1x128xbf16>
    %c0_7 = arith.constant 0 : index
    %c0_8 = arith.constant 0 : index
    %c0_9 = arith.constant 0 : index
    %36 = vector.load %arg2[%c0_7, %c0_8, %c0_9] : memref<2x16x128xf32, #tpu.memory_space<vmem>>, vector<2x16x128xf32>
    %37 = vector.shape_cast %36 : vector<2x16x128xf32> to vector<32x128xf32>
    %c0_i32_10 = arith.constant 0 : i32
    %c2_i32 = arith.constant 2 : i32
    %38 = arith.addi %c0_i32_10, %c2_i32 : i32
    %c1_i32 = arith.constant 1 : i32
    scf.for %arg21 = %c0_i32_10 to %38 step %c1_i32  : i32 {
      %c0_25 = arith.constant 0 : index
      %c0_26 = arith.constant 0 : index
      %64 = vector.load %arg20[%c0_25, %c0_26] : memref<32x128xf32, #tpu.memory_space<vmem>>, vector<32x128xf32>
      %65 = arith.addf %64, %37 : vector<32x128xf32>
      %66 = arith.index_cast %arg21 : i32 to index
      %c0_27 = arith.constant 0 : index
      %c0_28 = arith.constant 0 : index
      %67 = vector.load %arg3[%66, %c0_27, %c0_28] : memref<2x256x128xbf16, #tpu.memory_space<vmem>>, vector<1x256x128xbf16>
      %68 = vector.shape_cast %67 : vector<1x256x128xbf16> to vector<256x128xbf16>
      %69 = arith.truncf %65 : vector<32x128xf32> to vector<32x128xbf16>
      %cst_29 = arith.constant dense<0.000000e+00> : vector<32x256xf32>
      %70 = tpu.matmul %69, %68, %cst_29 {dimension_numbers = #tpu.dot_dimension_numbers<[1], [1], [0], [0], [0, 0, 1, 0], [], []>} : vector<32x128xbf16>, vector<256x128xbf16>, vector<32x256xf32> -> vector<32x256xf32>
      %71 = arith.index_cast %arg21 : i32 to index
      %c0_30 = arith.constant 0 : index
      %c0_31 = arith.constant 0 : index
      %72 = vector.load %arg4[%71, %c0_30, %c0_31] : memref<2x1x256xf32, #tpu.memory_space<vmem>>, vector<1x1x256xf32>
      %73 = vector.shape_cast %72 : vector<1x1x256xf32> to vector<1x256xf32>
      %74 = vector.broadcast %73 : vector<1x256xf32> to vector<32x256xf32>
      %75 = arith.addf %70, %74 : vector<32x256xf32>
      %76 = arith.index_cast %arg21 : i32 to index
      %c0_32 = arith.constant 0 : index
      %c0_33 = arith.constant 0 : index
      %77 = vector.load %arg5[%76, %c0_32, %c0_33] : memref<2x128x128xbf16, #tpu.memory_space<vmem>>, vector<1x128x128xbf16>
      %78 = vector.shape_cast %77 : vector<1x128x128xbf16> to vector<128x128xbf16>
      %79 = arith.truncf %64 : vector<32x128xf32> to vector<32x128xbf16>
      %cst_34 = arith.constant dense<0.000000e+00> : vector<32x128xf32>
      %80 = tpu.matmul %79, %78, %cst_34 {dimension_numbers = #tpu.dot_dimension_numbers<[1], [1], [0], [0], [0, 0, 1, 0], [], []>} : vector<32x128xbf16>, vector<128x128xbf16>, vector<32x128xf32> -> vector<32x128xf32>
      %81 = arith.index_cast %arg21 : i32 to index
      %c0_35 = arith.constant 0 : index
      %c0_36 = arith.constant 0 : index
      %82 = vector.load %arg6[%81, %c0_35, %c0_36] : memref<2x1x128xf32, #tpu.memory_space<vmem>>, vector<1x1x128xf32>
      %83 = vector.shape_cast %82 : vector<1x1x128xf32> to vector<1x128xf32>
      %84 = vector.broadcast %83 : vector<1x128xf32> to vector<32x128xf32>
      %85 = arith.addf %80, %84 : vector<32x128xf32>
      %86 = vector.extract_strided_slice %75 {offsets = [0, 0], sizes = [32, 128], strides = [1, 1]} : vector<32x256xf32> to vector<32x128xf32>
      %87 = vector.shape_cast %86 : vector<32x128xf32> to vector<2x16x128xf32>
      %88 = arith.truncf %87 : vector<2x16x128xf32> to vector<2x16x128xbf16>
      %89 = vector.extract_strided_slice %75 {offsets = [0, 128], sizes = [32, 128], strides = [1, 1]} : vector<32x256xf32> to vector<32x128xf32>
      %90 = vector.shape_cast %89 : vector<32x128xf32> to vector<2x16x128xf32>
      %91 = arith.truncf %90 : vector<2x16x128xf32> to vector<2x16x128xbf16>
      %92 = vector.shape_cast %85 : vector<32x128xf32> to vector<2x16x128xf32>
      %93 = arith.truncf %92 : vector<2x16x128xf32> to vector<2x16x128xbf16>
      %cst_37 = arith.constant 0.000000e+00 : f32
      %94 = vector.broadcast %cst_37 : f32 to vector<2x16x128xf32>
      %95 = vector.broadcast %11 : vector<1x1x128xbf16> to vector<2x16x128xbf16>
      %96 = arith.mulf %88, %95 : vector<2x16x128xbf16>
      "tpu.trace_start"() <{level = 10 : i32, message = "bqd,bkd->bqk"}> : () -> ()
      %cst_38 = arith.constant dense<0.000000e+00> : vector<2x16x16xf32>
      %97 = tpu.matmul %96, %91, %cst_38 {dimension_numbers = #tpu.dot_dimension_numbers<[2], [2], [1], [1], [0, 0, 0, 1, 1, 1], [0], [0]>} : vector<2x16x128xbf16>, vector<2x16x128xbf16>, vector<2x16x16xf32> -> vector<2x16x16xf32>
      "tpu.trace_stop"() : () -> ()
      %cst_39 = arith.constant dense<0xFF800000> : vector<2x16xf32>
      %98 = vector.multi_reduction <maximumf>, %97, %cst_39 [2] : vector<2x16x16xf32> to vector<2x16xf32>
      %99 = vector.shape_cast %98 : vector<2x16xf32> to vector<2x16x1xf32>
      %100 = vector.broadcast %99 : vector<2x16x1xf32> to vector<2x16x16xf32>
      %101 = arith.subf %97, %100 : vector<2x16x16xf32>
      %102 = math.exp %101 : vector<2x16x16xf32>
      %cst_40 = arith.constant dense<0.000000e+00> : vector<2x16xf32>
      %103 = vector.multi_reduction <add>, %102, %cst_40 [2] : vector<2x16x16xf32> to vector<2x16xf32>
      %104 = vector.shape_cast %103 : vector<2x16xf32> to vector<2x16x1xf32>
      %105 = tpu.reciprocal %104 {approx = true} : vector<2x16x1xf32> -> vector<2x16x1xf32>
      %106 = vector.broadcast %105 : vector<2x16x1xf32> to vector<2x16x16xf32>
      %107 = arith.mulf %102, %106 : vector<2x16x16xf32>
      %108 = arith.truncf %107 : vector<2x16x16xf32> to vector<2x16x16xbf16>
      %109 = vector.broadcast %11 : vector<1x1x128xbf16> to vector<2x16x128xbf16>
      %110 = arith.mulf %93, %109 : vector<2x16x128xbf16>
      "tpu.trace_start"() <{level = 10 : i32, message = "bqk,bkd->bqd"}> : () -> ()
      %cst_41 = arith.constant dense<0.000000e+00> : vector<2x16x128xf32>
      %111 = tpu.matmul %108, %110, %cst_41 {dimension_numbers = #tpu.dot_dimension_numbers<[2], [1], [1], [2], [0, 0, 0, 1, 1, 2], [0], [0]>} : vector<2x16x16xbf16>, vector<2x16x128xbf16>, vector<2x16x128xf32> -> vector<2x16x128xf32>
      "tpu.trace_stop"() : () -> ()
      %112 = arith.addf %94, %111 : vector<2x16x128xf32>
      %113 = vector.broadcast %19 : vector<1x1x128xbf16> to vector<2x16x128xbf16>
      %114 = arith.mulf %88, %113 : vector<2x16x128xbf16>
      "tpu.trace_start"() <{level = 10 : i32, message = "bqd,bkd->bqk"}> : () -> ()
      %cst_42 = arith.constant dense<0.000000e+00> : vector<2x16x16xf32>
      %115 = tpu.matmul %114, %91, %cst_42 {dimension_numbers = #tpu.dot_dimension_numbers<[2], [2], [1], [1], [0, 0, 0, 1, 1, 1], [0], [0]>} : vector<2x16x128xbf16>, vector<2x16x128xbf16>, vector<2x16x16xf32> -> vector<2x16x16xf32>
      "tpu.trace_stop"() : () -> ()
      %cst_43 = arith.constant dense<0xFF800000> : vector<2x16xf32>
      %116 = vector.multi_reduction <maximumf>, %115, %cst_43 [2] : vector<2x16x16xf32> to vector<2x16xf32>
      %117 = vector.shape_cast %116 : vector<2x16xf32> to vector<2x16x1xf32>
      %118 = vector.broadcast %117 : vector<2x16x1xf32> to vector<2x16x16xf32>
      %119 = arith.subf %115, %118 : vector<2x16x16xf32>
      %120 = math.exp %119 : vector<2x16x16xf32>
      %cst_44 = arith.constant dense<0.000000e+00> : vector<2x16xf32>
      %121 = vector.multi_reduction <add>, %120, %cst_44 [2] : vector<2x16x16xf32> to vector<2x16xf32>
      %122 = vector.shape_cast %121 : vector<2x16xf32> to vector<2x16x1xf32>
      %123 = tpu.reciprocal %122 {approx = true} : vector<2x16x1xf32> -> vector<2x16x1xf32>
      %124 = vector.broadcast %123 : vector<2x16x1xf32> to vector<2x16x16xf32>
      %125 = arith.mulf %120, %124 : vector<2x16x16xf32>
      %126 = arith.truncf %125 : vector<2x16x16xf32> to vector<2x16x16xbf16>
      %127 = vector.broadcast %19 : vector<1x1x128xbf16> to vector<2x16x128xbf16>
      %128 = arith.mulf %93, %127 : vector<2x16x128xbf16>
      "tpu.trace_start"() <{level = 10 : i32, message = "bqk,bkd->bqd"}> : () -> ()
      %cst_45 = arith.constant dense<0.000000e+00> : vector<2x16x128xf32>
      %129 = tpu.matmul %126, %128, %cst_45 {dimension_numbers = #tpu.dot_dimension_numbers<[2], [1], [1], [2], [0, 0, 0, 1, 1, 2], [0], [0]>} : vector<2x16x16xbf16>, vector<2x16x128xbf16>, vector<2x16x128xf32> -> vector<2x16x128xf32>
      "tpu.trace_stop"() : () -> ()
      %130 = arith.addf %112, %129 : vector<2x16x128xf32>
      %131 = vector.broadcast %27 : vector<1x1x128xbf16> to vector<2x16x128xbf16>
      %132 = arith.mulf %88, %131 : vector<2x16x128xbf16>
      "tpu.trace_start"() <{level = 10 : i32, message = "bqd,bkd->bqk"}> : () -> ()
      %cst_46 = arith.constant dense<0.000000e+00> : vector<2x16x16xf32>
      %133 = tpu.matmul %132, %91, %cst_46 {dimension_numbers = #tpu.dot_dimension_numbers<[2], [2], [1], [1], [0, 0, 0, 1, 1, 1], [0], [0]>} : vector<2x16x128xbf16>, vector<2x16x128xbf16>, vector<2x16x16xf32> -> vector<2x16x16xf32>
      "tpu.trace_stop"() : () -> ()
      %cst_47 = arith.constant dense<0xFF800000> : vector<2x16xf32>
      %134 = vector.multi_reduction <maximumf>, %133, %cst_47 [2] : vector<2x16x16xf32> to vector<2x16xf32>
      %135 = vector.shape_cast %134 : vector<2x16xf32> to vector<2x16x1xf32>
      %136 = vector.broadcast %135 : vector<2x16x1xf32> to vector<2x16x16xf32>
      %137 = arith.subf %133, %136 : vector<2x16x16xf32>
      %138 = math.exp %137 : vector<2x16x16xf32>
      %cst_48 = arith.constant dense<0.000000e+00> : vector<2x16xf32>
      %139 = vector.multi_reduction <add>, %138, %cst_48 [2] : vector<2x16x16xf32> to vector<2x16xf32>
      %140 = vector.shape_cast %139 : vector<2x16xf32> to vector<2x16x1xf32>
      %141 = tpu.reciprocal %140 {approx = true} : vector<2x16x1xf32> -> vector<2x16x1xf32>
      %142 = vector.broadcast %141 : vector<2x16x1xf32> to vector<2x16x16xf32>
      %143 = arith.mulf %138, %142 : vector<2x16x16xf32>
      %144 = arith.truncf %143 : vector<2x16x16xf32> to vector<2x16x16xbf16>
      %145 = vector.broadcast %27 : vector<1x1x128xbf16> to vector<2x16x128xbf16>
      %146 = arith.mulf %93, %145 : vector<2x16x128xbf16>
      "tpu.trace_start"() <{level = 10 : i32, message = "bqk,bkd->bqd"}> : () -> ()
      %cst_49 = arith.constant dense<0.000000e+00> : vector<2x16x128xf32>
      %147 = tpu.matmul %144, %146, %cst_49 {dimension_numbers = #tpu.dot_dimension_numbers<[2], [1], [1], [2], [0, 0, 0, 1, 1, 2], [0], [0]>} : vector<2x16x16xbf16>, vector<2x16x128xbf16>, vector<2x16x128xf32> -> vector<2x16x128xf32>
      "tpu.trace_stop"() : () -> ()
      %148 = arith.addf %130, %147 : vector<2x16x128xf32>
      %149 = vector.broadcast %35 : vector<1x1x128xbf16> to vector<2x16x128xbf16>
      %150 = arith.mulf %88, %149 : vector<2x16x128xbf16>
      "tpu.trace_start"() <{level = 10 : i32, message = "bqd,bkd->bqk"}> : () -> ()
      %cst_50 = arith.constant dense<0.000000e+00> : vector<2x16x16xf32>
      %151 = tpu.matmul %150, %91, %cst_50 {dimension_numbers = #tpu.dot_dimension_numbers<[2], [2], [1], [1], [0, 0, 0, 1, 1, 1], [0], [0]>} : vector<2x16x128xbf16>, vector<2x16x128xbf16>, vector<2x16x16xf32> -> vector<2x16x16xf32>
      "tpu.trace_stop"() : () -> ()
      %cst_51 = arith.constant dense<0xFF800000> : vector<2x16xf32>
      %152 = vector.multi_reduction <maximumf>, %151, %cst_51 [2] : vector<2x16x16xf32> to vector<2x16xf32>
      %153 = vector.shape_cast %152 : vector<2x16xf32> to vector<2x16x1xf32>
      %154 = vector.broadcast %153 : vector<2x16x1xf32> to vector<2x16x16xf32>
      %155 = arith.subf %151, %154 : vector<2x16x16xf32>
      %156 = math.exp %155 : vector<2x16x16xf32>
      %cst_52 = arith.constant dense<0.000000e+00> : vector<2x16xf32>
      %157 = vector.multi_reduction <add>, %156, %cst_52 [2] : vector<2x16x16xf32> to vector<2x16xf32>
      %158 = vector.shape_cast %157 : vector<2x16xf32> to vector<2x16x1xf32>
      %159 = tpu.reciprocal %158 {approx = true} : vector<2x16x1xf32> -> vector<2x16x1xf32>
      %160 = vector.broadcast %159 : vector<2x16x1xf32> to vector<2x16x16xf32>
      %161 = arith.mulf %156, %160 : vector<2x16x16xf32>
      %162 = arith.truncf %161 : vector<2x16x16xf32> to vector<2x16x16xbf16>
      %163 = vector.broadcast %35 : vector<1x1x128xbf16> to vector<2x16x128xbf16>
      %164 = arith.mulf %93, %163 : vector<2x16x128xbf16>
      "tpu.trace_start"() <{level = 10 : i32, message = "bqk,bkd->bqd"}> : () -> ()
      %cst_53 = arith.constant dense<0.000000e+00> : vector<2x16x128xf32>
      %165 = tpu.matmul %162, %164, %cst_53 {dimension_numbers = #tpu.dot_dimension_numbers<[2], [1], [1], [2], [0, 0, 0, 1, 1, 2], [0], [0]>} : vector<2x16x16xbf16>, vector<2x16x128xbf16>, vector<2x16x128xf32> -> vector<2x16x128xf32>
      "tpu.trace_stop"() : () -> ()
      %166 = arith.addf %148, %165 : vector<2x16x128xf32>
      %167 = vector.shape_cast %166 : vector<2x16x128xf32> to vector<32x128xf32>
      %168 = arith.index_cast %arg21 : i32 to index
      %c0_54 = arith.constant 0 : index
      %c0_55 = arith.constant 0 : index
      %169 = vector.load %arg7[%168, %c0_54, %c0_55] : memref<2x128x128xbf16, #tpu.memory_space<vmem>>, vector<1x128x128xbf16>
      %170 = vector.shape_cast %169 : vector<1x128x128xbf16> to vector<128x128xbf16>
      %171 = arith.truncf %167 : vector<32x128xf32> to vector<32x128xbf16>
      %cst_56 = arith.constant dense<0.000000e+00> : vector<32x128xf32>
      %172 = tpu.matmul %171, %170, %cst_56 {dimension_numbers = #tpu.dot_dimension_numbers<[1], [1], [0], [0], [0, 0, 1, 0], [], []>} : vector<32x128xbf16>, vector<128x128xbf16>, vector<32x128xf32> -> vector<32x128xf32>
      %173 = arith.index_cast %arg21 : i32 to index
      %c0_57 = arith.constant 0 : index
      %c0_58 = arith.constant 0 : index
      %174 = vector.load %arg8[%173, %c0_57, %c0_58] : memref<2x1x128xf32, #tpu.memory_space<vmem>>, vector<1x1x128xf32>
      %175 = vector.shape_cast %174 : vector<1x1x128xf32> to vector<1x128xf32>
      %176 = vector.broadcast %175 : vector<1x128xf32> to vector<32x128xf32>
      %177 = arith.addf %172, %176 : vector<32x128xf32>
      %178 = arith.addf %64, %177 : vector<32x128xf32>
      %179 = arith.index_cast %arg21 : i32 to index
      %c0_59 = arith.constant 0 : index
      %c0_60 = arith.constant 0 : index
      %180 = vector.load %arg13[%179, %c0_59, %c0_60] : memref<2x1x128xf32, #tpu.memory_space<vmem>>, vector<1x1x128xf32>
      %181 = vector.shape_cast %180 : vector<1x1x128xf32> to vector<1x128xf32>
      %182 = arith.index_cast %arg21 : i32 to index
      %c0_61 = arith.constant 0 : index
      %c0_62 = arith.constant 0 : index
      %183 = vector.load %arg14[%182, %c0_61, %c0_62] : memref<2x1x128xf32, #tpu.memory_space<vmem>>, vector<1x1x128xf32>
      %184 = vector.shape_cast %183 : vector<1x1x128xf32> to vector<1x128xf32>
      %cst_63 = arith.constant dense<0.000000e+00> : vector<32xf32>
      %185 = vector.multi_reduction <add>, %178, %cst_63 [1] : vector<32x128xf32> to vector<32xf32>
      %186 = vector.shape_cast %185 : vector<32xf32> to vector<32x1xf32>
      %cst_64 = arith.constant 1.280000e+02 : f32
      %187 = vector.broadcast %cst_64 : f32 to vector<32x1xf32>
      %188 = arith.divf %186, %187 : vector<32x1xf32>
      %189 = vector.broadcast %188 : vector<32x1xf32> to vector<32x128xf32>
      %190 = arith.subf %178, %189 : vector<32x128xf32>
      %191 = arith.mulf %190, %190 : vector<32x128xf32>
      %cst_65 = arith.constant dense<0.000000e+00> : vector<32xf32>
      %192 = vector.multi_reduction <add>, %191, %cst_65 [1] : vector<32x128xf32> to vector<32xf32>
      %193 = vector.shape_cast %192 : vector<32xf32> to vector<32x1xf32>
      %cst_66 = arith.constant 1.280000e+02 : f32
      %194 = vector.broadcast %cst_66 : f32 to vector<32x1xf32>
      %195 = arith.divf %193, %194 : vector<32x1xf32>
      %cst_67 = arith.constant 9.99999974E-6 : f32
      %196 = vector.broadcast %cst_67 : f32 to vector<32x1xf32>
      %197 = arith.addf %195, %196 : vector<32x1xf32>
      %198 = math.rsqrt %197 : vector<32x1xf32>
      %199 = vector.broadcast %198 : vector<32x1xf32> to vector<32x128xf32>
      %200 = arith.mulf %190, %199 : vector<32x128xf32>
      %201 = vector.broadcast %181 : vector<1x128xf32> to vector<32x128xf32>
      %202 = arith.mulf %200, %201 : vector<32x128xf32>
      %203 = vector.broadcast %184 : vector<1x128xf32> to vector<32x128xf32>
      %204 = arith.addf %202, %203 : vector<32x128xf32>
      %205 = arith.index_cast %arg21 : i32 to index
      %c0_68 = arith.constant 0 : index
      %c0_69 = arith.constant 0 : index
      %206 = vector.load %arg9[%205, %c0_68, %c0_69] : memref<2x256x128xbf16, #tpu.memory_space<vmem>>, vector<1x256x128xbf16>
      %207 = vector.shape_cast %206 : vector<1x256x128xbf16> to vector<256x128xbf16>
      %208 = arith.truncf %204 : vector<32x128xf32> to vector<32x128xbf16>
      %cst_70 = arith.constant dense<0.000000e+00> : vector<32x256xf32>
      %209 = tpu.matmul %208, %207, %cst_70 {dimension_numbers = #tpu.dot_dimension_numbers<[1], [1], [0], [0], [0, 0, 1, 0], [], []>} : vector<32x128xbf16>, vector<256x128xbf16>, vector<32x256xf32> -> vector<32x256xf32>
      %210 = arith.index_cast %arg21 : i32 to index
      %c0_71 = arith.constant 0 : index
      %c0_72 = arith.constant 0 : index
      %211 = vector.load %arg10[%210, %c0_71, %c0_72] : memref<2x1x256xf32, #tpu.memory_space<vmem>>, vector<1x1x256xf32>
      %212 = vector.shape_cast %211 : vector<1x1x256xf32> to vector<1x256xf32>
      %213 = vector.broadcast %212 : vector<1x256xf32> to vector<32x256xf32>
      %214 = arith.addf %209, %213 : vector<32x256xf32>
      %cst_73 = arith.constant 0.000000e+00 : f32
      %215 = vector.broadcast %cst_73 : f32 to vector<32x256xf32>
      %216 = arith.maximumf %214, %215 : vector<32x256xf32>
      %217 = arith.index_cast %arg21 : i32 to index
      %c0_74 = arith.constant 0 : index
      %c0_75 = arith.constant 0 : index
      %218 = vector.load %arg11[%217, %c0_74, %c0_75] : memref<2x128x256xbf16, #tpu.memory_space<vmem>>, vector<1x128x256xbf16>
      %219 = vector.shape_cast %218 : vector<1x128x256xbf16> to vector<128x256xbf16>
      %220 = arith.truncf %216 : vector<32x256xf32> to vector<32x256xbf16>
      %cst_76 = arith.constant dense<0.000000e+00> : vector<32x128xf32>
      %221 = tpu.matmul %220, %219, %cst_76 {dimension_numbers = #tpu.dot_dimension_numbers<[1], [1], [0], [0], [0, 0, 1, 0], [], []>} : vector<32x256xbf16>, vector<128x256xbf16>, vector<32x128xf32> -> vector<32x128xf32>
      %222 = arith.index_cast %arg21 : i32 to index
      %c0_77 = arith.constant 0 : index
      %c0_78 = arith.constant 0 : index
      %223 = vector.load %arg12[%222, %c0_77, %c0_78] : memref<2x1x128xf32, #tpu.memory_space<vmem>>, vector<1x1x128xf32>
      %224 = vector.shape_cast %223 : vector<1x1x128xf32> to vector<1x128xf32>
      %225 = vector.broadcast %224 : vector<1x128xf32> to vector<32x128xf32>
      %226 = arith.addf %221, %225 : vector<32x128xf32>
      %227 = arith.addf %204, %226 : vector<32x128xf32>
      %228 = arith.index_cast %arg21 : i32 to index
      %c0_79 = arith.constant 0 : index
      %c0_80 = arith.constant 0 : index
      %229 = vector.load %arg15[%228, %c0_79, %c0_80] : memref<2x1x128xf32, #tpu.memory_space<vmem>>, vector<1x1x128xf32>
      %230 = vector.shape_cast %229 : vector<1x1x128xf32> to vector<1x128xf32>
      %231 = arith.index_cast %arg21 : i32 to index
      %c0_81 = arith.constant 0 : index
      %c0_82 = arith.constant 0 : index
      %232 = vector.load %arg16[%231, %c0_81, %c0_82] : memref<2x1x128xf32, #tpu.memory_space<vmem>>, vector<1x1x128xf32>
      %233 = vector.shape_cast %232 : vector<1x1x128xf32> to vector<1x128xf32>
      %cst_83 = arith.constant dense<0.000000e+00> : vector<32xf32>
      %234 = vector.multi_reduction <add>, %227, %cst_83 [1] : vector<32x128xf32> to vector<32xf32>
      %235 = vector.shape_cast %234 : vector<32xf32> to vector<32x1xf32>
      %cst_84 = arith.constant 1.280000e+02 : f32
      %236 = vector.broadcast %cst_84 : f32 to vector<32x1xf32>
      %237 = arith.divf %235, %236 : vector<32x1xf32>
      %238 = vector.broadcast %237 : vector<32x1xf32> to vector<32x128xf32>
      %239 = arith.subf %227, %238 : vector<32x128xf32>
      %240 = arith.mulf %239, %239 : vector<32x128xf32>
      %cst_85 = arith.constant dense<0.000000e+00> : vector<32xf32>
      %241 = vector.multi_reduction <add>, %240, %cst_85 [1] : vector<32x128xf32> to vector<32xf32>
      %242 = vector.shape_cast %241 : vector<32xf32> to vector<32x1xf32>
      %cst_86 = arith.constant 1.280000e+02 : f32
      %243 = vector.broadcast %cst_86 : f32 to vector<32x1xf32>
      %244 = arith.divf %242, %243 : vector<32x1xf32>
      %cst_87 = arith.constant 9.99999974E-6 : f32
      %245 = vector.broadcast %cst_87 : f32 to vector<32x1xf32>
      %246 = arith.addf %244, %245 : vector<32x1xf32>
      %247 = math.rsqrt %246 : vector<32x1xf32>
      %248 = vector.broadcast %247 : vector<32x1xf32> to vector<32x128xf32>
      %249 = arith.mulf %239, %248 : vector<32x128xf32>
      %250 = vector.broadcast %230 : vector<1x128xf32> to vector<32x128xf32>
      %251 = arith.mulf %249, %250 : vector<32x128xf32>
      %252 = vector.broadcast %233 : vector<1x128xf32> to vector<32x128xf32>
      %253 = arith.addf %251, %252 : vector<32x128xf32>
      %c0_88 = arith.constant 0 : index
      %c0_89 = arith.constant 0 : index
      %254 = vector.load %arg20[%c0_88, %c0_89] : memref<32x128xf32, #tpu.memory_space<vmem>>, vector<32x128xf32>
      tpu.vector_store %arg20[%c0_88, %c0_89], %253 {strides = array<i32>} : memref<32x128xf32, #tpu.memory_space<vmem>>, vector<32x128xf32>,
    }
    %c2_i32_11 = arith.constant 2 : i32
    %c0_12 = arith.constant 0 : index
    %c0_13 = arith.constant 0 : index
    %39 = vector.load %arg20[%c0_12, %c0_13] : memref<32x128xf32, #tpu.memory_space<vmem>>, vector<32x128xf32>
    %c0_14 = arith.constant 0 : index
    %c0_15 = arith.constant 0 : index
    %40 = vector.load %arg17[%c0_14, %c0_15] : memref<1x128xf32, #tpu.memory_space<vmem>>, vector<1x128xf32>
    %c0_16 = arith.constant 0 : index
    %c0_17 = arith.constant 0 : index
    %41 = vector.load %arg18[%c0_16, %c0_17] : memref<1x128xf32, #tpu.memory_space<vmem>>, vector<1x128xf32>
    %cst = arith.constant dense<0.000000e+00> : vector<32xf32>
    %42 = vector.multi_reduction <add>, %39, %cst [1] : vector<32x128xf32> to vector<32xf32>
    %43 = vector.shape_cast %42 : vector<32xf32> to vector<32x1xf32>
    %cst_18 = arith.constant 1.280000e+02 : f32
    %44 = vector.broadcast %cst_18 : f32 to vector<32x1xf32>
    %45 = arith.divf %43, %44 : vector<32x1xf32>
    %46 = vector.broadcast %45 : vector<32x1xf32> to vector<32x128xf32>
    %47 = arith.subf %39, %46 : vector<32x128xf32>
    %48 = arith.mulf %47, %47 : vector<32x128xf32>
    %cst_19 = arith.constant dense<0.000000e+00> : vector<32xf32>
    %49 = vector.multi_reduction <add>, %48, %cst_19 [1] : vector<32x128xf32> to vector<32xf32>
    %50 = vector.shape_cast %49 : vector<32xf32> to vector<32x1xf32>
    %cst_20 = arith.constant 1.280000e+02 : f32
    %51 = vector.broadcast %cst_20 : f32 to vector<32x1xf32>
    %52 = arith.divf %50, %51 : vector<32x1xf32>
    %cst_21 = arith.constant 9.99999974E-6 : f32
    %53 = vector.broadcast %cst_21 : f32 to vector<32x1xf32>
    %54 = arith.addf %52, %53 : vector<32x1xf32>
    %55 = math.rsqrt %54 : vector<32x1xf32>
    %56 = vector.broadcast %55 : vector<32x1xf32> to vector<32x128xf32>
    %57 = arith.mulf %47, %56 : vector<32x128xf32>
    %58 = vector.broadcast %40 : vector<1x128xf32> to vector<32x128xf32>
    %59 = arith.mulf %57, %58 : vector<32x128xf32>
    %60 = vector.broadcast %41 : vector<1x128xf32> to vector<32x128xf32>
    %61 = arith.addf %59, %60 : vector<32x128xf32>
    %62 = vector.shape_cast %61 : vector<32x128xf32> to vector<2x16x128xf32>
    %c0_22 = arith.constant 0 : index
    %c0_23 = arith.constant 0 : index
    %c0_24 = arith.constant 0 : index
    %63 = vector.load %arg19[%c0_22, %c0_23, %c0_24] : memref<2x16x128xf32, #tpu.memory_space<vmem>>, vector<2x16x128xf32>
    tpu.vector_store %arg19[%c0_22, %c0_23, %c0_24], %62 {strides = array<i32>} : memref<2x16x128xf32, #tpu.memory_space<vmem>>, vector<2x16x128xf32>,
    return
  }
  func.func @transform_0(%arg0: i32) -> (i32, i32, i32) {
    %c0_i32 = arith.constant 0 : i32
    %c0_i32_0 = arith.constant 0 : i32
    %c0_i32_1 = arith.constant 0 : i32
    return %arg0, %c0_i32, %c0_i32_0 : i32, i32, i32
  }
  func.func @transform_1(%arg0: i32) -> (i32, i32, i32) {
    %c0_i32 = arith.constant 0 : i32
    %c0_i32_0 = arith.constant 0 : i32
    %c0_i32_1 = arith.constant 0 : i32
    return %arg0, %c0_i32, %c0_i32_0 : i32, i32, i32
  }
  func.func @transform_2(%arg0: i32) -> (i32, i32, i32) {
    %c0_i32 = arith.constant 0 : i32
    %c0_i32_0 = arith.constant 0 : i32
    %c0_i32_1 = arith.constant 0 : i32
    %c0_i32_2 = arith.constant 0 : i32
    return %c0_i32, %c0_i32_0, %c0_i32_1 : i32, i32, i32
  }
  func.func @transform_3(%arg0: i32) -> (i32, i32, i32) {
    %c0_i32 = arith.constant 0 : i32
    %c0_i32_0 = arith.constant 0 : i32
    %c0_i32_1 = arith.constant 0 : i32
    %c0_i32_2 = arith.constant 0 : i32
    return %c0_i32, %c0_i32_0, %c0_i32_1 : i32, i32, i32
  }
  func.func @transform_4(%arg0: i32) -> (i32, i32, i32) {
    %c0_i32 = arith.constant 0 : i32
    %c0_i32_0 = arith.constant 0 : i32
    %c0_i32_1 = arith.constant 0 : i32
    %c0_i32_2 = arith.constant 0 : i32
    return %c0_i32, %c0_i32_0, %c0_i32_1 : i32, i32, i32
  }
  func.func @transform_5(%arg0: i32) -> (i32, i32, i32) {
    %c0_i32 = arith.constant 0 : i32
    %c0_i32_0 = arith.constant 0 : i32
    %c0_i32_1 = arith.constant 0 : i32
    %c0_i32_2 = arith.constant 0 : i32
    return %c0_i32, %c0_i32_0, %c0_i32_1 : i32, i32, i32
  }
  func.func @transform_6(%arg0: i32) -> (i32, i32, i32) {
    %c0_i32 = arith.constant 0 : i32
    %c0_i32_0 = arith.constant 0 : i32
    %c0_i32_1 = arith.constant 0 : i32
    %c0_i32_2 = arith.constant 0 : i32
    return %c0_i32, %c0_i32_0, %c0_i32_1 : i32, i32, i32
  }
  func.func @transform_7(%arg0: i32) -> (i32, i32, i32) {
    %c0_i32 = arith.constant 0 : i32
    %c0_i32_0 = arith.constant 0 : i32
    %c0_i32_1 = arith.constant 0 : i32
    %c0_i32_2 = arith.constant 0 : i32
    return %c0_i32, %c0_i32_0, %c0_i32_1 : i32, i32, i32
  }
  func.func @transform_8(%arg0: i32) -> (i32, i32, i32) {
    %c0_i32 = arith.constant 0 : i32
    %c0_i32_0 = arith.constant 0 : i32
    %c0_i32_1 = arith.constant 0 : i32
    %c0_i32_2 = arith.constant 0 : i32
    return %c0_i32, %c0_i32_0, %c0_i32_1 : i32, i32, i32
  }
  func.func @transform_9(%arg0: i32) -> (i32, i32, i32) {
    %c0_i32 = arith.constant 0 : i32
    %c0_i32_0 = arith.constant 0 : i32
    %c0_i32_1 = arith.constant 0 : i32
    %c0_i32_2 = arith.constant 0 : i32
    return %c0_i32, %c0_i32_0, %c0_i32_1 : i32, i32, i32
  }
  func.func @transform_10(%arg0: i32) -> (i32, i32, i32) {
    %c0_i32 = arith.constant 0 : i32
    %c0_i32_0 = arith.constant 0 : i32
    %c0_i32_1 = arith.constant 0 : i32
    %c0_i32_2 = arith.constant 0 : i32
    return %c0_i32, %c0_i32_0, %c0_i32_1 : i32, i32, i32
  }
  func.func @transform_11(%arg0: i32) -> (i32, i32, i32) {
    %c0_i32 = arith.constant 0 : i32
    %c0_i32_0 = arith.constant 0 : i32
    %c0_i32_1 = arith.constant 0 : i32
    %c0_i32_2 = arith.constant 0 : i32
    return %c0_i32, %c0_i32_0, %c0_i32_1 : i32, i32, i32
  }
  func.func @transform_12(%arg0: i32) -> (i32, i32, i32) {
    %c0_i32 = arith.constant 0 : i32
    %c0_i32_0 = arith.constant 0 : i32
    %c0_i32_1 = arith.constant 0 : i32
    %c0_i32_2 = arith.constant 0 : i32
    return %c0_i32, %c0_i32_0, %c0_i32_1 : i32, i32, i32
  }
  func.func @transform_13(%arg0: i32) -> (i32, i32, i32) {
    %c0_i32 = arith.constant 0 : i32
    %c0_i32_0 = arith.constant 0 : i32
    %c0_i32_1 = arith.constant 0 : i32
    %c0_i32_2 = arith.constant 0 : i32
    return %c0_i32, %c0_i32_0, %c0_i32_1 : i32, i32, i32
  }
  func.func @transform_14(%arg0: i32) -> (i32, i32, i32) {
    %c0_i32 = arith.constant 0 : i32
    %c0_i32_0 = arith.constant 0 : i32
    %c0_i32_1 = arith.constant 0 : i32
    %c0_i32_2 = arith.constant 0 : i32
    return %c0_i32, %c0_i32_0, %c0_i32_1 : i32, i32, i32
  }
  func.func @transform_15(%arg0: i32) -> (i32, i32, i32) {
    %c0_i32 = arith.constant 0 : i32
    %c0_i32_0 = arith.constant 0 : i32
    %c0_i32_1 = arith.constant 0 : i32
    %c0_i32_2 = arith.constant 0 : i32
    return %c0_i32, %c0_i32_0, %c0_i32_1 : i32, i32, i32
  }
  func.func @transform_16(%arg0: i32) -> (i32, i32) {
    %c0_i32 = arith.constant 0 : i32
    %c0_i32_0 = arith.constant 0 : i32
    %c0_i32_1 = arith.constant 0 : i32
    return %c0_i32, %c0_i32_0 : i32, i32
  }
  func.func @transform_17(%arg0: i32) -> (i32, i32) {
    %c0_i32 = arith.constant 0 : i32
    %c0_i32_0 = arith.constant 0 : i32
    %c0_i32_1 = arith.constant 0 : i32
    return %c0_i32, %c0_i32_0 : i32, i32
  }
  func.func @transform_18(%arg0: i32) -> (i32, i32, i32) {
    %c0_i32 = arith.constant 0 : i32
    %c0_i32_0 = arith.constant 0 : i32
    %c0_i32_1 = arith.constant 0 : i32
    return %arg0, %c0_i32, %c0_i32_0 : i32, i32, i32
  }
}

</mosaic_0001>

<llo_original>
// kernel: tpu_custom_call.1
$region0: #{tpu_custom_call.1}
  #allocation0 [shape = 'u32[]', space=smem, size = 0x4, offset = 0x4, fixed_abs, tag = 'smem constant byte address 0x4 - core index']
  #allocation1 [shape = 'u32[144,128]{1,0:T(1,128)}', space=vmem, size = 0x12000, scoped, tag = 'internal scratch']
  #allocation2 [shape = 'f32[32,128]{1,0:T(8,128)}', space=vmem, size = 0x4000, scoped, tag = 'scratch operand']
  %s0 = inlined_call_operand.hbm [shape: f32[4,16,128], index: 0, kind: input, shape index: {}]
  %s1 = inlined_call_operand.hbm [shape: f32[4,16,128], index: 1, kind: input, shape index: {}]
  %s2 = inlined_call_operand.hbm [shape: bf16[2,256,128], index: 2, kind: input, shape index: {}]
  %s3 = inlined_call_operand.vmem [shape: f32[2,1,256], index: 3, kind: input, shape index: {}]
  %s4 = inlined_call_operand.hbm [shape: bf16[2,128,128], index: 4, kind: input, shape index: {}]
  %s5 = inlined_call_operand.vmem [shape: f32[2,1,128], index: 5, kind: input, shape index: {}]
  %s6 = inlined_call_operand.hbm [shape: bf16[2,128,128], index: 6, kind: input, shape index: {}]
  %s7 = inlined_call_operand.vmem [shape: f32[2,1,128], index: 7, kind: input, shape index: {}]
  %s8 = inlined_call_operand.hbm [shape: bf16[2,256,128], index: 8, kind: input, shape index: {}]
  %s9 = inlined_call_operand.vmem [shape: f32[2,1,256], index: 9, kind: input, shape index: {}]
  %s10 = inlined_call_operand.hbm [shape: bf16[2,128,256], index: 10, kind: input, shape index: {}]
  %s11 = inlined_call_operand.vmem [shape: f32[2,1,128], index: 11, kind: input, shape index: {}]
  %s12 = inlined_call_operand.vmem [shape: f32[2,1,128], index: 12, kind: input, shape index: {}]
  %s13 = inlined_call_operand.vmem [shape: f32[2,1,128], index: 13, kind: input, shape index: {}]
  %s14 = inlined_call_operand.vmem [shape: f32[2,1,128], index: 14, kind: input, shape index: {}]
  %s15 = inlined_call_operand.vmem [shape: f32[2,1,128], index: 15, kind: input, shape index: {}]
  %s16 = inlined_call_operand.vmem [shape: f32[1,128], index: 16, kind: input, shape index: {}]
  %s17 = inlined_call_operand.vmem [shape: f32[1,128], index: 17, kind: input, shape index: {}]
  %s18 = inlined_call_operand.hbm [shape: f32[4,16,128], index: 18, kind: output, shape index: {}]
  %s19 = sld [smem:[#allocation0]]
  $region140: #{tpu_custom_call.1} parent=0
    _
  %s21 = ssub.s32 1, %s19
  %s22 = scalar_select 0, %s21, %s19
  $region1: #{tpu_custom_call.1} parent=0
    #allocation3 [shape = 'u8[32768]{0}', space=vmem, size = 0x8000, scoped, tag = 'input window, operand 0']
    #allocation4 [shape = 's32[2]{0}', space=sflag, size = 0x8, scoped, tag = 'scoped memory for tpu_custom_call.1']
    #allocation5 [shape = 's32[2]{0}', space=sflag, size = 0x8, scoped, tag = 'scoped memory for tpu_custom_call.1']
    #allocation6 [shape = 'u8[32768]{0}', space=vmem, size = 0x8000, scoped, tag = 'input window, operand 1']
    #allocation7 [shape = 's32[2]{0}', space=sflag, size = 0x8, scoped, tag = 'scoped memory for tpu_custom_call.1']
    #allocation8 [shape = 'u8[131072]{0}', space=vmem, size = 0x20000, scoped, tag = 'input window, operand 2, single buffered']
    #allocation9 [shape = 'u8[65536]{0}', space=vmem, size = 0x10000, scoped, tag = 'input window, operand 4, single buffered']
    #allocation10 [shape = 's32[1]{0}', space=sflag, size = 0x4, scoped, tag = 'scoped memory for tpu_custom_call.1']
    #allocation11 [shape = 'u8[65536]{0}', space=vmem, size = 0x10000, scoped, tag = 'input window, operand 6, single buffered']
    #allocation12 [shape = 'u8[131072]{0}', space=vmem, size = 0x20000, scoped, tag = 'input window, operand 8, single buffered']
    #allocation13 [shape = 's32[1]{0}', space=sflag, size = 0x4, scoped, tag = 'scoped memory for tpu_custom_call.1']
    #allocation14 [shape = 'u8[131072]{0}', space=vmem, size = 0x20000, scoped, tag = 'input window, operand 10, single buffered']
    #allocation15 [shape = 'u8[32768]{0}', space=vmem, size = 0x8000, scoped, tag = 'output window, operand 0']
    %23 = vsyncpa [#allocation4], 0
    %s24 = scalar_lea.sflag [#allocation4], 1
    %25 = vsyncpa %s24, 0
    %26 = vsyncpa [#allocation7], 0
    %s27 = scalar_lea.sflag [#allocation7], 1
    %28 = vsyncpa %s27, 0
    %29 = vsyncpa [#allocation10], 0
    %30 = vsyncpa [#allocation13], 0
    %31 = vsyncpa [#allocation5], 0
    %s32 = scalar_lea.sflag [#allocation5], 1
    %33 = vsyncpa %s32, 0
    loop: start=0, step=1, limit=4
    $region2: #{tpu_custom_call.1} parent=1 // loop_pre_header
      _
    $region3: #{tpu_custom_call.1} parent=1 // loop_header
      %s35 = sphi 0, %s39
      %p36 = scmp.ge.s32.totalorder %s35, 4
      %s45 = sphi 0, %s47
      %s48 = sphi 0, %s45
      %s49 = sphi 0, %s48
      %s65 = sphi 0, %s49
      %s71 = sphi 0, %s73
      %s74 = sphi 0, %s71
      %s75 = sphi 0, %s74
      %s91 = sphi 0, %s75
      %s95 = sphi 0, %s95
      %s97 = sphi 0, %s95
      %s98 = sphi 0, %s97
      %s112 = sphi 0, %s98
      %s116 = sphi 0, %s116
      %s118 = sphi 0, %s116
      %s119 = sphi 0, %s118
      %s133 = sphi 0, %s119
      %s137 = sphi 0, %s137
      %s139 = sphi 0, %s137
      %s140 = sphi 0, %s139
      %s154 = sphi 0, %s140
      %s158 = sphi 0, %s158
      %s160 = sphi 0, %s158
      %s161 = sphi 0, %s160
      %s175 = sphi 0, %s161
      %s179 = sphi 0, %s179
      %s181 = sphi 0, %s179
      %s182 = sphi 0, %s181
      %s196 = sphi 0, %s182
      %s200 = sphi 0, %s200
      %s202 = sphi 0, %s200
      %s203 = sphi 0, %s202
      %s217 = sphi 0, %s203
      %s221 = sphi 0, %s221
      %s223 = sphi 0, %s221
      %s224 = sphi 0, %s223
      %s238 = sphi 0, %s224
      %s242 = sphi 0, %s242
      %s244 = sphi 0, %s242
      %s245 = sphi 0, %s244
      %s259 = sphi 0, %s245
      %s263 = sphi 0, %s263
      %s265 = sphi 0, %s263
      %s266 = sphi 0, %s265
      %s280 = sphi 0, %s266
      %s284 = sphi 0, %s284
      %s286 = sphi 0, %s284
      %s287 = sphi 0, %s286
      %s301 = sphi 0, %s287
      %s305 = sphi 0, %s305
      %s307 = sphi 0, %s305
      %s308 = sphi 0, %s307
      %s322 = sphi 0, %s308
      %s326 = sphi 0, %s326
      %s328 = sphi 0, %s326
      %s329 = sphi 0, %s328
      %s343 = sphi 0, %s329
      %s347 = sphi 0, %s347
      %s349 = sphi 0, %s347
      %s350 = sphi 0, %s349
      %s364 = sphi 0, %s350
      %s368 = sphi 0, %s368
      %s370 = sphi 0, %s368
      %s371 = sphi 0, %s370
      %s385 = sphi 0, %s371
      %s389 = sphi 0, %s389
      %s391 = sphi 0, %s389
      %s392 = sphi 0, %s391
      %s406 = sphi 0, %s392
      %s410 = sphi 0, %s410
      %s412 = sphi 0, %s410
      %s413 = sphi 0, %s412
      %s427 = sphi 0, %s413
      %s433 = sphi 0, %s435
      %s436 = sphi 0, %s433
      %s437 = sphi 0, %s436
      %s453 = sphi 0, %s437
    $region4: #{tpu_custom_call.1} parent=1 // loop_header_branch
      %38 = sbr.rel (%p36) target = $region8
    $region5: #{tpu_custom_call.1} parent=1 // loop_body
      %s40 = ssub.s32 %s35, 1
      %s41 = ssub.s32 %s35, 2
      %s42 = sadd.s32 %s35, 1
      %s43 = ssub.s32 %s35, %s42
      %p44 = scmp.eq.s32.totalorder %s43, 0
      %s46 = sadd.s32 %s45, 1
      %s47 = scalar_select %p44, %s45, %s46
      %p50 = pneg %p44
      %p51 = scmp.eq.s32.totalorder %s35, 1
      %p52 = por %p50, %p51
      %p53 = scmp.ne.s32.totalorder %s45, %s48
      %p54 = scmp.eq.s32.totalorder %s35, 0
      %p55 = por %p53, %p54
      %p56 = scmp.ne.s32.totalorder %s45, %s48
      %p57 = scmp.eq.s32.totalorder %s40, 1
      %p58 = por %p56, %p57
      %p59 = scmp.ne.s32.totalorder %s48, %s49
      %p60 = scmp.eq.s32.totalorder %s40, 0
      %p61 = por %p59, %p60
      %p62 = scmp.ne.s32.totalorder %s48, %s49
      %p63 = scmp.eq.s32.totalorder %s41, 1
      %p64 = por %p62, %p63
      %p66 = scmp.ne.s32.totalorder %s49, %s65
      %p67 = scmp.eq.s32.totalorder %s41, 0
      %p68 = por %p66, %p67
      %s69 = ssub.s32 %s35, %s42
      %p70 = scmp.eq.s32.totalorder %s69, 0
      %s72 = sadd.s32 %s71, 1
      %s73 = scalar_select %p70, %s71, %s72
      %p76 = pneg %p70
      %p77 = scmp.eq.s32.totalorder %s35, 1
      %p78 = por %p76, %p77
      %p79 = scmp.ne.s32.totalorder %s71, %s74
      %p80 = scmp.eq.s32.totalorder %s35, 0
      %p81 = por %p79, %p80
      %p82 = scmp.ne.s32.totalorder %s71, %s74
      %p83 = scmp.eq.s32.totalorder %s40, 1
      %p84 = por %p82, %p83
      %p85 = scmp.ne.s32.totalorder %s74, %s75
      %p86 = scmp.eq.s32.totalorder %s40, 0
      %p87 = por %p85, %p86
      %p88 = scmp.ne.s32.totalorder %s74, %s75
      %p89 = scmp.eq.s32.totalorder %s41, 1
      %p90 = por %p88, %p89
      %p92 = scmp.ne.s32.totalorder %s75, %s91
      %p93 = scmp.eq.s32.totalorder %s41, 0
      %p94 = por %p92, %p93
      %s96 = sadd.s32 %s95, 1
      %p99 = scmp.eq.s32.totalorder %s35, 1
      %p100 = scmp.ne.s32.totalorder %s95, %s97
      %p101 = scmp.eq.s32.totalorder %s35, 0
      %p102 = por %p100, %p101
      %p103 = scmp.ne.s32.totalorder %s95, %s97
      %p104 = scmp.eq.s32.totalorder %s40, 1
      %p105 = por %p103, %p104
      %p106 = scmp.ne.s32.totalorder %s97, %s98
      %p107 = scmp.eq.s32.totalorder %s40, 0
      %p108 = por %p106, %p107
      %p109 = scmp.ne.s32.totalorder %s97, %s98
      %p110 = scmp.eq.s32.totalorder %s41, 1
      %p111 = por %p109, %p110
      %p113 = scmp.ne.s32.totalorder %s98, %s112
      %p114 = scmp.eq.s32.totalorder %s41, 0
      %p115 = por %p113, %p114
      %s117 = sadd.s32 %s116, 1
      %p120 = scmp.eq.s32.totalorder %s35, 1
      %p121 = scmp.ne.s32.totalorder %s116, %s118
      %p122 = scmp.eq.s32.totalorder %s35, 0
      %p123 = por %p121, %p122
      %p124 = scmp.ne.s32.totalorder %s116, %s118
      %p125 = scmp.eq.s32.totalorder %s40, 1
      %p126 = por %p124, %p125
      %p127 = scmp.ne.s32.totalorder %s118, %s119
      %p128 = scmp.eq.s32.totalorder %s40, 0
      %p129 = por %p127, %p128
      %p130 = scmp.ne.s32.totalorder %s118, %s119
      %p131 = scmp.eq.s32.totalorder %s41, 1
      %p132 = por %p130, %p131
      %p134 = scmp.ne.s32.totalorder %s119, %s133
      %p135 = scmp.eq.s32.totalorder %s41, 0
      %p136 = por %p134, %p135
      %s138 = sadd.s32 %s137, 1
      %p141 = scmp.eq.s32.totalorder %s35, 1
      %p142 = scmp.ne.s32.totalorder %s137, %s139
      %p143 = scmp.eq.s32.totalorder %s35, 0
      %p144 = por %p142, %p143
      %p145 = scmp.ne.s32.totalorder %s137, %s139
      %p146 = scmp.eq.s32.totalorder %s40, 1
      %p147 = por %p145, %p146
      %p148 = scmp.ne.s32.totalorder %s139, %s140
      %p149 = scmp.eq.s32.totalorder %s40, 0
      %p150 = por %p148, %p149
      %p151 = scmp.ne.s32.totalorder %s139, %s140
      %p152 = scmp.eq.s32.totalorder %s41, 1
      %p153 = por %p151, %p152
      %p155 = scmp.ne.s32.totalorder %s140, %s154
      %p156 = scmp.eq.s32.totalorder %s41, 0
      %p157 = por %p155, %p156
      %s159 = sadd.s32 %s158, 1
      %p162 = scmp.eq.s32.totalorder %s35, 1
      %p163 = scmp.ne.s32.totalorder %s158, %s160
      %p164 = scmp.eq.s32.totalorder %s35, 0
      %p165 = por %p163, %p164
      %p166 = scmp.ne.s32.totalorder %s158, %s160
      %p167 = scmp.eq.s32.totalorder %s40, 1
      %p168 = por %p166, %p167
      %p169 = scmp.ne.s32.totalorder %s160, %s161
      %p170 = scmp.eq.s32.totalorder %s40, 0
      %p171 = por %p169, %p170
      %p172 = scmp.ne.s32.totalorder %s160, %s161
      %p173 = scmp.eq.s32.totalorder %s41, 1
      %p174 = por %p172, %p173
      %p176 = scmp.ne.s32.totalorder %s161, %s175
      %p177 = scmp.eq.s32.totalorder %s41, 0
      %p178 = por %p176, %p177
      %s180 = sadd.s32 %s179, 1
      %p183 = scmp.eq.s32.totalorder %s35, 1
      %p184 = scmp.ne.s32.totalorder %s179, %s181
      %p185 = scmp.eq.s32.totalorder %s35, 0
      %p186 = por %p184, %p185
      %p187 = scmp.ne.s32.totalorder %s179, %s181
      %p188 = scmp.eq.s32.totalorder %s40, 1
      %p189 = por %p187, %p188
      %p190 = scmp.ne.s32.totalorder %s181, %s182
      %p191 = scmp.eq.s32.totalorder %s40, 0
      %p192 = por %p190, %p191
      %p193 = scmp.ne.s32.totalorder %s181, %s182
      %p194 = scmp.eq.s32.totalorder %s41, 1
      %p195 = por %p193, %p194
      %p197 = scmp.ne.s32.totalorder %s182, %s196
      %p198 = scmp.eq.s32.totalorder %s41, 0
      %p199 = por %p197, %p198
      %s201 = sadd.s32 %s200, 1
      %p204 = scmp.eq.s32.totalorder %s35, 1
      %p205 = scmp.ne.s32.totalorder %s200, %s202
      %p206 = scmp.eq.s32.totalorder %s35, 0
      %p207 = por %p205, %p206
      %p208 = scmp.ne.s32.totalorder %s200, %s202
      %p209 = scmp.eq.s32.totalorder %s40, 1
      %p210 = por %p208, %p209
      %p211 = scmp.ne.s32.totalorder %s202, %s203
      %p212 = scmp.eq.s32.totalorder %s40, 0
      %p213 = por %p211, %p212
      %p214 = scmp.ne.s32.totalorder %s202, %s203
      %p215 = scmp.eq.s32.totalorder %s41, 1
      %p216 = por %p214, %p215
      %p218 = scmp.ne.s32.totalorder %s203, %s217
      %p219 = scmp.eq.s32.totalorder %s41, 0
      %p220 = por %p218, %p219
      %s222 = sadd.s32 %s221, 1
      %p225 = scmp.eq.s32.totalorder %s35, 1
      %p226 = scmp.ne.s32.totalorder %s221, %s223
      %p227 = scmp.eq.s32.totalorder %s35, 0
      %p228 = por %p226, %p227
      %p229 = scmp.ne.s32.totalorder %s221, %s223
      %p230 = scmp.eq.s32.totalorder %s40, 1
      %p231 = por %p229, %p230
      %p232 = scmp.ne.s32.totalorder %s223, %s224
      %p233 = scmp.eq.s32.totalorder %s40, 0
      %p234 = por %p232, %p233
      %p235 = scmp.ne.s32.totalorder %s223, %s224
      %p236 = scmp.eq.s32.totalorder %s41, 1
      %p237 = por %p235, %p236
      %p239 = scmp.ne.s32.totalorder %s224, %s238
      %p240 = scmp.eq.s32.totalorder %s41, 0
      %p241 = por %p239, %p240
      %s243 = sadd.s32 %s242, 1
      %p246 = scmp.eq.s32.totalorder %s35, 1
      %p247 = scmp.ne.s32.totalorder %s242, %s244
      %p248 = scmp.eq.s32.totalorder %s35, 0
      %p249 = por %p247, %p248
      %p250 = scmp.ne.s32.totalorder %s242, %s244
      %p251 = scmp.eq.s32.totalorder %s40, 1
      %p252 = por %p250, %p251
      %p253 = scmp.ne.s32.totalorder %s244, %s245
      %p254 = scmp.eq.s32.totalorder %s40, 0
      %p255 = por %p253, %p254
      %p256 = scmp.ne.s32.totalorder %s244, %s245
      %p257 = scmp.eq.s32.totalorder %s41, 1
      %p258 = por %p256, %p257
      %p260 = scmp.ne.s32.totalorder %s245, %s259
      %p261 = scmp.eq.s32.totalorder %s41, 0
      %p262 = por %p260, %p261
      %s264 = sadd.s32 %s263, 1
      %p267 = scmp.eq.s32.totalorder %s35, 1
      %p268 = scmp.ne.s32.totalorder %s263, %s265
      %p269 = scmp.eq.s32.totalorder %s35, 0
      %p270 = por %p268, %p269
      %p271 = scmp.ne.s32.totalorder %s263, %s265
      %p272 = scmp.eq.s32.totalorder %s40, 1
      %p273 = por %p271, %p272
      %p274 = scmp.ne.s32.totalorder %s265, %s266
      %p275 = scmp.eq.s32.totalorder %s40, 0
      %p276 = por %p274, %p275
      %p277 = scmp.ne.s32.totalorder %s265, %s266
      %p278 = scmp.eq.s32.totalorder %s41, 1
      %p279 = por %p277, %p278
      %p281 = scmp.ne.s32.totalorder %s266, %s280
      %p282 = scmp.eq.s32.totalorder %s41, 0
      %p283 = por %p281, %p282
      %s285 = sadd.s32 %s284, 1
      %p288 = scmp.eq.s32.totalorder %s35, 1
      %p289 = scmp.ne.s32.totalorder %s284, %s286
      %p290 = scmp.eq.s32.totalorder %s35, 0
      %p291 = por %p289, %p290
      %p292 = scmp.ne.s32.totalorder %s284, %s286
      %p293 = scmp.eq.s32.totalorder %s40, 1
      %p294 = por %p292, %p293
      %p295 = scmp.ne.s32.totalorder %s286, %s287
      %p296 = scmp.eq.s32.totalorder %s40, 0
      %p297 = por %p295, %p296
      %p298 = scmp.ne.s32.totalorder %s286, %s287
      %p299 = scmp.eq.s32.totalorder %s41, 1
      %p300 = por %p298, %p299
      %p302 = scmp.ne.s32.totalorder %s287, %s301
      %p303 = scmp.eq.s32.totalorder %s41, 0
      %p304 = por %p302, %p303
      %s306 = sadd.s32 %s305, 1
      %p309 = scmp.eq.s32.totalorder %s35, 1
      %p310 = scmp.ne.s32.totalorder %s305, %s307
      %p311 = scmp.eq.s32.totalorder %s35, 0
      %p312 = por %p310, %p311
      %p313 = scmp.ne.s32.totalorder %s305, %s307
      %p314 = scmp.eq.s32.totalorder %s40, 1
      %p315 = por %p313, %p314
      %p316 = scmp.ne.s32.totalorder %s307, %s308
      %p317 = scmp.eq.s32.totalorder %s40, 0
      %p318 = por %p316, %p317
      %p319 = scmp.ne.s32.totalorder %s307, %s308
      %p320 = scmp.eq.s32.totalorder %s41, 1
      %p321 = por %p319, %p320
      %p323 = scmp.ne.s32.totalorder %s308, %s322
      %p324 = scmp.eq.s32.totalorder %s41, 0
      %p325 = por %p323, %p324
      %s327 = sadd.s32 %s326, 1
      %p330 = scmp.eq.s32.totalorder %s35, 1
      %p331 = scmp.ne.s32.totalorder %s326, %s328
      %p332 = scmp.eq.s32.totalorder %s35, 0
      %p333 = por %p331, %p332
      %p334 = scmp.ne.s32.totalorder %s326, %s328
      %p335 = scmp.eq.s32.totalorder %s40, 1
      %p336 = por %p334, %p335
      %p337 = scmp.ne.s32.totalorder %s328, %s329
      %p338 = scmp.eq.s32.totalorder %s40, 0
      %p339 = por %p337, %p338
      %p340 = scmp.ne.s32.totalorder %s328, %s329
      %p341 = scmp.eq.s32.totalorder %s41, 1
      %p342 = por %p340, %p341
      %p344 = scmp.ne.s32.totalorder %s329, %s343
      %p345 = scmp.eq.s32.totalorder %s41, 0
      %p346 = por %p344, %p345
      %s348 = sadd.s32 %s347, 1
      %p351 = scmp.eq.s32.totalorder %s35, 1
      %p352 = scmp.ne.s32.totalorder %s347, %s349
      %p353 = scmp.eq.s32.totalorder %s35, 0
      %p354 = por %p352, %p353
      %p355 = scmp.ne.s32.totalorder %s347, %s349
      %p356 = scmp.eq.s32.totalorder %s40, 1
      %p357 = por %p355, %p356
      %p358 = scmp.ne.s32.totalorder %s349, %s350
      %p359 = scmp.eq.s32.totalorder %s40, 0
      %p360 = por %p358, %p359
      %p361 = scmp.ne.s32.totalorder %s349, %s350
      %p362 = scmp.eq.s32.totalorder %s41, 1
      %p363 = por %p361, %p362
      %p365 = scmp.ne.s32.totalorder %s350, %s364
      %p366 = scmp.eq.s32.totalorder %s41, 0
      %p367 = por %p365, %p366
      %s369 = sadd.s32 %s368, 1
      %p372 = scmp.eq.s32.totalorder %s35, 1
      %p373 = scmp.ne.s32.totalorder %s368, %s370
      %p374 = scmp.eq.s32.totalorder %s35, 0
      %p375 = por %p373, %p374
      %p376 = scmp.ne.s32.totalorder %s368, %s370
      %p377 = scmp.eq.s32.totalorder %s40, 1
      %p378 = por %p376, %p377
      %p379 = scmp.ne.s32.totalorder %s370, %s371
      %p380 = scmp.eq.s32.totalorder %s40, 0
      %p381 = por %p379, %p380
      %p382 = scmp.ne.s32.totalorder %s370, %s371
      %p383 = scmp.eq.s32.totalorder %s41, 1
      %p384 = por %p382, %p383
      %p386 = scmp.ne.s32.totalorder %s371, %s385
      %p387 = scmp.eq.s32.totalorder %s41, 0
      %p388 = por %p386, %p387
      %s390 = sadd.s32 %s389, 1
      %p393 = scmp.eq.s32.totalorder %s35, 1
      %p394 = scmp.ne.s32.totalorder %s389, %s391
      %p395 = scmp.eq.s32.totalorder %s35, 0
      %p396 = por %p394, %p395
      %p397 = scmp.ne.s32.totalorder %s389, %s391
      %p398 = scmp.eq.s32.totalorder %s40, 1
      %p399 = por %p397, %p398
      %p400 = scmp.ne.s32.totalorder %s391, %s392
      %p401 = scmp.eq.s32.totalorder %s40, 0
      %p402 = por %p400, %p401
      %p403 = scmp.ne.s32.totalorder %s391, %s392
      %p404 = scmp.eq.s32.totalorder %s41, 1
      %p405 = por %p403, %p404
      %p407 = scmp.ne.s32.totalorder %s392, %s406
      %p408 = scmp.eq.s32.totalorder %s41, 0
      %p409 = por %p407, %p408
      %s411 = sadd.s32 %s410, 1
      %p414 = scmp.eq.s32.totalorder %s35, 1
      %p415 = scmp.ne.s32.totalorder %s410, %s412
      %p416 = scmp.eq.s32.totalorder %s35, 0
      %p417 = por %p415, %p416
      %p418 = scmp.ne.s32.totalorder %s410, %s412
      %p419 = scmp.eq.s32.totalorder %s40, 1
      %p420 = por %p418, %p419
      %p421 = scmp.ne.s32.totalorder %s412, %s413
      %p422 = scmp.eq.s32.totalorder %s40, 0
      %p423 = por %p421, %p422
      %p424 = scmp.ne.s32.totalorder %s412, %s413
      %p425 = scmp.eq.s32.totalorder %s41, 1
      %p426 = por %p424, %p425
      %p428 = scmp.ne.s32.totalorder %s413, %s427
      %p429 = scmp.eq.s32.totalorder %s41, 0
      %p430 = por %p428, %p429
      %s431 = ssub.s32 %s35, %s42
      %p432 = scmp.eq.s32.totalorder %s431, 0
      %s434 = sadd.s32 %s433, 1
      %s435 = scalar_select %p432, %s433, %s434
      %p438 = pneg %p432
      %p439 = scmp.eq.s32.totalorder %s35, 1
      %p440 = por %p438, %p439
      %p441 = scmp.ne.s32.totalorder %s433, %s436
      %p442 = scmp.eq.s32.totalorder %s35, 0
      %p443 = por %p441, %p442
      %p444 = scmp.ne.s32.totalorder %s433, %s436
      %p445 = scmp.eq.s32.totalorder %s40, 1
      %p446 = por %p444, %p445
      %p447 = scmp.ne.s32.totalorder %s436, %s437
      %p448 = scmp.eq.s32.totalorder %s40, 0
      %p449 = por %p447, %p448
      %p450 = scmp.ne.s32.totalorder %s436, %s437
      %p451 = scmp.eq.s32.totalorder %s41, 1
      %p452 = por %p450, %p451
      %p454 = scmp.ne.s32.totalorder %s437, %s453
      %p455 = scmp.eq.s32.totalorder %s41, 0
      %p456 = por %p454, %p455
      %p457 = scmp.le.s32.totalorder 1, %s35
      %p458 = scmp.lt.s32.totalorder %s35, 3
      %p459 = pnand %p457, %p458
      %p460 = pneg %p459
      // Predicated region
      $region9: #{tpu_custom_call.1} parent=5 // pred_check
        _
      $region10: #{tpu_custom_call.1} parent=5 // pred_check_branch
        %462 = sbr.rel (%p459) target = $region12
      $region11: #{tpu_custom_call.1} parent=5 // pred_region
        %s463 = ssub.s32 %s35, 1
        // Predicated region
        $region13: #{tpu_custom_call.1} parent=11 // pred_check
          %p464 = pneg %p108
        $region14: #{tpu_custom_call.1} parent=11 // pred_check_branch
          %466 = sbr.rel (%p464) target = $region16
        $region15: #{tpu_custom_call.1} parent=11 // pred_region
          %s468 = ssub.s32 4096, 4096
          %469 = vsyncadd [#allocation7], %s468
          %s470 = sshll.u32 [#allocation8], 4
          %s471 = int_to_ptr.vmem [resolvable:$true] %s470
          %476 = dma.hbm_to_vmem [thread:$0]  %s2, 4096, %s471, [#allocation7], 64, 64, 4
        $region16: #{tpu_custom_call.1} parent=11 // pred_fallthru
          _
        // Predicated region
        $region17: #{tpu_custom_call.1} parent=11 // pred_check
          %p477 = pneg %p129
        $region18: #{tpu_custom_call.1} parent=11 // pred_check_branch
          %479 = sbr.rel (%p477) target = $region20
        $region19: #{tpu_custom_call.1} parent=11 // pred_region
          _
        $region20: #{tpu_custom_call.1} parent=11 // pred_fallthru
          _
        // Predicated region
        $region21: #{tpu_custom_call.1} parent=11 // pred_check
          %p480 = pneg %p150
        $region22: #{tpu_custom_call.1} parent=11 // pred_check_branch
          %482 = sbr.rel (%p480) target = $region24
        $region23: #{tpu_custom_call.1} parent=11 // pred_region
          %s484 = ssub.s32 2048, 2048
          %485 = vsyncadd [#allocation10], %s484
          %s486 = sshll.u32 [#allocation9], 4
          %s487 = int_to_ptr.vmem [resolvable:$true] %s486
          %492 = dma.hbm_to_vmem [thread:$0]  %s4, 2048, %s487, [#allocation10], 64, 64, 4
        $region24: #{tpu_custom_call.1} parent=11 // pred_fallthru
          _
        // Predicated region
        $region25: #{tpu_custom_call.1} parent=11 // pred_check
          %p493 = pneg %p171
        $region26: #{tpu_custom_call.1} parent=11 // pred_check_branch
          %495 = sbr.rel (%p493) target = $region28
        $region27: #{tpu_custom_call.1} parent=11 // pred_region
          _
        $region28: #{tpu_custom_call.1} parent=11 // pred_fallthru
          _
        // Predicated region
        $region29: #{tpu_custom_call.1} parent=11 // pred_check
          %p496 = pneg %p192
        $region30: #{tpu_custom_call.1} parent=11 // pred_check_branch
          %498 = sbr.rel (%p496) target = $region32
        $region31: #{tpu_custom_call.1} parent=11 // pred_region
          %s500 = ssub.s32 2048, 2048
          %501 = vsyncadd [#allocation10], %s500
          %s502 = sshll.u32 [#allocation11], 4
          %s503 = int_to_ptr.vmem [resolvable:$true] %s502
          %508 = dma.hbm_to_vmem [thread:$0]  %s6, 2048, %s503, [#allocation10], 64, 64, 4
        $region32: #{tpu_custom_call.1} parent=11 // pred_fallthru
          _
        // Predicated region
        $region33: #{tpu_custom_call.1} parent=11 // pred_check
          %p509 = pneg %p213
        $region34: #{tpu_custom_call.1} parent=11 // pred_check_branch
          %511 = sbr.rel (%p509) target = $region36
        $region35: #{tpu_custom_call.1} parent=11 // pred_region
          _
        $region36: #{tpu_custom_call.1} parent=11 // pred_fallthru
          _
        // Predicated region
        $region37: #{tpu_custom_call.1} parent=11 // pred_check
          %p512 = pneg %p234
        $region38: #{tpu_custom_call.1} parent=11 // pred_check_branch
          %514 = sbr.rel (%p512) target = $region40
        $region39: #{tpu_custom_call.1} parent=11 // pred_region
          %s516 = ssub.s32 4096, 4096
          %517 = vsyncadd [#allocation13], %s516
          %s518 = sshll.u32 [#allocation12], 4
          %s519 = int_to_ptr.vmem [resolvable:$true] %s518
          %524 = dma.hbm_to_vmem [thread:$0]  %s8, 4096, %s519, [#allocation13], 64, 64, 4
        $region40: #{tpu_custom_call.1} parent=11 // pred_fallthru
          _
        // Predicated region
        $region41: #{tpu_custom_call.1} parent=11 // pred_check
          %p525 = pneg %p255
        $region42: #{tpu_custom_call.1} parent=11 // pred_check_branch
          %527 = sbr.rel (%p525) target = $region44
        $region43: #{tpu_custom_call.1} parent=11 // pred_region
          _
        $region44: #{tpu_custom_call.1} parent=11 // pred_fallthru
          _
        // Predicated region
        $region45: #{tpu_custom_call.1} parent=11 // pred_check
          %p528 = pneg %p276
        $region46: #{tpu_custom_call.1} parent=11 // pred_check_branch
          %530 = sbr.rel (%p528) target = $region48
        $region47: #{tpu_custom_call.1} parent=11 // pred_region
          %s532 = ssub.s32 4096, 4096
          %533 = vsyncadd [#allocation13], %s532
          %s534 = sshll.u32 [#allocation14], 4
          %s535 = int_to_ptr.vmem [resolvable:$true] %s534
          %540 = dma.hbm_to_vmem [thread:$0]  %s10, 4096, %s535, [#allocation13], 128, 128, 8
        $region48: #{tpu_custom_call.1} parent=11 // pred_fallthru
          _
        // Predicated region
        $region49: #{tpu_custom_call.1} parent=11 // pred_check
          %p541 = pneg %p297
        $region50: #{tpu_custom_call.1} parent=11 // pred_check_branch
          %543 = sbr.rel (%p541) target = $region52
        $region51: #{tpu_custom_call.1} parent=11 // pred_region
          _
        $region52: #{tpu_custom_call.1} parent=11 // pred_fallthru
          _
        // Predicated region
        $region53: #{tpu_custom_call.1} parent=11 // pred_check
          %p544 = pneg %p318
        $region54: #{tpu_custom_call.1} parent=11 // pred_check_branch
          %546 = sbr.rel (%p544) target = $region56
        $region55: #{tpu_custom_call.1} parent=11 // pred_region
          _
        $region56: #{tpu_custom_call.1} parent=11 // pred_fallthru
          _
        // Predicated region
        $region57: #{tpu_custom_call.1} parent=11 // pred_check
          %p547 = pneg %p339
        $region58: #{tpu_custom_call.1} parent=11 // pred_check_branch
          %549 = sbr.rel (%p547) target = $region60
        $region59: #{tpu_custom_call.1} parent=11 // pred_region
          _
        $region60: #{tpu_custom_call.1} parent=11 // pred_fallthru
          _
        // Predicated region
        $region61: #{tpu_custom_call.1} parent=11 // pred_check
          %p550 = pneg %p360
        $region62: #{tpu_custom_call.1} parent=11 // pred_check_branch
          %552 = sbr.rel (%p550) target = $region64
        $region63: #{tpu_custom_call.1} parent=11 // pred_region
          _
        $region64: #{tpu_custom_call.1} parent=11 // pred_fallthru
          _
        // Predicated region
        $region65: #{tpu_custom_call.1} parent=11 // pred_check
          %p553 = pneg %p381
        $region66: #{tpu_custom_call.1} parent=11 // pred_check_branch
          %555 = sbr.rel (%p553) target = $region68
        $region67: #{tpu_custom_call.1} parent=11 // pred_region
          _
        $region68: #{tpu_custom_call.1} parent=11 // pred_fallthru
          _
        // Predicated region
        $region69: #{tpu_custom_call.1} parent=11 // pred_check
          %p556 = pneg %p402
        $region70: #{tpu_custom_call.1} parent=11 // pred_check_branch
          %558 = sbr.rel (%p556) target = $region72
        $region71: #{tpu_custom_call.1} parent=11 // pred_region
          _
        $region72: #{tpu_custom_call.1} parent=11 // pred_fallthru
          _
        // Predicated region
        $region73: #{tpu_custom_call.1} parent=11 // pred_check
          %p559 = pneg %p423
        $region74: #{tpu_custom_call.1} parent=11 // pred_check_branch
          %561 = sbr.rel (%p559) target = $region76
        $region75: #{tpu_custom_call.1} parent=11 // pred_region
          _
        $region76: #{tpu_custom_call.1} parent=11 // pred_fallthru
          _
      $region12: #{tpu_custom_call.1} parent=5 // pred_fallthru
        _
      %p562 = scmp.lt.s32.totalorder %s35, 2
      // Predicated region
      $region77: #{tpu_custom_call.1} parent=5 // pred_check
        %p563 = pneg %p562
      $region78: #{tpu_custom_call.1} parent=5 // pred_check_branch
        %565 = sbr.rel (%p563) target = $region80
      $region79: #{tpu_custom_call.1} parent=5 // pred_region
        // Predicated region
        $region81: #{tpu_custom_call.1} parent=79 // pred_check
          %p566 = pneg %p55
        $region82: #{tpu_custom_call.1} parent=79 // pred_check_branch
          %568 = sbr.rel (%p566) target = $region84
        $region83: #{tpu_custom_call.1} parent=79 // pred_region
          %s569 = sand.u32 %s45, 1
          %s570 = scalar_lea.sflag [#allocation4], %s569
          %s571 = sand.u32 %s45, 1
          %s572 = smul.addr %s571, 32
          %s573 = scalar_lea.vmem [#allocation3], %s572
          %s574 = smul.u32 2, %s35
          %s576 = ssub.s32 512, 512
          %577 = vsyncadd %s570, %s576
          %s578 = smul.addr %s574, 2
          %s579 = smul.addr %s578, 128
          %s580 = scalar_lea.hbm %s0, %s579
          %s581 = sshll.u32 %s573, 4
          %s582 = int_to_ptr.vmem [resolvable:$true] %s581
          %587 = dma.hbm_to_vmem [thread:$0]  %s580, 512, %s582, %s570, 128, 128, 8
        $region84: #{tpu_custom_call.1} parent=79 // pred_fallthru
          _
        // Predicated region
        $region85: #{tpu_custom_call.1} parent=79 // pred_check
          %p588 = pneg %p81
        $region86: #{tpu_custom_call.1} parent=79 // pred_check_branch
          %590 = sbr.rel (%p588) target = $region88
        $region87: #{tpu_custom_call.1} parent=79 // pred_region
          %s591 = sand.u32 %s35, 1
          %s592 = scalar_lea.sflag [#allocation7], %s591
          %s593 = sand.u32 %s71, 1
          %s594 = smul.addr %s593, 32
          %s595 = scalar_lea.vmem [#allocation6], %s594
          %s596 = smul.u32 2, %s35
          %s598 = ssub.s32 512, 512
          %599 = vsyncadd %s592, %s598
          %s600 = smul.addr %s596, 2
          %s601 = smul.addr %s600, 128
          %s602 = scalar_lea.hbm %s1, %s601
          %s603 = sshll.u32 %s595, 4
          %s604 = int_to_ptr.vmem [resolvable:$true] %s603
          %609 = dma.hbm_to_vmem [thread:$0]  %s602, 512, %s604, %s592, 128, 128, 8
        $region88: #{tpu_custom_call.1} parent=79 // pred_fallthru
          _
      $region80: #{tpu_custom_call.1} parent=5 // pred_fallthru
        _
      %p610 = scmp.le.s32.totalorder 1, %s35
      %p611 = scmp.lt.s32.totalorder %s35, 3
      %p612 = pnand %p610, %p611
      %p613 = pneg %p612
      // Predicated region
      $region89: #{tpu_custom_call.1} parent=5 // pred_check
        _
      $region90: #{tpu_custom_call.1} parent=5 // pred_check_branch
        %615 = sbr.rel (%p612) target = $region92
      $region91: #{tpu_custom_call.1} parent=5 // pred_region
        %s616 = ssub.s32 %s35, 1
        %s617 = sand.u32 %s48, 1
        %s618 = scalar_lea.sflag [#allocation4], %s617
        %s619 = sand.u32 %s48, 1
        %s620 = smul.addr %s619, 32
        %s621 = scalar_lea.vmem [#allocation3], %s620
        // Predicated region
        $region93: #{tpu_custom_call.1} parent=91 // pred_check
          %p622 = pneg %p61
        $region94: #{tpu_custom_call.1} parent=91 // pred_check_branch
          %624 = sbr.rel (%p622) target = $region96
        $region95: #{tpu_custom_call.1} parent=91 // pred_region
          %625 = dma.done %s618, 512
        $region96: #{tpu_custom_call.1} parent=91 // pred_fallthru
          _
        %s626 = sand.u32 %s40, 1
        %s627 = scalar_lea.sflag [#allocation7], %s626
        %s628 = sand.u32 %s74, 1
        %s629 = smul.addr %s628, 32
        %s630 = scalar_lea.vmem [#allocation6], %s629
        // Predicated region
        $region97: #{tpu_custom_call.1} parent=91 // pred_check
          %p631 = pneg %p87
        $region98: #{tpu_custom_call.1} parent=91 // pred_check_branch
          %633 = sbr.rel (%p631) target = $region100
        $region99: #{tpu_custom_call.1} parent=91 // pred_region
          %634 = dma.done %s627, 512
        $region100: #{tpu_custom_call.1} parent=91 // pred_fallthru
          _
        // Predicated region
        $region101: #{tpu_custom_call.1} parent=91 // pred_check
          %p635 = pneg %p108
        $region102: #{tpu_custom_call.1} parent=91 // pred_check_branch
          %637 = sbr.rel (%p635) target = $region104
        $region103: #{tpu_custom_call.1} parent=91 // pred_region
          %638 = dma.done [#allocation7], 4096
        $region104: #{tpu_custom_call.1} parent=91 // pred_fallthru
          _
        // Predicated region
        $region105: #{tpu_custom_call.1} parent=91 // pred_check
          %p639 = pneg %p150
        $region106: #{tpu_custom_call.1} parent=91 // pred_check_branch
          %641 = sbr.rel (%p639) target = $region108
        $region107: #{tpu_custom_call.1} parent=91 // pred_region
          %642 = dma.done [#allocation10], 2048
        $region108: #{tpu_custom_call.1} parent=91 // pred_fallthru
          _
        // Predicated region
        $region109: #{tpu_custom_call.1} parent=91 // pred_check
          %p643 = pneg %p192
        $region110: #{tpu_custom_call.1} parent=91 // pred_check_branch
          %645 = sbr.rel (%p643) target = $region112
        $region111: #{tpu_custom_call.1} parent=91 // pred_region
          %646 = dma.done [#allocation10], 2048
        $region112: #{tpu_custom_call.1} parent=91 // pred_fallthru
          _
        // Predicated region
        $region113: #{tpu_custom_call.1} parent=91 // pred_check
          %p647 = pneg %p234
        $region114: #{tpu_custom_call.1} parent=91 // pred_check_branch
          %649 = sbr.rel (%p647) target = $region116
        $region115: #{tpu_custom_call.1} parent=91 // pred_region
          %650 = dma.done [#allocation13], 4096
        $region116: #{tpu_custom_call.1} parent=91 // pred_fallthru
          _
        // Predicated region
        $region117: #{tpu_custom_call.1} parent=91 // pred_check
          %p651 = pneg %p276
        $region118: #{tpu_custom_call.1} parent=91 // pred_check_branch
          %653 = sbr.rel (%p651) target = $region120
        $region119: #{tpu_custom_call.1} parent=91 // pred_region
          %654 = dma.done [#allocation13], 4096
        $region120: #{tpu_custom_call.1} parent=91 // pred_fallthru
          _
        %s655 = sand.u32 %s48, 1
        %s656 = scalar_lea.sflag [#allocation4], %s655
        %s657 = sand.u32 %s48, 1
        %s658 = smul.addr %s657, 32
        %s659 = scalar_lea.vmem [#allocation3], %s658
        %p660 = pneg %p61
        %p661 = pneg %p58
        %s662 = sand.u32 %s40, 1
        %s663 = scalar_lea.sflag [#allocation7], %s662
        %s664 = sand.u32 %s74, 1
        %s665 = smul.addr %s664, 32
        %s666 = scalar_lea.vmem [#allocation6], %s665
        %p667 = pneg %p87
        %p668 = pneg %p84
        %p669 = pneg %p108
        %p670 = pneg %p105
        %p671 = pneg %p129
        %p672 = pneg %p126
        %p673 = pneg %p150
        %p674 = pneg %p147
        %p675 = pneg %p171
        %p676 = pneg %p168
        %p677 = pneg %p192
        %p678 = pneg %p189
        %p679 = pneg %p213
        %p680 = pneg %p210
        %p681 = pneg %p234
        %p682 = pneg %p231
        %p683 = pneg %p255
        %p684 = pneg %p252
        %p685 = pneg %p276
        %p686 = pneg %p273
        %p687 = pneg %p297
        %p688 = pneg %p294
        %p689 = pneg %p318
        %p690 = pneg %p315
        %p691 = pneg %p339
        %p692 = pneg %p336
        %p693 = pneg %p360
        %p694 = pneg %p357
        %p695 = pneg %p381
        %p696 = pneg %p378
        %p697 = pneg %p402
        %p698 = pneg %p399
        %p699 = pneg %p423
        %p700 = pneg %p420
        %p701 = pneg %p449
        %p702 = pneg %p446
        %s703 = sand.u32 %s436, 1
        %s704 = scalar_lea.sflag [#allocation5], %s703
        %s705 = sand.u32 %s436, 1
        %s706 = smul.addr %s705, 32
        %s707 = scalar_lea.vmem [#allocation15], %s706
        %s708 = smul.u32 2, %s40
        %s709 = smul.u32 2, %s40
        %s710 = smul.u32 2, %s40
        %v712 = vld [vmem:[%s621] sm:$0xff]
        %v713 = vld [vmem:[%s621 + $0x8] sm:$0xff]
        %v714 = vld [vmem:[%s621 + $0x10] sm:$0xff]
        %v715 = vld [vmem:[%s621 + $0x18] sm:$0xff]
        %716 = vst [vmem:[#allocation2] sm:$0xff] %v712
        %717 = vst [vmem:[#allocation2 + $0x8] sm:$0xff] %v713
        %718 = vst [vmem:[#allocation2 + $0x10] sm:$0xff] %v714
        %719 = vst [vmem:[#allocation2 + $0x18] sm:$0xff] %v715
        %v720 = vlaneseq
        %v721 = vand.u32 %v720, 127
        %vm722 = vcmp.ge.s32.totalorder %v721, 0
        %vm723 = vcmp.lt.s32.totalorder %v721, 32
        %vm724 = vmand %vm722, %vm723
        %v725 = vsel %vm724, 1, 0
        %v726 = vcvt.s32.f32 %v725
        %v727 = vpack.c.bf16 %v726, %v726
        %vm728 = vcmp.ge.s32.totalorder %v721, 32
        %vm729 = vcmp.lt.s32.totalorder %v721, 64
        %vm730 = vmand %vm728, %vm729
        %v731 = vsel %vm730, 1, 0
        %v732 = vcvt.s32.f32 %v731
        %v733 = vpack.c.bf16 %v732, %v732
        %vm734 = vcmp.ge.s32.totalorder %v721, 64
        %vm735 = vcmp.lt.s32.totalorder %v721, 96
        %vm736 = vmand %vm734, %vm735
        %v737 = vsel %vm736, 1, 0
        %v738 = vcvt.s32.f32 %v737
        %v739 = vpack.c.bf16 %v738, %v738
        %vm740 = vcmp.ge.s32.totalorder %v721, 96
        %vm741 = vcmp.lt.s32.totalorder %v721, 128
        %vm742 = vmand %vm740, %vm741
        %v743 = vsel %vm742, 1, 0
        %v744 = vcvt.s32.f32 %v743
        %v745 = vpack.c.bf16 %v744, %v744
        %v746 = vld [vmem:[%s630] sm:$0xff]
        %v747 = vld [vmem:[%s630 + $0x8] sm:$0xff]
        %v748 = vld [vmem:[%s630 + $0x10] sm:$0xff]
        %v749 = vld [vmem:[%s630 + $0x18] sm:$0xff]
        loop: start=0, step=1, limit=2
        $region121: #{tpu_custom_call.1} parent=91 // loop_pre_header
          _
        $region122: #{tpu_custom_call.1} parent=91 // loop_header
          %s751 = sphi 0, %s755
          %p752 = scmp.ge.s32.totalorder %s751, 2
        $region123: #{tpu_custom_call.1} parent=91 // loop_header_branch
          %754 = sbr.rel (%p752) target = $region127
        $region124: #{tpu_custom_call.1} parent=91 // loop_body
          %v756 = vld [vmem:[#allocation2] sm:$0xff]
          %v757 = vld [vmem:[#allocation2 + $0x8] sm:$0xff]
          %v758 = vld [vmem:[#allocation2 + $0x10] sm:$0xff]
          %v759 = vld [vmem:[#allocation2 + $0x18] sm:$0xff]
          %v760 = vadd.f32 %v756, %v746
          %v761 = vadd.f32 %v757, %v747
          %v762 = vadd.f32 %v758, %v748
          %v763 = vadd.f32 %v759, %v749
          %s764 = smul.u32 %s751, 32
          %s765 = smul.addr %s764, 4
          %s766 = scalar_lea.vmem [#allocation8], %s765
          %v767 = vld [vmem:[%s766] sm:$0xf]
          %v768 = vld [vmem:[%s766 + $0x4] sm:$0xf]
          %v769 = vld [vmem:[%s766 + $0x8] sm:$0xf]
          %v770 = vld [vmem:[%s766 + $0xc] sm:$0xf]
          %v771 = vld [vmem:[%s766 + $0x10] sm:$0xf]
          %v772 = vld [vmem:[%s766 + $0x14] sm:$0xf]
          %v773 = vld [vmem:[%s766 + $0x18] sm:$0xf]
          %v774 = vld [vmem:[%s766 + $0x1c] sm:$0xf]
          %v775 = vld [vmem:[%s766 + $0x20] sm:$0xf]
          %v776 = vld [vmem:[%s766 + $0x24] sm:$0xf]
          %v777 = vld [vmem:[%s766 + $0x28] sm:$0xf]
          %v778 = vld [vmem:[%s766 + $0x2c] sm:$0xf]
          %v779 = vld [vmem:[%s766 + $0x30] sm:$0xf]
          %v780 = vld [vmem:[%s766 + $0x34] sm:$0xf]
          %v781 = vld [vmem:[%s766 + $0x38] sm:$0xf]
          %v782 = vld [vmem:[%s766 + $0x3c] sm:$0xf]
          %v783 = vld [vmem:[%s766 + $0x40] sm:$0xf]
          %v784 = vld [vmem:[%s766 + $0x44] sm:$0xf]
          %v785 = vld [vmem:[%s766 + $0x48] sm:$0xf]
          %v786 = vld [vmem:[%s766 + $0x4c] sm:$0xf]
          %v787 = vld [vmem:[%s766 + $0x50] sm:$0xf]
          %v788 = vld [vmem:[%s766 + $0x54] sm:$0xf]
          %v789 = vld [vmem:[%s766 + $0x58] sm:$0xf]
          %v790 = vld [vmem:[%s766 + $0x5c] sm:$0xf]
          %v791 = vld [vmem:[%s766 + $0x60] sm:$0xf]
          %v792 = vld [vmem:[%s766 + $0x64] sm:$0xf]
          %v793 = vld [vmem:[%s766 + $0x68] sm:$0xf]
          %v794 = vld [vmem:[%s766 + $0x6c] sm:$0xf]
          %v795 = vld [vmem:[%s766 + $0x70] sm:$0xf]
          %v796 = vld [vmem:[%s766 + $0x74] sm:$0xf]
          %v797 = vld [vmem:[%s766 + $0x78] sm:$0xf]
          %v798 = vld [vmem:[%s766 + $0x7c] sm:$0xf]
          %v799 = vpack.c.bf16 %v761, %v760
          %v800 = vpack.c.bf16 %v763, %v762
          %s801 = smul.u32 %s751, 2
          %s802 = scalar_lea.vmem %s3, %s801
          %v803 = vld [vmem:[%s802] sm:$0x3]
          %v805 = vlaneseq
          %v806 = vshrl.u32 %v805, 7
          %v807 = vsub.s32 0, %v806
          %v808 = vrot.slane %v803, %v807
          %v809 = vlaneseq
          %v810 = vshrl.u32 %v809, 7
          %v811 = vsub.s32 1, %v810
          %v812 = vrot.slane %v803, %v811
          %v847 = vunpack.c.l.b16 %v767
          %v848 = vunpack.c.l.b16 %v768
          %v849 = vunpack.c.l.b16 %v769
          %v850 = vunpack.c.l.b16 %v770
          %v851 = vunpack.c.l.b16 %v771
          %v852 = vunpack.c.l.b16 %v772
          %v853 = vunpack.c.l.b16 %v773
          %v854 = vunpack.c.l.b16 %v774
          %v855 = vunpack.c.l.b16 %v775
          %v856 = vunpack.c.l.b16 %v776
          %v857 = vunpack.c.l.b16 %v777
          %v858 = vunpack.c.l.b16 %v778
          %v859 = vunpack.c.l.b16 %v779
          %v860 = vunpack.c.l.b16 %v780
          %v861 = vunpack.c.l.b16 %v781
          %v862 = vunpack.c.l.b16 %v782
          %v863 = vunpack.c.l.b16 %v783
          %v864 = vunpack.c.l.b16 %v784
          %v865 = vunpack.c.l.b16 %v785
          %v866 = vunpack.c.l.b16 %v786
          %v867 = vunpack.c.l.b16 %v787
          %v868 = vunpack.c.l.b16 %v788
          %v869 = vunpack.c.l.b16 %v789
          %v870 = vunpack.c.l.b16 %v790
          %v871 = vunpack.c.l.b16 %v791
          %v872 = vunpack.c.l.b16 %v792
          %v873 = vunpack.c.l.b16 %v793
          %v874 = vunpack.c.l.b16 %v794
          %v875 = vunpack.c.l.b16 %v795
          %v876 = vunpack.c.l.b16 %v796
          %v877 = vunpack.c.l.b16 %v797
          %v878 = vunpack.c.l.b16 %v798
          %v879 = vpack.c.b16 %v848, %v847
          %v880 = vpack.c.b16 %v850, %v849
          %v881 = vpack.c.b16 %v852, %v851
          %v882 = vpack.c.b16 %v854, %v853
          %v883 = vpack.c.b16 %v856, %v855
          %v884 = vpack.c.b16 %v858, %v857
          %v885 = vpack.c.b16 %v860, %v859
          %v886 = vpack.c.b16 %v862, %v861
          %v887 = vpack.c.b16 %v864, %v863
          %v888 = vpack.c.b16 %v866, %v865
          %v889 = vpack.c.b16 %v868, %v867
          %v890 = vpack.c.b16 %v870, %v869
          %v891 = vpack.c.b16 %v872, %v871
          %v892 = vpack.c.b16 %v874, %v873
          %v893 = vpack.c.b16 %v876, %v875
          %v894 = vpack.c.b16 %v878, %v877
          %911 = vmatprep.subr.bf16.mxu0 0
          %912 = vmatpush1.bf16.xpose.msra.mxu0 %v879
          %913 = vmatprep.subr.bf16.mxu0 0
          %914 = vmatpush1.bf16.xpose.msra.mxu0 %v880
          %915 = vmatprep.subr.bf16.mxu0 0
          %916 = vmatpush1.bf16.xpose.msra.mxu0 %v881
          %917 = vmatprep.subr.bf16.mxu0 0
          %918 = vmatpush1.bf16.xpose.msra.mxu0 %v882
          %919 = vmatprep.subr.bf16.mxu0 0
          %920 = vmatpush1.bf16.xpose.msra.mxu0 %v883
          %921 = vmatprep.subr.bf16.mxu0 0
          %922 = vmatpush1.bf16.xpose.msra.mxu0 %v884
          %923 = vmatprep.subr.bf16.mxu0 0
          %924 = vmatpush1.bf16.xpose.msra.mxu0 %v885
          %925 = vmatprep.subr.bf16.mxu0 0
          %926 = vmatpush1.bf16.xpose.msra.mxu0 %v886
          %927 = vmatprep.subr.bf16.mxu0 0
          %928 = vmatpush1.bf16.xpose.msra.mxu0 %v887
          %929 = vmatprep.subr.bf16.mxu0 0
          %930 = vmatpush1.bf16.xpose.msra.mxu0 %v888
          %931 = vmatprep.subr.bf16.mxu0 0
          %932 = vmatpush1.bf16.xpose.msra.mxu0 %v889
          %933 = vmatprep.subr.bf16.mxu0 0
          %934 = vmatpush1.bf16.xpose.msra.mxu0 %v890
          %935 = vmatprep.subr.bf16.mxu0 0
          %936 = vmatpush1.bf16.xpose.msra.mxu0 %v891
          %937 = vmatprep.subr.bf16.mxu0 0
          %938 = vmatpush1.bf16.xpose.msra.mxu0 %v892
          %939 = vmatprep.subr.bf16.mxu0 0
          %940 = vmatpush1.bf16.xpose.msra.mxu0 %v893
          %941 = vmatprep.subr.bf16.mxu0 0
          %942 = vmatpush1.bf16.xpose.msra.mxu0 %v894
          %943 = vmatprep.mubr.bf16.mxu0 0
          %944 = vmatmul.mubr.bf16.gmra.mrb[0].mxu0 %v799
          %v945 = vpop.f32.mrb[0].mxu0
          %v946 = vadd.f32 %v808, %v945
          %v947 = vpop.f32.mrb[0].mxu0
          %v948 = vadd.f32 %v812, %v947
          %v949 = vpop.f32.mrb[0].mxu0
          %v950 = vadd.f32 %v808, %v949
          %v951 = vpop.f32.mrb[0].mxu0
          %v952 = vadd.f32 %v812, %v951
          %953 = vmatprep.mubr.bf16.mxu0 0
          %954 = vmatmul.mubr.bf16.gmra.mrb[0].mxu0 %v800
          %v955 = vpop.f32.mrb[0].mxu0
          %v956 = vadd.f32 %v808, %v955
          %v957 = vpop.f32.mrb[0].mxu0
          %v958 = vadd.f32 %v812, %v957
          %v959 = vpop.f32.mrb[0].mxu0
          %v960 = vadd.f32 %v808, %v959
          %v961 = vpop.f32.mrb[0].mxu0
          %v962 = vadd.f32 %v812, %v961
          %963 = vdwg.mxu0
          %s964 = smul.u32 %s751, 16
          %s965 = smul.addr %s964, 4
          %s966 = scalar_lea.vmem [#allocation9], %s965
          %v967 = vld [vmem:[%s966] sm:$0xf]
          %v968 = vld [vmem:[%s966 + $0x4] sm:$0xf]
          %v969 = vld [vmem:[%s966 + $0x8] sm:$0xf]
          %v970 = vld [vmem:[%s966 + $0xc] sm:$0xf]
          %v971 = vld [vmem:[%s966 + $0x10] sm:$0xf]
          %v972 = vld [vmem:[%s966 + $0x14] sm:$0xf]
          %v973 = vld [vmem:[%s966 + $0x18] sm:$0xf]
          %v974 = vld [vmem:[%s966 + $0x1c] sm:$0xf]
          %v975 = vld [vmem:[%s966 + $0x20] sm:$0xf]
          %v976 = vld [vmem:[%s966 + $0x24] sm:$0xf]
          %v977 = vld [vmem:[%s966 + $0x28] sm:$0xf]
          %v978 = vld [vmem:[%s966 + $0x2c] sm:$0xf]
          %v979 = vld [vmem:[%s966 + $0x30] sm:$0xf]
          %v980 = vld [vmem:[%s966 + $0x34] sm:$0xf]
          %v981 = vld [vmem:[%s966 + $0x38] sm:$0xf]
          %v982 = vld [vmem:[%s966 + $0x3c] sm:$0xf]
          %v983 = vpack.c.bf16 %v757, %v756
          %v984 = vpack.c.bf16 %v759, %v758
          %s985 = scalar_lea.vmem %s5, %s751
          %v986 = vld [vmem:[%s985] sm:$0x1]
          %v988 = vlaneseq
          %v989 = vshrl.u32 %v988, 7
          %v990 = vsub.s32 0, %v989
          %v991 = vrot.slane %v986, %v990
          %v1009 = vunpack.c.l.b16 %v967
          %v1010 = vunpack.c.l.b16 %v968
          %v1011 = vunpack.c.l.b16 %v969
          %v1012 = vunpack.c.l.b16 %v970
          %v1013 = vunpack.c.l.b16 %v971
          %v1014 = vunpack.c.l.b16 %v972
          %v1015 = vunpack.c.l.b16 %v973
          %v1016 = vunpack.c.l.b16 %v974
          %v1017 = vunpack.c.l.b16 %v975
          %v1018 = vunpack.c.l.b16 %v976
          %v1019 = vunpack.c.l.b16 %v977
          %v1020 = vunpack.c.l.b16 %v978
          %v1021 = vunpack.c.l.b16 %v979
          %v1022 = vunpack.c.l.b16 %v980
          %v1023 = vunpack.c.l.b16 %v981
          %v1024 = vunpack.c.l.b16 %v982
          %v1025 = vpack.c.b16 %v1010, %v1009
          %v1026 = vpack.c.b16 %v1012, %v1011
          %v1027 = vpack.c.b16 %v1014, %v1013
          %v1028 = vpack.c.b16 %v1016, %v1015
          %v1029 = vpack.c.b16 %v1018, %v1017
          %v1030 = vpack.c.b16 %v1020, %v1019
          %v1031 = vpack.c.b16 %v1022, %v1021
          %v1032 = vpack.c.b16 %v1024, %v1023
          %1041 = vmatprep.subr.bf16.mxu0 0
          %1042 = vmatpush1.bf16.xpose.msra.mxu0 %v1025
          %1043 = vmatprep.subr.bf16.mxu0 0
          %1044 = vmatpush1.bf16.xpose.msra.mxu0 %v1026
          %1045 = vmatprep.subr.bf16.mxu0 0
          %1046 = vmatpush1.bf16.xpose.msra.mxu0 %v1027
          %1047 = vmatprep.subr.bf16.mxu0 0
          %1048 = vmatpush1.bf16.xpose.msra.mxu0 %v1028
          %1049 = vmatprep.subr.bf16.mxu0 0
          %1050 = vmatpush1.bf16.xpose.msra.mxu0 %v1029
          %1051 = vmatprep.subr.bf16.mxu0 0
          %1052 = vmatpush1.bf16.xpose.msra.mxu0 %v1030
          %1053 = vmatprep.subr.bf16.mxu0 0
          %1054 = vmatpush1.bf16.xpose.msra.mxu0 %v1031
          %1055 = vmatprep.subr.bf16.mxu0 0
          %1056 = vmatpush1.bf16.xpose.msra.mxu0 %v1032
          %1057 = vmatprep.subr.bf16.mxu0 0
          %1058 = vmatpush1.bf16.xpose.msra.mxu0 0
          %1059 = vmatprep.subr.bf16.mxu0 0
          %1060 = vmatpush1.bf16.xpose.msra.mxu0 0
          %1061 = vmatprep.subr.bf16.mxu0 0
          %1062 = vmatpush1.bf16.xpose.msra.mxu0 0
          %1063 = vmatprep.subr.bf16.mxu0 0
          %1064 = vmatpush1.bf16.xpose.msra.mxu0 0
          %1065 = vmatprep.subr.bf16.mxu0 0
          %1066 = vmatpush1.bf16.xpose.msra.mxu0 0
          %1067 = vmatprep.subr.bf16.mxu0 0
          %1068 = vmatpush1.bf16.xpose.msra.mxu0 0
          %1069 = vmatprep.subr.bf16.mxu0 0
          %1070 = vmatpush1.bf16.xpose.msra.mxu0 0
          %1071 = vmatprep.subr.bf16.mxu0 0
          %1072 = vmatpush1.bf16.xpose.msra.mxu0 0
          %1073 = vmatprep.mubr.bf16.mxu0 0
          %1074 = vmatmul.mubr.bf16.gmra.mrb[0].mxu0 %v983
          %v1075 = vpop.f32.mrb[0].mxu0
          %v1076 = vadd.f32 %v991, %v1075
          %v1077 = vpop.f32.mrb[0].mxu0
          %v1078 = vpop.f32.mrb[0].mxu0
          %v1079 = vadd.f32 %v991, %v1078
          %v1080 = vpop.f32.mrb[0].mxu0
          %1081 = vmatprep.mubr.bf16.mxu0 0
          %1082 = vmatmul.mubr.bf16.gmra.mrb[0].mxu0 %v984
          %v1083 = vpop.f32.mrb[0].mxu0
          %v1084 = vadd.f32 %v991, %v1083
          %v1085 = vpop.f32.mrb[0].mxu0
          %v1086 = vpop.f32.mrb[0].mxu0
          %v1087 = vadd.f32 %v991, %v1086
          %v1088 = vpop.f32.mrb[0].mxu0
          %1089 = vdwg.mxu0
          %v1090 = vpack.c.bf16 %v950, %v946
          %v1091 = vpack.c.bf16 %v960, %v956
          %v1092 = vpack.c.bf16 %v952, %v948
          %v1093 = vpack.c.bf16 %v962, %v958
          %v1094 = vpack.c.bf16 %v1079, %v1076
          %v1095 = vpack.c.bf16 %v1087, %v1084
          %v1096 = vmul.bf16 %v1090, %v727
          %v1097 = vmul.bf16 %v1091, %v727
          %1098 = vmatprep.subr.bf16.mxu0 0
          %1099 = vmatpush1.bf16.xpose.msra.mxu0 %v1092
          %1100 = vmatprep.subr.bf16.mxu0 0
          %1101 = vmatpush1.bf16.xpose.msra.mxu0 0
          %1102 = vmatprep.subr.bf16.mxu0 0
          %1103 = vmatpush1.bf16.xpose.msra.mxu0 0
          %1104 = vmatprep.subr.bf16.mxu0 0
          %1105 = vmatpush1.bf16.xpose.msra.mxu0 0
          %1106 = vmatprep.subr.bf16.mxu0 0
          %1107 = vmatpush1.bf16.xpose.msra.mxu0 0
          %1108 = vmatprep.subr.bf16.mxu0 0
          %1109 = vmatpush1.bf16.xpose.msra.mxu0 0
          %1110 = vmatprep.subr.bf16.mxu0 0
          %1111 = vmatpush1.bf16.xpose.msra.mxu0 0
          %1112 = vmatprep.subr.bf16.mxu0 0
          %1113 = vmatpush1.bf16.xpose.msra.mxu0 0
          %1114 = vmatprep.subr.bf16.mxu0 0
          %1115 = vmatpush1.bf16.xpose.msra.mxu0 0
          %1116 = vmatprep.subr.bf16.mxu0 0
          %1117 = vmatpush1.bf16.xpose.msra.mxu0 0
          %1118 = vmatprep.subr.bf16.mxu0 0
          %1119 = vmatpush1.bf16.xpose.msra.mxu0 0
          %1120 = vmatprep.subr.bf16.mxu0 0
          %1121 = vmatpush1.bf16.xpose.msra.mxu0 0
          %1122 = vmatprep.subr.bf16.mxu0 0
          %1123 = vmatpush1.bf16.xpose.msra.mxu0 0
          %1124 = vmatprep.subr.bf16.mxu0 0
          %1125 = vmatpush1.bf16.xpose.msra.mxu0 0
          %1126 = vmatprep.subr.bf16.mxu0 0
          %1127 = vmatpush1.bf16.xpose.msra.mxu0 0
          %1128 = vmatprep.subr.bf16.mxu0 0
          %1129 = vmatpush1.bf16.xpose.msra.mxu0 0
          %1130 = vmatprep.mubr.bf16.mxu0 0
          %1131 = vmatmul.mubr.bf16.gmra.mrb[0].mxu0 %v1096
          %v1132 = vpop.f32.mrb[0].mxu0
          %v1133 = vadd.f32 0.0, %v1132
          %v1134 = vpop.f32.mrb[0].mxu0
          %v1135 = vpop.f32.mrb[0].mxu0
          %v1136 = vadd.f32 0.0, %v1135
          %v1137 = vpop.f32.mrb[0].mxu0
          %1138 = vdwg.mxu0
          %1139 = vmatprep.subr.bf16.mxu0 0
          %1140 = vmatpush1.bf16.xpose.msra.mxu0 %v1093
          %1141 = vmatprep.subr.bf16.mxu0 0
          %1142 = vmatpush1.bf16.xpose.msra.mxu0 0
          %1143 = vmatprep.subr.bf16.mxu0 0
          %1144 = vmatpush1.bf16.xpose.msra.mxu0 0
          %1145 = vmatprep.subr.bf16.mxu0 0
          %1146 = vmatpush1.bf16.xpose.msra.mxu0 0
          %1147 = vmatprep.subr.bf16.mxu0 0
          %1148 = vmatpush1.bf16.xpose.msra.mxu0 0
          %1149 = vmatprep.subr.bf16.mxu0 0
          %1150 = vmatpush1.bf16.xpose.msra.mxu0 0
          %1151 = vmatprep.subr.bf16.mxu0 0
          %1152 = vmatpush1.bf16.xpose.msra.mxu0 0
          %1153 = vmatprep.subr.bf16.mxu0 0
          %1154 = vmatpush1.bf16.xpose.msra.mxu0 0
          %1155 = vmatprep.subr.bf16.mxu0 0
          %1156 = vmatpush1.bf16.xpose.msra.mxu0 0
          %1157 = vmatprep.subr.bf16.mxu0 0
          %1158 = vmatpush1.bf16.xpose.msra.mxu0 0
          %1159 = vmatprep.subr.bf16.mxu0 0
          %1160 = vmatpush1.bf16.xpose.msra.mxu0 0
          %1161 = vmatprep.subr.bf16.mxu0 0
          %1162 = vmatpush1.bf16.xpose.msra.mxu0 0
          %1163 = vmatprep.subr.bf16.mxu0 0
          %1164 = vmatpush1.bf16.xpose.msra.mxu0 0
          %1165 = vmatprep.subr.bf16.mxu0 0
          %1166 = vmatpush1.bf16.xpose.msra.mxu0 0
          %1167 = vmatprep.subr.bf16.mxu0 0
          %1168 = vmatpush1.bf16.xpose.msra.mxu0 0
          %1169 = vmatprep.subr.bf16.mxu0 0
          %1170 = vmatpush1.bf16.xpose.msra.mxu0 0
          %1171 = vmatprep.mubr.bf16.mxu0 0
          %1172 = vmatmul.mubr.bf16.gmra.mrb[0].mxu0 %v1097
          %v1173 = vpop.f32.mrb[0].mxu0
          %v1174 = vadd.f32 0.0, %v1173
          %v1175 = vpop.f32.mrb[0].mxu0
          %v1176 = vpop.f32.mrb[0].mxu0
          %v1177 = vadd.f32 0.0, %v1176
          %v1178 = vpop.f32.mrb[0].mxu0
          %1179 = vdwg.mxu0
          %vm1180 = vcmask 130048
          %v1181 = vsel %vm1180, %v1133, -inf
          %1182 = vmax.xlane.f32.xlu0 %v1181
          %v1183 = vpop.xlane.xlu0 %1182
          %v1184 = vsel %vm1180, %v1136, -inf
          %1185 = vmax.xlane.f32.xlu0 %v1184
          %v1186 = vpop.xlane.xlu0 %1185
          %v1187 = vsel %vm1180, %v1174, -inf
          %1188 = vmax.xlane.f32.xlu0 %v1187
          %v1189 = vpop.xlane.xlu0 %1188
          %v1190 = vsel %vm1180, %v1177, -inf
          %1191 = vmax.xlane.f32.xlu0 %v1190
          %v1192 = vpop.xlane.xlu0 %1191
          %v1193 = vsub.f32 %v1133, %v1183
          %v1194 = vsub.f32 %v1136, %v1186
          %v1195 = vsub.f32 %v1174, %v1189
          %v1196 = vsub.f32 %v1177, %v1192
          %v1197 = vmul.f32 %v1193, 1.442695
          %v1198 = vpow.pop %v1197
          %v1199 = vmul.f32 %v1194, 1.442695
          %v1200 = vpow.pop %v1199
          %v1201 = vmul.f32 %v1195, 1.442695
          %v1202 = vpow.pop %v1201
          %v1203 = vmul.f32 %v1196, 1.442695
          %v1204 = vpow.pop %v1203
          %v1205 = vsel %vm1180, %v1198, 0.0
          %1206 = vadd.xlane.f32.xlu0 %v1205
          %v1207 = vpop.xlane.xlu0 %1206
          %v1208 = vsel %vm1180, %v1200, 0.0
          %1209 = vadd.xlane.f32.xlu0 %v1208
          %v1210 = vpop.xlane.xlu0 %1209
          %v1211 = vsel %vm1180, %v1202, 0.0
          %1212 = vadd.xlane.f32.xlu0 %v1211
          %v1213 = vpop.xlane.xlu0 %1212
          %v1214 = vsel %vm1180, %v1204, 0.0
          %1215 = vadd.xlane.f32.xlu0 %v1214
          %v1216 = vpop.xlane.xlu0 %1215
          %v1217 = vrcp.pop %v1207
          %v1218 = vrcp.pop %v1210
          %v1219 = vrcp.pop %v1213
          %v1220 = vrcp.pop %v1216
          %v1221 = vmul.f32 %v1198, %v1217
          %v1222 = vmul.f32 %v1200, %v1218
          %v1223 = vmul.f32 %v1202, %v1219
          %v1224 = vmul.f32 %v1204, %v1220
          %v1225 = vpack.c.bf16 %v1222, %v1221
          %v1226 = vpack.c.bf16 %v1224, %v1223
          %v1227 = vmul.bf16 %v1094, %v727
          %v1228 = vmul.bf16 %v1095, %v727
          %v1229 = vmul.bf16 %v1090, %v733
          %v1230 = vmul.bf16 %v1091, %v733
          %1231 = vmatprep.subr.bf16.mxu0 0
          %1232 = vmatpush1.bf16.xpose.msra.mxu0 %v1092
          %1233 = vmatprep.subr.bf16.mxu0 0
          %1234 = vmatpush1.bf16.xpose.msra.mxu0 0
          %1235 = vmatprep.subr.bf16.mxu0 0
          %1236 = vmatpush1.bf16.xpose.msra.mxu0 0
          %1237 = vmatprep.subr.bf16.mxu0 0
          %1238 = vmatpush1.bf16.xpose.msra.mxu0 0
          %1239 = vmatprep.subr.bf16.mxu0 0
          %1240 = vmatpush1.bf16.xpose.msra.mxu0 0
          %1241 = vmatprep.subr.bf16.mxu0 0
          %1242 = vmatpush1.bf16.xpose.msra.mxu0 0
          %1243 = vmatprep.subr.bf16.mxu0 0
          %1244 = vmatpush1.bf16.xpose.msra.mxu0 0
          %1245 = vmatprep.subr.bf16.mxu0 0
          %1246 = vmatpush1.bf16.xpose.msra.mxu0 0
          %1247 = vmatprep.subr.bf16.mxu0 0
          %1248 = vmatpush1.bf16.xpose.msra.mxu0 0
          %1249 = vmatprep.subr.bf16.mxu0 0
          %1250 = vmatpush1.bf16.xpose.msra.mxu0 0
          %1251 = vmatprep.subr.bf16.mxu0 0
          %1252 = vmatpush1.bf16.xpose.msra.mxu0 0
          %1253 = vmatprep.subr.bf16.mxu0 0
          %1254 = vmatpush1.bf16.xpose.msra.mxu0 0
          %1255 = vmatprep.subr.bf16.mxu0 0
          %1256 = vmatpush1.bf16.xpose.msra.mxu0 0
          %1257 = vmatprep.subr.bf16.mxu0 0
          %1258 = vmatpush1.bf16.xpose.msra.mxu0 0
          %1259 = vmatprep.subr.bf16.mxu0 0
          %1260 = vmatpush1.bf16.xpose.msra.mxu0 0
          %1261 = vmatprep.subr.bf16.mxu0 0
          %1262 = vmatpush1.bf16.xpose.msra.mxu0 0
          %1263 = vmatprep.mubr.bf16.mxu0 0
          %1264 = vmatmul.mubr.bf16.gmra.mrb[0].mxu0 %v1229
          %v1265 = vpop.f32.mrb[0].mxu0
          %v1266 = vadd.f32 0.0, %v1265
          %v1267 = vpop.f32.mrb[0].mxu0
          %v1268 = vpop.f32.mrb[0].mxu0
          %v1269 = vadd.f32 0.0, %v1268
          %v1270 = vpop.f32.mrb[0].mxu0
          %1271 = vdwg.mxu0
          %1272 = vmatprep.subr.bf16.mxu0 0
          %1273 = vmatpush1.bf16.xpose.msra.mxu0 %v1093
          %1274 = vmatprep.subr.bf16.mxu0 0
          %1275 = vmatpush1.bf16.xpose.msra.mxu0 0
          %1276 = vmatprep.subr.bf16.mxu0 0
          %1277 = vmatpush1.bf16.xpose.msra.mxu0 0
          %1278 = vmatprep.subr.bf16.mxu0 0
          %1279 = vmatpush1.bf16.xpose.msra.mxu0 0
          %1280 = vmatprep.subr.bf16.mxu0 0
          %1281 = vmatpush1.bf16.xpose.msra.mxu0 0
          %1282 = vmatprep.subr.bf16.mxu0 0
          %1283 = vmatpush1.bf16.xpose.msra.mxu0 0
          %1284 = vmatprep.subr.bf16.mxu0 0
          %1285 = vmatpush1.bf16.xpose.msra.mxu0 0
          %1286 = vmatprep.subr.bf16.mxu0 0
          %1287 = vmatpush1.bf16.xpose.msra.mxu0 0
          %1288 = vmatprep.subr.bf16.mxu0 0
          %1289 = vmatpush1.bf16.xpose.msra.mxu0 0
          %1290 = vmatprep.subr.bf16.mxu0 0
          %1291 = vmatpush1.bf16.xpose.msra.mxu0 0
          %1292 = vmatprep.subr.bf16.mxu0 0
          %1293 = vmatpush1.bf16.xpose.msra.mxu0 0
          %1294 = vmatprep.subr.bf16.mxu0 0
          %1295 = vmatpush1.bf16.xpose.msra.mxu0 0
          %1296 = vmatprep.subr.bf16.mxu0 0
          %1297 = vmatpush1.bf16.xpose.msra.mxu0 0
          %1298 = vmatprep.subr.bf16.mxu0 0
          %1299 = vmatpush1.bf16.xpose.msra.mxu0 0
          %1300 = vmatprep.subr.bf16.mxu0 0
          %1301 = vmatpush1.bf16.xpose.msra.mxu0 0
          %1302 = vmatprep.subr.bf16.mxu0 0
          %1303 = vmatpush1.bf16.xpose.msra.mxu0 0
          %1304 = vmatprep.mubr.bf16.mxu0 0
          %1305 = vmatmul.mubr.bf16.gmra.mrb[0].mxu0 %v1230
          %v1306 = vpop.f32.mrb[0].mxu0
          %v1307 = vadd.f32 0.0, %v1306
          %v1308 = vpop.f32.mrb[0].mxu0
          %v1309 = vpop.f32.mrb[0].mxu0
          %v1310 = vadd.f32 0.0, %v1309
          %v1311 = vpop.f32.mrb[0].mxu0
          %1312 = vdwg.mxu0
          %v1313 = vsel %vm1180, %v1266, -inf
          %1314 = vmax.xlane.f32.xlu0 %v1313
          %v1315 = vpop.xlane.xlu0 %1314
          %v1316 = vsel %vm1180, %v1269, -inf
          %1317 = vmax.xlane.f32.xlu0 %v1316
          %v1318 = vpop.xlane.xlu0 %1317
          %v1319 = vsel %vm1180, %v1307, -inf
          %1320 = vmax.xlane.f32.xlu0 %v1319
          %v1321 = vpop.xlane.xlu0 %1320
          %v1322 = vsel %vm1180, %v1310, -inf
          %1323 = vmax.xlane.f32.xlu0 %v1322
          %v1324 = vpop.xlane.xlu0 %1323
          %v1325 = vsub.f32 %v1266, %v1315
          %v1326 = vsub.f32 %v1269, %v1318
          %v1327 = vsub.f32 %v1307, %v1321
          %v1328 = vsub.f32 %v1310, %v1324
          %v1329 = vmul.f32 %v1325, 1.442695
          %v1330 = vpow.pop %v1329
          %v1331 = vmul.f32 %v1326, 1.442695
          %v1332 = vpow.pop %v1331
          %v1333 = vmul.f32 %v1327, 1.442695
          %v1334 = vpow.pop %v1333
          %v1335 = vmul.f32 %v1328, 1.442695
          %v1336 = vpow.pop %v1335
          %v1337 = vsel %vm1180, %v1330, 0.0
          %1338 = vadd.xlane.f32.xlu0 %v1337
          %v1339 = vpop.xlane.xlu0 %1338
          %v1340 = vsel %vm1180, %v1332, 0.0
          %1341 = vadd.xlane.f32.xlu0 %v1340
          %v1342 = vpop.xlane.xlu0 %1341
          %v1343 = vsel %vm1180, %v1334, 0.0
          %1344 = vadd.xlane.f32.xlu0 %v1343
          %v1345 = vpop.xlane.xlu0 %1344
          %v1346 = vsel %vm1180, %v1336, 0.0
          %1347 = vadd.xlane.f32.xlu0 %v1346
          %v1348 = vpop.xlane.xlu0 %1347
          %v1349 = vrcp.pop %v1339
          %v1350 = vrcp.pop %v1342
          %v1351 = vrcp.pop %v1345
          %v1352 = vrcp.pop %v1348
          %v1353 = vmul.f32 %v1330, %v1349
          %v1354 = vmul.f32 %v1332, %v1350
          %v1355 = vmul.f32 %v1334, %v1351
          %v1356 = vmul.f32 %v1336, %v1352
          %v1357 = vpack.c.bf16 %v1354, %v1353
          %v1358 = vpack.c.bf16 %v1356, %v1355
          %v1359 = vmul.bf16 %v1094, %v733
          %v1360 = vmul.bf16 %v1095, %v733
          %v1362 = vsel %vm1180, %v1357, 0
          %1364 = vmatprep.subr.bf16.mxu0 0
          %1365 = vmatpush1.bf16.msra.mxu0 %v1359
          %1366 = vmatprep.subr.bf16.mxu0 0
          %1367 = vmatpush1.bf16.msra.mxu0 0
          %1368 = vmatprep.subr.bf16.mxu0 0
          %1369 = vmatpush1.bf16.msra.mxu0 0
          %1370 = vmatprep.subr.bf16.mxu0 0
          %1371 = vmatpush1.bf16.msra.mxu0 0
          %1372 = vmatprep.subr.bf16.mxu0 0
          %1373 = vmatpush1.bf16.msra.mxu0 0
          %1374 = vmatprep.subr.bf16.mxu0 0
          %1375 = vmatpush1.bf16.msra.mxu0 0
          %1376 = vmatprep.subr.bf16.mxu0 0
          %1377 = vmatpush1.bf16.msra.mxu0 0
          %1378 = vmatprep.subr.bf16.mxu0 0
          %1379 = vmatpush1.bf16.msra.mxu0 0
          %1380 = vmatprep.subr.bf16.mxu0 0
          %1381 = vmatpush1.bf16.msra.mxu0 0
          %1382 = vmatprep.subr.bf16.mxu0 0
          %1383 = vmatpush1.bf16.msra.mxu0 0
          %1384 = vmatprep.subr.bf16.mxu0 0
          %1385 = vmatpush1.bf16.msra.mxu0 0
          %1386 = vmatprep.subr.bf16.mxu0 0
          %1387 = vmatpush1.bf16.msra.mxu0 0
          %1388 = vmatprep.subr.bf16.mxu0 0
          %1389 = vmatpush1.bf16.msra.mxu0 0
          %1390 = vmatprep.subr.bf16.mxu0 0
          %1391 = vmatpush1.bf16.msra.mxu0 0
          %1392 = vmatprep.subr.bf16.mxu0 0
          %1393 = vmatpush1.bf16.msra.mxu0 0
          %1394 = vmatprep.subr.bf16.mxu0 0
          %1395 = vmatpush1.bf16.msra.mxu0 0
          %1396 = vmatprep.mubr.bf16.mxu0 0
          %1397 = vmatmul.mubr.bf16.gmra.mrb[0].mxu0 %v1362
          %v1398 = vpop.f32.mrb[0].mxu0
          %v1399 = vadd.f32 0.0, %v1398
          %v1400 = vpop.f32.mrb[0].mxu0
          %v1401 = vpop.f32.mrb[0].mxu0
          %v1402 = vadd.f32 0.0, %v1401
          %v1403 = vpop.f32.mrb[0].mxu0
          %1404 = vdwg.mxu0
          %v1406 = vsel %vm1180, %v1358, 0
          %1408 = vmatprep.subr.bf16.mxu0 0
          %1409 = vmatpush1.bf16.msra.mxu0 %v1360
          %1410 = vmatprep.subr.bf16.mxu0 0
          %1411 = vmatpush1.bf16.msra.mxu0 0
          %1412 = vmatprep.subr.bf16.mxu0 0
          %1413 = vmatpush1.bf16.msra.mxu0 0
          %1414 = vmatprep.subr.bf16.mxu0 0
          %1415 = vmatpush1.bf16.msra.mxu0 0
          %1416 = vmatprep.subr.bf16.mxu0 0
          %1417 = vmatpush1.bf16.msra.mxu0 0
          %1418 = vmatprep.subr.bf16.mxu0 0
          %1419 = vmatpush1.bf16.msra.mxu0 0
          %1420 = vmatprep.subr.bf16.mxu0 0
          %1421 = vmatpush1.bf16.msra.mxu0 0
          %1422 = vmatprep.subr.bf16.mxu0 0
          %1423 = vmatpush1.bf16.msra.mxu0 0
          %1424 = vmatprep.subr.bf16.mxu0 0
          %1425 = vmatpush1.bf16.msra.mxu0 0
          %1426 = vmatprep.subr.bf16.mxu0 0
          %1427 = vmatpush1.bf16.msra.mxu0 0
          %1428 = vmatprep.subr.bf16.mxu0 0
          %1429 = vmatpush1.bf16.msra.mxu0 0
          %1430 = vmatprep.subr.bf16.mxu0 0
          %1431 = vmatpush1.bf16.msra.mxu0 0
          %1432 = vmatprep.subr.bf16.mxu0 0
          %1433 = vmatpush1.bf16.msra.mxu0 0
          %1434 = vmatprep.subr.bf16.mxu0 0
          %1435 = vmatpush1.bf16.msra.mxu0 0
          %1436 = vmatprep.subr.bf16.mxu0 0
          %1437 = vmatpush1.bf16.msra.mxu0 0
          %1438 = vmatprep.subr.bf16.mxu0 0
          %1439 = vmatpush1.bf16.msra.mxu0 0
          %1440 = vmatprep.mubr.bf16.mxu0 0
          %1441 = vmatmul.mubr.bf16.gmra.mrb[0].mxu0 %v1406
          %v1442 = vpop.f32.mrb[0].mxu0
          %v1443 = vadd.f32 0.0, %v1442
          %v1444 = vpop.f32.mrb[0].mxu0
          %v1445 = vpop.f32.mrb[0].mxu0
          %v1446 = vadd.f32 0.0, %v1445
          %v1447 = vpop.f32.mrb[0].mxu0
          %1448 = vdwg.mxu0
          %v1450 = vsel %vm1180, %v1225, 0
          %1452 = vmatprep.subr.bf16.mxu0 0
          %1453 = vmatpush1.bf16.msra.mxu0 %v1227
          %1454 = vmatprep.subr.bf16.mxu0 0
          %1455 = vmatpush1.bf16.msra.mxu0 0
          %1456 = vmatprep.subr.bf16.mxu0 0
          %1457 = vmatpush1.bf16.msra.mxu0 0
          %1458 = vmatprep.subr.bf16.mxu0 0
          %1459 = vmatpush1.bf16.msra.mxu0 0
          %1460 = vmatprep.subr.bf16.mxu0 0
          %1461 = vmatpush1.bf16.msra.mxu0 0
          %1462 = vmatprep.subr.bf16.mxu0 0
          %1463 = vmatpush1.bf16.msra.mxu0 0
          %1464 = vmatprep.subr.bf16.mxu0 0
          %1465 = vmatpush1.bf16.msra.mxu0 0
          %1466 = vmatprep.subr.bf16.mxu0 0
          %1467 = vmatpush1.bf16.msra.mxu0 0
          %1468 = vmatprep.subr.bf16.mxu0 0
          %1469 = vmatpush1.bf16.msra.mxu0 0
          %1470 = vmatprep.subr.bf16.mxu0 0
          %1471 = vmatpush1.bf16.msra.mxu0 0
          %1472 = vmatprep.subr.bf16.mxu0 0
          %1473 = vmatpush1.bf16.msra.mxu0 0
          %1474 = vmatprep.subr.bf16.mxu0 0
          %1475 = vmatpush1.bf16.msra.mxu0 0
          %1476 = vmatprep.subr.bf16.mxu0 0
          %1477 = vmatpush1.bf16.msra.mxu0 0
          %1478 = vmatprep.subr.bf16.mxu0 0
          %1479 = vmatpush1.bf16.msra.mxu0 0
          %1480 = vmatprep.subr.bf16.mxu0 0
          %1481 = vmatpush1.bf16.msra.mxu0 0
          %1482 = vmatprep.subr.bf16.mxu0 0
          %1483 = vmatpush1.bf16.msra.mxu0 0
          %1484 = vmatprep.mubr.bf16.mxu0 0
          %1485 = vmatmul.mubr.bf16.gmra.mrb[0].mxu0 %v1450
          %v1486 = vpop.f32.mrb[0].mxu0
          %v1487 = vadd.f32 %v1399, %v1486
          %v1488 = vpop.f32.mrb[0].mxu0
          %v1489 = vpop.f32.mrb[0].mxu0
          %v1490 = vadd.f32 %v1402, %v1489
          %v1491 = vpop.f32.mrb[0].mxu0
          %1492 = vdwg.mxu0
          %v1494 = vsel %vm1180, %v1226, 0
          %1496 = vmatprep.subr.bf16.mxu0 0
          %1497 = vmatpush1.bf16.msra.mxu0 %v1228
          %1498 = vmatprep.subr.bf16.mxu0 0
          %1499 = vmatpush1.bf16.msra.mxu0 0
          %1500 = vmatprep.subr.bf16.mxu0 0
          %1501 = vmatpush1.bf16.msra.mxu0 0
          %1502 = vmatprep.subr.bf16.mxu0 0
          %1503 = vmatpush1.bf16.msra.mxu0 0
          %1504 = vmatprep.subr.bf16.mxu0 0
          %1505 = vmatpush1.bf16.msra.mxu0 0
          %1506 = vmatprep.subr.bf16.mxu0 0
          %1507 = vmatpush1.bf16.msra.mxu0 0
          %1508 = vmatprep.subr.bf16.mxu0 0
          %1509 = vmatpush1.bf16.msra.mxu0 0
          %1510 = vmatprep.subr.bf16.mxu0 0
          %1511 = vmatpush1.bf16.msra.mxu0 0
          %1512 = vmatprep.subr.bf16.mxu0 0
          %1513 = vmatpush1.bf16.msra.mxu0 0
          %1514 = vmatprep.subr.bf16.mxu0 0
          %1515 = vmatpush1.bf16.msra.mxu0 0
          %1516 = vmatprep.subr.bf16.mxu0 0
          %1517 = vmatpush1.bf16.msra.mxu0 0
          %1518 = vmatprep.subr.bf16.mxu0 0
          %1519 = vmatpush1.bf16.msra.mxu0 0
          %1520 = vmatprep.subr.bf16.mxu0 0
          %1521 = vmatpush1.bf16.msra.mxu0 0
          %1522 = vmatprep.subr.bf16.mxu0 0
          %1523 = vmatpush1.bf16.msra.mxu0 0
          %1524 = vmatprep.subr.bf16.mxu0 0
          %1525 = vmatpush1.bf16.msra.mxu0 0
          %1526 = vmatprep.subr.bf16.mxu0 0
          %1527 = vmatpush1.bf16.msra.mxu0 0
          %1528 = vmatprep.mubr.bf16.mxu0 0
          %1529 = vmatmul.mubr.bf16.gmra.mrb[0].mxu0 %v1494
          %v1530 = vpop.f32.mrb[0].mxu0
          %v1531 = vadd.f32 %v1443, %v1530
          %v1532 = vpop.f32.mrb[0].mxu0
          %v1533 = vpop.f32.mrb[0].mxu0
          %v1534 = vadd.f32 %v1446, %v1533
          %v1535 = vpop.f32.mrb[0].mxu0
          %1536 = vdwg.mxu0
          %v1537 = vmul.bf16 %v1090, %v739
          %v1538 = vmul.bf16 %v1091, %v739
          %1539 = vmatprep.subr.bf16.mxu0 0
          %1540 = vmatpush1.bf16.xpose.msra.mxu0 %v1092
          %1541 = vmatprep.subr.bf16.mxu0 0
          %1542 = vmatpush1.bf16.xpose.msra.mxu0 0
          %1543 = vmatprep.subr.bf16.mxu0 0
          %1544 = vmatpush1.bf16.xpose.msra.mxu0 0
          %1545 = vmatprep.subr.bf16.mxu0 0
          %1546 = vmatpush1.bf16.xpose.msra.mxu0 0
          %1547 = vmatprep.subr.bf16.mxu0 0
          %1548 = vmatpush1.bf16.xpose.msra.mxu0 0
          %1549 = vmatprep.subr.bf16.mxu0 0
          %1550 = vmatpush1.bf16.xpose.msra.mxu0 0
          %1551 = vmatprep.subr.bf16.mxu0 0
          %1552 = vmatpush1.bf16.xpose.msra.mxu0 0
          %1553 = vmatprep.subr.bf16.mxu0 0
          %1554 = vmatpush1.bf16.xpose.msra.mxu0 0
          %1555 = vmatprep.subr.bf16.mxu0 0
          %1556 = vmatpush1.bf16.xpose.msra.mxu0 0
          %1557 = vmatprep.subr.bf16.mxu0 0
          %1558 = vmatpush1.bf16.xpose.msra.mxu0 0
          %1559 = vmatprep.subr.bf16.mxu0 0
          %1560 = vmatpush1.bf16.xpose.msra.mxu0 0
          %1561 = vmatprep.subr.bf16.mxu0 0
          %1562 = vmatpush1.bf16.xpose.msra.mxu0 0
          %1563 = vmatprep.subr.bf16.mxu0 0
          %1564 = vmatpush1.bf16.xpose.msra.mxu0 0
          %1565 = vmatprep.subr.bf16.mxu0 0
          %1566 = vmatpush1.bf16.xpose.msra.mxu0 0
          %1567 = vmatprep.subr.bf16.mxu0 0
          %1568 = vmatpush1.bf16.xpose.msra.mxu0 0
          %1569 = vmatprep.subr.bf16.mxu0 0
          %1570 = vmatpush1.bf16.xpose.msra.mxu0 0
          %1571 = vmatprep.mubr.bf16.mxu0 0
          %1572 = vmatmul.mubr.bf16.gmra.mrb[0].mxu0 %v1537
          %v1573 = vpop.f32.mrb[0].mxu0
          %v1574 = vadd.f32 0.0, %v1573
          %v1575 = vpop.f32.mrb[0].mxu0
          %v1576 = vpop.f32.mrb[0].mxu0
          %v1577 = vadd.f32 0.0, %v1576
          %v1578 = vpop.f32.mrb[0].mxu0
          %1579 = vdwg.mxu0
          %1580 = vmatprep.subr.bf16.mxu0 0
          %1581 = vmatpush1.bf16.xpose.msra.mxu0 %v1093
          %1582 = vmatprep.subr.bf16.mxu0 0
          %1583 = vmatpush1.bf16.xpose.msra.mxu0 0
          %1584 = vmatprep.subr.bf16.mxu0 0
          %1585 = vmatpush1.bf16.xpose.msra.mxu0 0
          %1586 = vmatprep.subr.bf16.mxu0 0
          %1587 = vmatpush1.bf16.xpose.msra.mxu0 0
          %1588 = vmatprep.subr.bf16.mxu0 0
          %1589 = vmatpush1.bf16.xpose.msra.mxu0 0
          %1590 = vmatprep.subr.bf16.mxu0 0
          %1591 = vmatpush1.bf16.xpose.msra.mxu0 0
          %1592 = vmatprep.subr.bf16.mxu0 0
          %1593 = vmatpush1.bf16.xpose.msra.mxu0 0
          %1594 = vmatprep.subr.bf16.mxu0 0
          %1595 = vmatpush1.bf16.xpose.msra.mxu0 0
          %1596 = vmatprep.subr.bf16.mxu0 0
          %1597 = vmatpush1.bf16.xpose.msra.mxu0 0
          %1598 = vmatprep.subr.bf16.mxu0 0
          %1599 = vmatpush1.bf16.xpose.msra.mxu0 0
          %1600 = vmatprep.subr.bf16.mxu0 0
          %1601 = vmatpush1.bf16.xpose.msra.mxu0 0
          %1602 = vmatprep.subr.bf16.mxu0 0
          %1603 = vmatpush1.bf16.xpose.msra.mxu0 0
          %1604 = vmatprep.subr.bf16.mxu0 0
          %1605 = vmatpush1.bf16.xpose.msra.mxu0 0
          %1606 = vmatprep.subr.bf16.mxu0 0
          %1607 = vmatpush1.bf16.xpose.msra.mxu0 0
          %1608 = vmatprep.subr.bf16.mxu0 0
          %1609 = vmatpush1.bf16.xpose.msra.mxu0 0
          %1610 = vmatprep.subr.bf16.mxu0 0
          %1611 = vmatpush1.bf16.xpose.msra.mxu0 0
          %1612 = vmatprep.mubr.bf16.mxu0 0
          %1613 = vmatmul.mubr.bf16.gmra.mrb[0].mxu0 %v1538
          %v1614 = vpop.f32.mrb[0].mxu0
          %v1615 = vadd.f32 0.0, %v1614
          %v1616 = vpop.f32.mrb[0].mxu0
          %v1617 = vpop.f32.mrb[0].mxu0
          %v1618 = vadd.f32 0.0, %v1617
          %v1619 = vpop.f32.mrb[0].mxu0
          %1620 = vdwg.mxu0
          %v1621 = vsel %vm1180, %v1574, -inf
          %1622 = vmax.xlane.f32.xlu0 %v1621
          %v1623 = vpop.xlane.xlu0 %1622
          %v1624 = vsel %vm1180, %v1577, -inf
          %1625 = vmax.xlane.f32.xlu0 %v1624
          %v1626 = vpop.xlane.xlu0 %1625
          %v1627 = vsel %vm1180, %v1615, -inf
          %1628 = vmax.xlane.f32.xlu0 %v1627
          %v1629 = vpop.xlane.xlu0 %1628
          %v1630 = vsel %vm1180, %v1618, -inf
          %1631 = vmax.xlane.f32.xlu0 %v1630
          %v1632 = vpop.xlane.xlu0 %1631
          %v1633 = vsub.f32 %v1574, %v1623
          %v1634 = vsub.f32 %v1577, %v1626
          %v1635 = vsub.f32 %v1615, %v1629
          %v1636 = vsub.f32 %v1618, %v1632
          %v1637 = vmul.f32 %v1633, 1.442695
          %v1638 = vpow.pop %v1637
          %v1639 = vmul.f32 %v1634, 1.442695
          %v1640 = vpow.pop %v1639
          %v1641 = vmul.f32 %v1635, 1.442695
          %v1642 = vpow.pop %v1641
          %v1643 = vmul.f32 %v1636, 1.442695
          %v1644 = vpow.pop %v1643
          %v1645 = vsel %vm1180, %v1638, 0.0
          %1646 = vadd.xlane.f32.xlu0 %v1645
          %v1647 = vpop.xlane.xlu0 %1646
          %v1648 = vsel %vm1180, %v1640, 0.0
          %1649 = vadd.xlane.f32.xlu0 %v1648
          %v1650 = vpop.xlane.xlu0 %1649
          %v1651 = vsel %vm1180, %v1642, 0.0
          %1652 = vadd.xlane.f32.xlu0 %v1651
          %v1653 = vpop.xlane.xlu0 %1652
          %v1654 = vsel %vm1180, %v1644, 0.0
          %1655 = vadd.xlane.f32.xlu0 %v1654
          %v1656 = vpop.xlane.xlu0 %1655
          %v1657 = vrcp.pop %v1647
          %v1658 = vrcp.pop %v1650
          %v1659 = vrcp.pop %v1653
          %v1660 = vrcp.pop %v1656
          %v1661 = vmul.f32 %v1638, %v1657
          %v1662 = vmul.f32 %v1640, %v1658
          %v1663 = vmul.f32 %v1642, %v1659
          %v1664 = vmul.f32 %v1644, %v1660
          %v1665 = vpack.c.bf16 %v1662, %v1661
          %v1666 = vpack.c.bf16 %v1664, %v1663
          %v1667 = vmul.bf16 %v1094, %v739
          %v1668 = vmul.bf16 %v1095, %v739
          %v1670 = vsel %vm1180, %v1665, 0
          %1672 = vmatprep.subr.bf16.mxu0 0
          %1673 = vmatpush1.bf16.msra.mxu0 %v1667
          %1674 = vmatprep.subr.bf16.mxu0 0
          %1675 = vmatpush1.bf16.msra.mxu0 0
          %1676 = vmatprep.subr.bf16.mxu0 0
          %1677 = vmatpush1.bf16.msra.mxu0 0
          %1678 = vmatprep.subr.bf16.mxu0 0
          %1679 = vmatpush1.bf16.msra.mxu0 0
          %1680 = vmatprep.subr.bf16.mxu0 0
          %1681 = vmatpush1.bf16.msra.mxu0 0
          %1682 = vmatprep.subr.bf16.mxu0 0
          %1683 = vmatpush1.bf16.msra.mxu0 0
          %1684 = vmatprep.subr.bf16.mxu0 0
          %1685 = vmatpush1.bf16.msra.mxu0 0
          %1686 = vmatprep.subr.bf16.mxu0 0
          %1687 = vmatpush1.bf16.msra.mxu0 0
          %1688 = vmatprep.subr.bf16.mxu0 0
          %1689 = vmatpush1.bf16.msra.mxu0 0
          %1690 = vmatprep.subr.bf16.mxu0 0
          %1691 = vmatpush1.bf16.msra.mxu0 0
          %1692 = vmatprep.subr.bf16.mxu0 0
          %1693 = vmatpush1.bf16.msra.mxu0 0
          %1694 = vmatprep.subr.bf16.mxu0 0
          %1695 = vmatpush1.bf16.msra.mxu0 0
          %1696 = vmatprep.subr.bf16.mxu0 0
          %1697 = vmatpush1.bf16.msra.mxu0 0
          %1698 = vmatprep.subr.bf16.mxu0 0
          %1699 = vmatpush1.bf16.msra.mxu0 0
          %1700 = vmatprep.subr.bf16.mxu0 0
          %1701 = vmatpush1.bf16.msra.mxu0 0
          %1702 = vmatprep.subr.bf16.mxu0 0
          %1703 = vmatpush1.bf16.msra.mxu0 0
          %1704 = vmatprep.mubr.bf16.mxu0 0
          %1705 = vmatmul.mubr.bf16.gmra.mrb[0].mxu0 %v1670
          %v1706 = vpop.f32.mrb[0].mxu0
          %v1707 = vadd.f32 0.0, %v1706
          %v1708 = vpop.f32.mrb[0].mxu0
          %v1709 = vpop.f32.mrb[0].mxu0
          %v1710 = vadd.f32 0.0, %v1709
          %v1711 = vpop.f32.mrb[0].mxu0
          %1712 = vdwg.mxu0
          %v1714 = vsel %vm1180, %v1666, 0
          %1716 = vmatprep.subr.bf16.mxu0 0
          %1717 = vmatpush1.bf16.msra.mxu0 %v1668
          %1718 = vmatprep.subr.bf16.mxu0 0
          %1719 = vmatpush1.bf16.msra.mxu0 0
          %1720 = vmatprep.subr.bf16.mxu0 0
          %1721 = vmatpush1.bf16.msra.mxu0 0
          %1722 = vmatprep.subr.bf16.mxu0 0
          %1723 = vmatpush1.bf16.msra.mxu0 0
          %1724 = vmatprep.subr.bf16.mxu0 0
          %1725 = vmatpush1.bf16.msra.mxu0 0
          %1726 = vmatprep.subr.bf16.mxu0 0
          %1727 = vmatpush1.bf16.msra.mxu0 0
          %1728 = vmatprep.subr.bf16.mxu0 0
          %1729 = vmatpush1.bf16.msra.mxu0 0
          %1730 = vmatprep.subr.bf16.mxu0 0
          %1731 = vmatpush1.bf16.msra.mxu0 0
          %1732 = vmatprep.subr.bf16.mxu0 0
          %1733 = vmatpush1.bf16.msra.mxu0 0
          %1734 = vmatprep.subr.bf16.mxu0 0
          %1735 = vmatpush1.bf16.msra.mxu0 0
          %1736 = vmatprep.subr.bf16.mxu0 0
          %1737 = vmatpush1.bf16.msra.mxu0 0
          %1738 = vmatprep.subr.bf16.mxu0 0
          %1739 = vmatpush1.bf16.msra.mxu0 0
          %1740 = vmatprep.subr.bf16.mxu0 0
          %1741 = vmatpush1.bf16.msra.mxu0 0
          %1742 = vmatprep.subr.bf16.mxu0 0
          %1743 = vmatpush1.bf16.msra.mxu0 0
          %1744 = vmatprep.subr.bf16.mxu0 0
          %1745 = vmatpush1.bf16.msra.mxu0 0
          %1746 = vmatprep.subr.bf16.mxu0 0
          %1747 = vmatpush1.bf16.msra.mxu0 0
          %1748 = vmatprep.mubr.bf16.mxu0 0
          %1749 = vmatmul.mubr.bf16.gmra.mrb[0].mxu0 %v1714
          %v1750 = vpop.f32.mrb[0].mxu0
          %v1751 = vadd.f32 0.0, %v1750
          %v1752 = vpop.f32.mrb[0].mxu0
          %v1753 = vpop.f32.mrb[0].mxu0
          %v1754 = vadd.f32 0.0, %v1753
          %v1755 = vpop.f32.mrb[0].mxu0
          %1756 = vdwg.mxu0
          %v1757 = vadd.f32 %v1487, %v1707
          %v1758 = vadd.f32 %v1490, %v1710
          %v1759 = vadd.f32 %v1531, %v1751
          %v1760 = vadd.f32 %v1534, %v1754
          %v1761 = vmul.bf16 %v1090, %v745
          %v1762 = vmul.bf16 %v1091, %v745
          %1763 = vmatprep.subr.bf16.mxu0 0
          %1764 = vmatpush1.bf16.xpose.msra.mxu0 %v1092
          %1765 = vmatprep.subr.bf16.mxu0 0
          %1766 = vmatpush1.bf16.xpose.msra.mxu0 0
          %1767 = vmatprep.subr.bf16.mxu0 0
          %1768 = vmatpush1.bf16.xpose.msra.mxu0 0
          %1769 = vmatprep.subr.bf16.mxu0 0
          %1770 = vmatpush1.bf16.xpose.msra.mxu0 0
          %1771 = vmatprep.subr.bf16.mxu0 0
          %1772 = vmatpush1.bf16.xpose.msra.mxu0 0
          %1773 = vmatprep.subr.bf16.mxu0 0
          %1774 = vmatpush1.bf16.xpose.msra.mxu0 0
          %1775 = vmatprep.subr.bf16.mxu0 0
          %1776 = vmatpush1.bf16.xpose.msra.mxu0 0
          %1777 = vmatprep.subr.bf16.mxu0 0
          %1778 = vmatpush1.bf16.xpose.msra.mxu0 0
          %1779 = vmatprep.subr.bf16.mxu0 0
          %1780 = vmatpush1.bf16.xpose.msra.mxu0 0
          %1781 = vmatprep.subr.bf16.mxu0 0
          %1782 = vmatpush1.bf16.xpose.msra.mxu0 0
          %1783 = vmatprep.subr.bf16.mxu0 0
          %1784 = vmatpush1.bf16.xpose.msra.mxu0 0
          %1785 = vmatprep.subr.bf16.mxu0 0
          %1786 = vmatpush1.bf16.xpose.msra.mxu0 0
          %1787 = vmatprep.subr.bf16.mxu0 0
          %1788 = vmatpush1.bf16.xpose.msra.mxu0 0
          %1789 = vmatprep.subr.bf16.mxu0 0
          %1790 = vmatpush1.bf16.xpose.msra.mxu0 0
          %1791 = vmatprep.subr.bf16.mxu0 0
          %1792 = vmatpush1.bf16.xpose.msra.mxu0 0
          %1793 = vmatprep.subr.bf16.mxu0 0
          %1794 = vmatpush1.bf16.xpose.msra.mxu0 0
          %1795 = vmatprep.mubr.bf16.mxu0 0
          %1796 = vmatmul.mubr.bf16.gmra.mrb[0].mxu0 %v1761
          %v1797 = vpop.f32.mrb[0].mxu0
          %v1798 = vadd.f32 0.0, %v1797
          %v1799 = vpop.f32.mrb[0].mxu0
          %v1800 = vpop.f32.mrb[0].mxu0
          %v1801 = vadd.f32 0.0, %v1800
          %v1802 = vpop.f32.mrb[0].mxu0
          %1803 = vdwg.mxu0
          %1804 = vmatprep.subr.bf16.mxu0 0
          %1805 = vmatpush1.bf16.xpose.msra.mxu0 %v1093
          %1806 = vmatprep.subr.bf16.mxu0 0
          %1807 = vmatpush1.bf16.xpose.msra.mxu0 0
          %1808 = vmatprep.subr.bf16.mxu0 0
          %1809 = vmatpush1.bf16.xpose.msra.mxu0 0
          %1810 = vmatprep.subr.bf16.mxu0 0
          %1811 = vmatpush1.bf16.xpose.msra.mxu0 0
          %1812 = vmatprep.subr.bf16.mxu0 0
          %1813 = vmatpush1.bf16.xpose.msra.mxu0 0
          %1814 = vmatprep.subr.bf16.mxu0 0
          %1815 = vmatpush1.bf16.xpose.msra.mxu0 0
          %1816 = vmatprep.subr.bf16.mxu0 0
          %1817 = vmatpush1.bf16.xpose.msra.mxu0 0
          %1818 = vmatprep.subr.bf16.mxu0 0
          %1819 = vmatpush1.bf16.xpose.msra.mxu0 0
          %1820 = vmatprep.subr.bf16.mxu0 0
          %1821 = vmatpush1.bf16.xpose.msra.mxu0 0
          %1822 = vmatprep.subr.bf16.mxu0 0
          %1823 = vmatpush1.bf16.xpose.msra.mxu0 0
          %1824 = vmatprep.subr.bf16.mxu0 0
          %1825 = vmatpush1.bf16.xpose.msra.mxu0 0
          %1826 = vmatprep.subr.bf16.mxu0 0
          %1827 = vmatpush1.bf16.xpose.msra.mxu0 0
          %1828 = vmatprep.subr.bf16.mxu0 0
          %1829 = vmatpush1.bf16.xpose.msra.mxu0 0
          %1830 = vmatprep.subr.bf16.mxu0 0
          %1831 = vmatpush1.bf16.xpose.msra.mxu0 0
          %1832 = vmatprep.subr.bf16.mxu0 0
          %1833 = vmatpush1.bf16.xpose.msra.mxu0 0
          %1834 = vmatprep.subr.bf16.mxu0 0
          %1835 = vmatpush1.bf16.xpose.msra.mxu0 0
          %1836 = vmatprep.mubr.bf16.mxu0 0
          %1837 = vmatmul.mubr.bf16.gmra.mrb[0].mxu0 %v1762
          %v1838 = vpop.f32.mrb[0].mxu0
          %v1839 = vadd.f32 0.0, %v1838
          %v1840 = vpop.f32.mrb[0].mxu0
          %v1841 = vpop.f32.mrb[0].mxu0
          %v1842 = vadd.f32 0.0, %v1841
          %v1843 = vpop.f32.mrb[0].mxu0
          %1844 = vdwg.mxu0
          %v1845 = vsel %vm1180, %v1798, -inf
          %1846 = vmax.xlane.f32.xlu0 %v1845
          %v1847 = vpop.xlane.xlu0 %1846
          %v1848 = vsel %vm1180, %v1801, -inf
          %1849 = vmax.xlane.f32.xlu0 %v1848
          %v1850 = vpop.xlane.xlu0 %1849
          %v1851 = vsel %vm1180, %v1839, -inf
          %1852 = vmax.xlane.f32.xlu0 %v1851
          %v1853 = vpop.xlane.xlu0 %1852
          %v1854 = vsel %vm1180, %v1842, -inf
          %1855 = vmax.xlane.f32.xlu0 %v1854
          %v1856 = vpop.xlane.xlu0 %1855
          %v1857 = vsub.f32 %v1798, %v1847
          %v1858 = vsub.f32 %v1801, %v1850
          %v1859 = vsub.f32 %v1839, %v1853
          %v1860 = vsub.f32 %v1842, %v1856
          %v1861 = vmul.f32 %v1857, 1.442695
          %v1862 = vpow.pop %v1861
          %v1863 = vmul.f32 %v1858, 1.442695
          %v1864 = vpow.pop %v1863
          %v1865 = vmul.f32 %v1859, 1.442695
          %v1866 = vpow.pop %v1865
          %v1867 = vmul.f32 %v1860, 1.442695
          %v1868 = vpow.pop %v1867
          %v1869 = vsel %vm1180, %v1862, 0.0
          %1870 = vadd.xlane.f32.xlu0 %v1869
          %v1871 = vpop.xlane.xlu0 %1870
          %v1872 = vsel %vm1180, %v1864, 0.0
          %1873 = vadd.xlane.f32.xlu0 %v1872
          %v1874 = vpop.xlane.xlu0 %1873
          %v1875 = vsel %vm1180, %v1866, 0.0
          %1876 = vadd.xlane.f32.xlu0 %v1875
          %v1877 = vpop.xlane.xlu0 %1876
          %v1878 = vsel %vm1180, %v1868, 0.0
          %1879 = vadd.xlane.f32.xlu0 %v1878
          %v1880 = vpop.xlane.xlu0 %1879
          %v1881 = vrcp.pop %v1871
          %v1882 = vrcp.pop %v1874
          %v1883 = vrcp.pop %v1877
          %v1884 = vrcp.pop %v1880
          %v1885 = vmul.f32 %v1862, %v1881
          %v1886 = vmul.f32 %v1864, %v1882
          %v1887 = vmul.f32 %v1866, %v1883
          %v1888 = vmul.f32 %v1868, %v1884
          %v1889 = vpack.c.bf16 %v1886, %v1885
          %v1890 = vpack.c.bf16 %v1888, %v1887
          %v1891 = vmul.bf16 %v1094, %v745
          %v1892 = vmul.bf16 %v1095, %v745
          %v1894 = vsel %vm1180, %v1889, 0
          %1896 = vmatprep.subr.bf16.mxu0 0
          %1897 = vmatpush1.bf16.msra.mxu0 %v1891
          %1898 = vmatprep.subr.bf16.mxu0 0
          %1899 = vmatpush1.bf16.msra.mxu0 0
          %1900 = vmatprep.subr.bf16.mxu0 0
          %1901 = vmatpush1.bf16.msra.mxu0 0
          %1902 = vmatprep.subr.bf16.mxu0 0
          %1903 = vmatpush1.bf16.msra.mxu0 0
          %1904 = vmatprep.subr.bf16.mxu0 0
          %1905 = vmatpush1.bf16.msra.mxu0 0
          %1906 = vmatprep.subr.bf16.mxu0 0
          %1907 = vmatpush1.bf16.msra.mxu0 0
          %1908 = vmatprep.subr.bf16.mxu0 0
          %1909 = vmatpush1.bf16.msra.mxu0 0
          %1910 = vmatprep.subr.bf16.mxu0 0
          %1911 = vmatpush1.bf16.msra.mxu0 0
          %1912 = vmatprep.subr.bf16.mxu0 0
          %1913 = vmatpush1.bf16.msra.mxu0 0
          %1914 = vmatprep.subr.bf16.mxu0 0
          %1915 = vmatpush1.bf16.msra.mxu0 0
          %1916 = vmatprep.subr.bf16.mxu0 0
          %1917 = vmatpush1.bf16.msra.mxu0 0
          %1918 = vmatprep.subr.bf16.mxu0 0
          %1919 = vmatpush1.bf16.msra.mxu0 0
          %1920 = vmatprep.subr.bf16.mxu0 0
          %1921 = vmatpush1.bf16.msra.mxu0 0
          %1922 = vmatprep.subr.bf16.mxu0 0
          %1923 = vmatpush1.bf16.msra.mxu0 0
          %1924 = vmatprep.subr.bf16.mxu0 0
          %1925 = vmatpush1.bf16.msra.mxu0 0
          %1926 = vmatprep.subr.bf16.mxu0 0
          %1927 = vmatpush1.bf16.msra.mxu0 0
          %1928 = vmatprep.mubr.bf16.mxu0 0
          %1929 = vmatmul.mubr.bf16.gmra.mrb[0].mxu0 %v1894
          %v1930 = vpop.f32.mrb[0].mxu0
          %v1931 = vadd.f32 0.0, %v1930
          %v1932 = vpop.f32.mrb[0].mxu0
          %v1933 = vpop.f32.mrb[0].mxu0
          %v1934 = vadd.f32 0.0, %v1933
          %v1935 = vpop.f32.mrb[0].mxu0
          %1936 = vdwg.mxu0
          %v1938 = vsel %vm1180, %v1890, 0
          %1940 = vmatprep.subr.bf16.mxu0 0
          %1941 = vmatpush1.bf16.msra.mxu0 %v1892
          %1942 = vmatprep.subr.bf16.mxu0 0
          %1943 = vmatpush1.bf16.msra.mxu0 0
          %1944 = vmatprep.subr.bf16.mxu0 0
          %1945 = vmatpush1.bf16.msra.mxu0 0
          %1946 = vmatprep.subr.bf16.mxu0 0
          %1947 = vmatpush1.bf16.msra.mxu0 0
          %1948 = vmatprep.subr.bf16.mxu0 0
          %1949 = vmatpush1.bf16.msra.mxu0 0
          %1950 = vmatprep.subr.bf16.mxu0 0
          %1951 = vmatpush1.bf16.msra.mxu0 0
          %1952 = vmatprep.subr.bf16.mxu0 0
          %1953 = vmatpush1.bf16.msra.mxu0 0
          %1954 = vmatprep.subr.bf16.mxu0 0
          %1955 = vmatpush1.bf16.msra.mxu0 0
          %1956 = vmatprep.subr.bf16.mxu0 0
          %1957 = vmatpush1.bf16.msra.mxu0 0
          %1958 = vmatprep.subr.bf16.mxu0 0
          %1959 = vmatpush1.bf16.msra.mxu0 0
          %1960 = vmatprep.subr.bf16.mxu0 0
          %1961 = vmatpush1.bf16.msra.mxu0 0
          %1962 = vmatprep.subr.bf16.mxu0 0
          %1963 = vmatpush1.bf16.msra.mxu0 0
          %1964 = vmatprep.subr.bf16.mxu0 0
          %1965 = vmatpush1.bf16.msra.mxu0 0
          %1966 = vmatprep.subr.bf16.mxu0 0
          %1967 = vmatpush1.bf16.msra.mxu0 0
          %1968 = vmatprep.subr.bf16.mxu0 0
          %1969 = vmatpush1.bf16.msra.mxu0 0
          %1970 = vmatprep.subr.bf16.mxu0 0
          %1971 = vmatpush1.bf16.msra.mxu0 0
          %1972 = vmatprep.mubr.bf16.mxu0 0
          %1973 = vmatmul.mubr.bf16.gmra.mrb[0].mxu0 %v1938
          %v1974 = vpop.f32.mrb[0].mxu0
          %v1975 = vadd.f32 0.0, %v1974
          %v1976 = vpop.f32.mrb[0].mxu0
          %v1977 = vpop.f32.mrb[0].mxu0
          %v1978 = vadd.f32 0.0, %v1977
          %v1979 = vpop.f32.mrb[0].mxu0
          %1980 = vdwg.mxu0
          %v1981 = vadd.f32 %v1757, %v1931
          %v1982 = vadd.f32 %v1758, %v1934
          %v1983 = vadd.f32 %v1759, %v1975
          %v1984 = vadd.f32 %v1760, %v1978
          %s1985 = smul.addr %s964, 4
          %s1986 = scalar_lea.vmem [#allocation11], %s1985
          %v1987 = vld [vmem:[%s1986] sm:$0xf]
          %v1988 = vld [vmem:[%s1986 + $0x4] sm:$0xf]
          %v1989 = vld [vmem:[%s1986 + $0x8] sm:$0xf]
          %v1990 = vld [vmem:[%s1986 + $0xc] sm:$0xf]
          %v1991 = vld [vmem:[%s1986 + $0x10] sm:$0xf]
          %v1992 = vld [vmem:[%s1986 + $0x14] sm:$0xf]
          %v1993 = vld [vmem:[%s1986 + $0x18] sm:$0xf]
          %v1994 = vld [vmem:[%s1986 + $0x1c] sm:$0xf]
          %v1995 = vld [vmem:[%s1986 + $0x20] sm:$0xf]
          %v1996 = vld [vmem:[%s1986 + $0x24] sm:$0xf]
          %v1997 = vld [vmem:[%s1986 + $0x28] sm:$0xf]
          %v1998 = vld [vmem:[%s1986 + $0x2c] sm:$0xf]
          %v1999 = vld [vmem:[%s1986 + $0x30] sm:$0xf]
          %v2000 = vld [vmem:[%s1986 + $0x34] sm:$0xf]
          %v2001 = vld [vmem:[%s1986 + $0x38] sm:$0xf]
          %v2002 = vld [vmem:[%s1986 + $0x3c] sm:$0xf]
          %v2003 = vpack.c.bf16 %v1982, %v1981
          %v2004 = vpack.c.bf16 %v1984, %v1983
          %s2005 = scalar_lea.vmem %s7, %s751
          %v2006 = vld [vmem:[%s2005] sm:$0x1]
          %v2008 = vlaneseq
          %v2009 = vshrl.u32 %v2008, 7
          %v2010 = vsub.s32 0, %v2009
          %v2011 = vrot.slane %v2006, %v2010
          %v2029 = vunpack.c.l.b16 %v1987
          %v2030 = vunpack.c.l.b16 %v1988
          %v2031 = vunpack.c.l.b16 %v1989
          %v2032 = vunpack.c.l.b16 %v1990
          %v2033 = vunpack.c.l.b16 %v1991
          %v2034 = vunpack.c.l.b16 %v1992
          %v2035 = vunpack.c.l.b16 %v1993
          %v2036 = vunpack.c.l.b16 %v1994
          %v2037 = vunpack.c.l.b16 %v1995
          %v2038 = vunpack.c.l.b16 %v1996
          %v2039 = vunpack.c.l.b16 %v1997
          %v2040 = vunpack.c.l.b16 %v1998
          %v2041 = vunpack.c.l.b16 %v1999
          %v2042 = vunpack.c.l.b16 %v2000
          %v2043 = vunpack.c.l.b16 %v2001
          %v2044 = vunpack.c.l.b16 %v2002
          %v2045 = vpack.c.b16 %v2030, %v2029
          %v2046 = vpack.c.b16 %v2032, %v2031
          %v2047 = vpack.c.b16 %v2034, %v2033
          %v2048 = vpack.c.b16 %v2036, %v2035
          %v2049 = vpack.c.b16 %v2038, %v2037
          %v2050 = vpack.c.b16 %v2040, %v2039
          %v2051 = vpack.c.b16 %v2042, %v2041
          %v2052 = vpack.c.b16 %v2044, %v2043
          %2061 = vmatprep.subr.bf16.mxu0 0
          %2062 = vmatpush1.bf16.xpose.msra.mxu0 %v2045
          %2063 = vmatprep.subr.bf16.mxu0 0
          %2064 = vmatpush1.bf16.xpose.msra.mxu0 %v2046
          %2065 = vmatprep.subr.bf16.mxu0 0
          %2066 = vmatpush1.bf16.xpose.msra.mxu0 %v2047
          %2067 = vmatprep.subr.bf16.mxu0 0
          %2068 = vmatpush1.bf16.xpose.msra.mxu0 %v2048
          %2069 = vmatprep.subr.bf16.mxu0 0
          %2070 = vmatpush1.bf16.xpose.msra.mxu0 %v2049
          %2071 = vmatprep.subr.bf16.mxu0 0
          %2072 = vmatpush1.bf16.xpose.msra.mxu0 %v2050
          %2073 = vmatprep.subr.bf16.mxu0 0
          %2074 = vmatpush1.bf16.xpose.msra.mxu0 %v2051
          %2075 = vmatprep.subr.bf16.mxu0 0
          %2076 = vmatpush1.bf16.xpose.msra.mxu0 %v2052
          %2077 = vmatprep.subr.bf16.mxu0 0
          %2078 = vmatpush1.bf16.xpose.msra.mxu0 0
          %2079 = vmatprep.subr.bf16.mxu0 0
          %2080 = vmatpush1.bf16.xpose.msra.mxu0 0
          %2081 = vmatprep.subr.bf16.mxu0 0
          %2082 = vmatpush1.bf16.xpose.msra.mxu0 0
          %2083 = vmatprep.subr.bf16.mxu0 0
          %2084 = vmatpush1.bf16.xpose.msra.mxu0 0
          %2085 = vmatprep.subr.bf16.mxu0 0
          %2086 = vmatpush1.bf16.xpose.msra.mxu0 0
          %2087 = vmatprep.subr.bf16.mxu0 0
          %2088 = vmatpush1.bf16.xpose.msra.mxu0 0
          %2089 = vmatprep.subr.bf16.mxu0 0
          %2090 = vmatpush1.bf16.xpose.msra.mxu0 0
          %2091 = vmatprep.subr.bf16.mxu0 0
          %2092 = vmatpush1.bf16.xpose.msra.mxu0 0
          %2093 = vmatprep.mubr.bf16.mxu0 0
          %2094 = vmatmul.mubr.bf16.gmra.mrb[0].mxu0 %v2003
          %v2095 = vpop.f32.mrb[0].mxu0
          %v2096 = vadd.f32 %v2011, %v2095
          %v2097 = vpop.f32.mrb[0].mxu0
          %v2098 = vpop.f32.mrb[0].mxu0
          %v2099 = vadd.f32 %v2011, %v2098
          %v2100 = vpop.f32.mrb[0].mxu0
          %2101 = vmatprep.mubr.bf16.mxu0 0
          %2102 = vmatmul.mubr.bf16.gmra.mrb[0].mxu0 %v2004
          %v2103 = vpop.f32.mrb[0].mxu0
          %v2104 = vadd.f32 %v2011, %v2103
          %v2105 = vpop.f32.mrb[0].mxu0
          %v2106 = vpop.f32.mrb[0].mxu0
          %v2107 = vadd.f32 %v2011, %v2106
          %v2108 = vpop.f32.mrb[0].mxu0
          %2109 = vdwg.mxu0
          %v2110 = vadd.f32 %v756, %v2096
          %v2111 = vadd.f32 %v757, %v2099
          %v2112 = vadd.f32 %v758, %v2104
          %v2113 = vadd.f32 %v759, %v2107
          %s2114 = scalar_lea.vmem %s12, %s751
          %v2115 = vld [vmem:[%s2114] sm:$0x1]
          %s2116 = scalar_lea.vmem %s13, %s751
          %v2117 = vld [vmem:[%s2116] sm:$0x1]
          %2118 = vadd.xlane.f32.xlu0 %v2110
          %v2119 = vpop.xlane.xlu0 %2118
          %2120 = vadd.xlane.f32.xlu0 %v2111
          %v2121 = vpop.xlane.xlu0 %2120
          %2122 = vadd.xlane.f32.xlu0 %v2112
          %v2123 = vpop.xlane.xlu0 %2122
          %2124 = vadd.xlane.f32.xlu0 %v2113
          %v2125 = vpop.xlane.xlu0 %2124
          %v2126 = vrcp.pop 128.0
          %v2127 = vmul.f32 %v2119, %v2126
          %v2128 = vmul.f32 %v2121, %v2126
          %v2129 = vmul.f32 %v2123, %v2126
          %v2130 = vmul.f32 %v2125, %v2126
          %v2131 = vsub.f32 %v2110, %v2127
          %v2132 = vsub.f32 %v2111, %v2128
          %v2133 = vsub.f32 %v2112, %v2129
          %v2134 = vsub.f32 %v2113, %v2130
          %v2135 = vmul.f32 %v2131, %v2131
          %v2136 = vmul.f32 %v2132, %v2132
          %v2137 = vmul.f32 %v2133, %v2133
          %v2138 = vmul.f32 %v2134, %v2134
          %2139 = vadd.xlane.f32.xlu0 %v2135
          %v2140 = vpop.xlane.xlu0 %2139
          %2141 = vadd.xlane.f32.xlu0 %v2136
          %v2142 = vpop.xlane.xlu0 %2141
          %2143 = vadd.xlane.f32.xlu0 %v2137
          %v2144 = vpop.xlane.xlu0 %2143
          %2145 = vadd.xlane.f32.xlu0 %v2138
          %v2146 = vpop.xlane.xlu0 %2145
          %v2147 = vmul.f32 %v2140, %v2126
          %v2148 = vmul.f32 %v2142, %v2126
          %v2149 = vmul.f32 %v2144, %v2126
          %v2150 = vmul.f32 %v2146, %v2126
          %v2151 = vadd.f32 %v2147, 1e-05
          %v2152 = vadd.f32 %v2148, 1e-05
          %v2153 = vadd.f32 %v2149, 1e-05
          %v2154 = vadd.f32 %v2150, 1e-05
          %v2155 = vrsqrt.pop %v2151
          %v2156 = vrsqrt.pop %v2152
          %v2157 = vrsqrt.pop %v2153
          %v2158 = vrsqrt.pop %v2154
          %v2159 = vmul.f32 %v2131, %v2155
          %v2160 = vmul.f32 %v2132, %v2156
          %v2161 = vmul.f32 %v2133, %v2157
          %v2162 = vmul.f32 %v2134, %v2158
          %v2164 = vlaneseq
          %v2165 = vshrl.u32 %v2164, 7
          %v2166 = vsub.s32 0, %v2165
          %v2167 = vrot.slane %v2115, %v2166
          %v2169 = vmul.f32 %v2159, %v2167
          %v2170 = vmul.f32 %v2160, %v2167
          %v2171 = vmul.f32 %v2161, %v2167
          %v2172 = vmul.f32 %v2162, %v2167
          %v2174 = vlaneseq
          %v2175 = vshrl.u32 %v2174, 7
          %v2176 = vsub.s32 0, %v2175
          %v2177 = vrot.slane %v2117, %v2176
          %v2179 = vadd.f32 %v2169, %v2177
          %v2180 = vadd.f32 %v2170, %v2177
          %v2181 = vadd.f32 %v2171, %v2177
          %v2182 = vadd.f32 %v2172, %v2177
          %s2183 = smul.addr %s764, 4
          %s2184 = scalar_lea.vmem [#allocation12], %s2183
          %v2185 = vld [vmem:[%s2184] sm:$0xf]
          %v2186 = vld [vmem:[%s2184 + $0x4] sm:$0xf]
          %v2187 = vld [vmem:[%s2184 + $0x8] sm:$0xf]
          %v2188 = vld [vmem:[%s2184 + $0xc] sm:$0xf]
          %v2189 = vld [vmem:[%s2184 + $0x10] sm:$0xf]
          %v2190 = vld [vmem:[%s2184 + $0x14] sm:$0xf]
          %v2191 = vld [vmem:[%s2184 + $0x18] sm:$0xf]
          %v2192 = vld [vmem:[%s2184 + $0x1c] sm:$0xf]
          %v2193 = vld [vmem:[%s2184 + $0x20] sm:$0xf]
          %v2194 = vld [vmem:[%s2184 + $0x24] sm:$0xf]
          %v2195 = vld [vmem:[%s2184 + $0x28] sm:$0xf]
          %v2196 = vld [vmem:[%s2184 + $0x2c] sm:$0xf]
          %v2197 = vld [vmem:[%s2184 + $0x30] sm:$0xf]
          %v2198 = vld [vmem:[%s2184 + $0x34] sm:$0xf]
          %v2199 = vld [vmem:[%s2184 + $0x38] sm:$0xf]
          %v2200 = vld [vmem:[%s2184 + $0x3c] sm:$0xf]
          %v2201 = vld [vmem:[%s2184 + $0x40] sm:$0xf]
          %v2202 = vld [vmem:[%s2184 + $0x44] sm:$0xf]
          %v2203 = vld [vmem:[%s2184 + $0x48] sm:$0xf]
          %v2204 = vld [vmem:[%s2184 + $0x4c] sm:$0xf]
          %v2205 = vld [vmem:[%s2184 + $0x50] sm:$0xf]
          %v2206 = vld [vmem:[%s2184 + $0x54] sm:$0xf]
          %v2207 = vld [vmem:[%s2184 + $0x58] sm:$0xf]
          %v2208 = vld [vmem:[%s2184 + $0x5c] sm:$0xf]
          %v2209 = vld [vmem:[%s2184 + $0x60] sm:$0xf]
          %v2210 = vld [vmem:[%s2184 + $0x64] sm:$0xf]
          %v2211 = vld [vmem:[%s2184 + $0x68] sm:$0xf]
          %v2212 = vld [vmem:[%s2184 + $0x6c] sm:$0xf]
          %v2213 = vld [vmem:[%s2184 + $0x70] sm:$0xf]
          %v2214 = vld [vmem:[%s2184 + $0x74] sm:$0xf]
          %v2215 = vld [vmem:[%s2184 + $0x78] sm:$0xf]
          %v2216 = vld [vmem:[%s2184 + $0x7c] sm:$0xf]
          %v2217 = vpack.c.bf16 %v2180, %v2179
          %v2218 = vpack.c.bf16 %v2182, %v2181
          %s2219 = scalar_lea.vmem %s9, %s801
          %v2220 = vld [vmem:[%s2219] sm:$0x3]
          %v2222 = vlaneseq
          %v2223 = vshrl.u32 %v2222, 7
          %v2224 = vsub.s32 0, %v2223
          %v2225 = vrot.slane %v2220, %v2224
          %v2226 = vlaneseq
          %v2227 = vshrl.u32 %v2226, 7
          %v2228 = vsub.s32 1, %v2227
          %v2229 = vrot.slane %v2220, %v2228
          %v2264 = vunpack.c.l.b16 %v2185
          %v2265 = vunpack.c.l.b16 %v2186
          %v2266 = vunpack.c.l.b16 %v2187
          %v2267 = vunpack.c.l.b16 %v2188
          %v2268 = vunpack.c.l.b16 %v2189
          %v2269 = vunpack.c.l.b16 %v2190
          %v2270 = vunpack.c.l.b16 %v2191
          %v2271 = vunpack.c.l.b16 %v2192
          %v2272 = vunpack.c.l.b16 %v2193
          %v2273 = vunpack.c.l.b16 %v2194
          %v2274 = vunpack.c.l.b16 %v2195
          %v2275 = vunpack.c.l.b16 %v2196
          %v2276 = vunpack.c.l.b16 %v2197
          %v2277 = vunpack.c.l.b16 %v2198
          %v2278 = vunpack.c.l.b16 %v2199
          %v2279 = vunpack.c.l.b16 %v2200
          %v2280 = vunpack.c.l.b16 %v2201
          %v2281 = vunpack.c.l.b16 %v2202
          %v2282 = vunpack.c.l.b16 %v2203
          %v2283 = vunpack.c.l.b16 %v2204
          %v2284 = vunpack.c.l.b16 %v2205
          %v2285 = vunpack.c.l.b16 %v2206
          %v2286 = vunpack.c.l.b16 %v2207
          %v2287 = vunpack.c.l.b16 %v2208
          %v2288 = vunpack.c.l.b16 %v2209
          %v2289 = vunpack.c.l.b16 %v2210
          %v2290 = vunpack.c.l.b16 %v2211
          %v2291 = vunpack.c.l.b16 %v2212
          %v2292 = vunpack.c.l.b16 %v2213
          %v2293 = vunpack.c.l.b16 %v2214
          %v2294 = vunpack.c.l.b16 %v2215
          %v2295 = vunpack.c.l.b16 %v2216
          %v2296 = vpack.c.b16 %v2265, %v2264
          %v2297 = vpack.c.b16 %v2267, %v2266
          %v2298 = vpack.c.b16 %v2269, %v2268
          %v2299 = vpack.c.b16 %v2271, %v2270
          %v2300 = vpack.c.b16 %v2273, %v2272
          %v2301 = vpack.c.b16 %v2275, %v2274
          %v2302 = vpack.c.b16 %v2277, %v2276
          %v2303 = vpack.c.b16 %v2279, %v2278
          %v2304 = vpack.c.b16 %v2281, %v2280
          %v2305 = vpack.c.b16 %v2283, %v2282
          %v2306 = vpack.c.b16 %v2285, %v2284
          %v2307 = vpack.c.b16 %v2287, %v2286
          %v2308 = vpack.c.b16 %v2289, %v2288
          %v2309 = vpack.c.b16 %v2291, %v2290
          %v2310 = vpack.c.b16 %v2293, %v2292
          %v2311 = vpack.c.b16 %v2295, %v2294
          %2328 = vmatprep.subr.bf16.mxu0 0
          %2329 = vmatpush1.bf16.xpose.msra.mxu0 %v2296
          %2330 = vmatprep.subr.bf16.mxu0 0
          %2331 = vmatpush1.bf16.xpose.msra.mxu0 %v2297
          %2332 = vmatprep.subr.bf16.mxu0 0
          %2333 = vmatpush1.bf16.xpose.msra.mxu0 %v2298
          %2334 = vmatprep.subr.bf16.mxu0 0
          %2335 = vmatpush1.bf16.xpose.msra.mxu0 %v2299
          %2336 = vmatprep.subr.bf16.mxu0 0
          %2337 = vmatpush1.bf16.xpose.msra.mxu0 %v2300
          %2338 = vmatprep.subr.bf16.mxu0 0
          %2339 = vmatpush1.bf16.xpose.msra.mxu0 %v2301
          %2340 = vmatprep.subr.bf16.mxu0 0
          %2341 = vmatpush1.bf16.xpose.msra.mxu0 %v2302
          %2342 = vmatprep.subr.bf16.mxu0 0
          %2343 = vmatpush1.bf16.xpose.msra.mxu0 %v2303
          %2344 = vmatprep.subr.bf16.mxu0 0
          %2345 = vmatpush1.bf16.xpose.msra.mxu0 %v2304
          %2346 = vmatprep.subr.bf16.mxu0 0
          %2347 = vmatpush1.bf16.xpose.msra.mxu0 %v2305
          %2348 = vmatprep.subr.bf16.mxu0 0
          %2349 = vmatpush1.bf16.xpose.msra.mxu0 %v2306
          %2350 = vmatprep.subr.bf16.mxu0 0
          %2351 = vmatpush1.bf16.xpose.msra.mxu0 %v2307
          %2352 = vmatprep.subr.bf16.mxu0 0
          %2353 = vmatpush1.bf16.xpose.msra.mxu0 %v2308
          %2354 = vmatprep.subr.bf16.mxu0 0
          %2355 = vmatpush1.bf16.xpose.msra.mxu0 %v2309
          %2356 = vmatprep.subr.bf16.mxu0 0
          %2357 = vmatpush1.bf16.xpose.msra.mxu0 %v2310
          %2358 = vmatprep.subr.bf16.mxu0 0
          %2359 = vmatpush1.bf16.xpose.msra.mxu0 %v2311
          %2360 = vmatprep.mubr.bf16.mxu0 0
          %2361 = vmatmul.mubr.bf16.gmra.mrb[0].mxu0 %v2217
          %v2362 = vpop.f32.mrb[0].mxu0
          %v2363 = vadd.f32 %v2225, %v2362
          %v2364 = vpop.f32.mrb[0].mxu0
          %v2365 = vadd.f32 %v2229, %v2364
          %v2366 = vpop.f32.mrb[0].mxu0
          %v2367 = vadd.f32 %v2225, %v2366
          %v2368 = vpop.f32.mrb[0].mxu0
          %v2369 = vadd.f32 %v2229, %v2368
          %2370 = vmatprep.mubr.bf16.mxu0 0
          %2371 = vmatmul.mubr.bf16.gmra.mrb[0].mxu0 %v2218
          %v2372 = vpop.f32.mrb[0].mxu0
          %v2373 = vadd.f32 %v2225, %v2372
          %v2374 = vpop.f32.mrb[0].mxu0
          %v2375 = vadd.f32 %v2229, %v2374
          %v2376 = vpop.f32.mrb[0].mxu0
          %v2377 = vadd.f32 %v2225, %v2376
          %v2378 = vpop.f32.mrb[0].mxu0
          %v2379 = vadd.f32 %v2229, %v2378
          %2380 = vdwg.mxu0
          %v2381 = vmax.f32 %v2363, 0.0
          %v2382 = vmax.f32 %v2365, 0.0
          %v2383 = vmax.f32 %v2367, 0.0
          %v2384 = vmax.f32 %v2369, 0.0
          %v2385 = vmax.f32 %v2373, 0.0
          %v2386 = vmax.f32 %v2375, 0.0
          %v2387 = vmax.f32 %v2377, 0.0
          %v2388 = vmax.f32 %v2379, 0.0
          %s2389 = smul.addr %s764, 4
          %s2390 = scalar_lea.vmem [#allocation14], %s2389
          %v2391 = vld [vmem:[%s2390] sm:$0xff]
          %v2392 = vld [vmem:[%s2390 + $0x8] sm:$0xff]
          %v2393 = vld [vmem:[%s2390 + $0x10] sm:$0xff]
          %v2394 = vld [vmem:[%s2390 + $0x18] sm:$0xff]
          %v2395 = vld [vmem:[%s2390 + $0x20] sm:$0xff]
          %v2396 = vld [vmem:[%s2390 + $0x28] sm:$0xff]
          %v2397 = vld [vmem:[%s2390 + $0x30] sm:$0xff]
          %v2398 = vld [vmem:[%s2390 + $0x38] sm:$0xff]
          %v2399 = vld [vmem:[%s2390 + $0x40] sm:$0xff]
          %v2400 = vld [vmem:[%s2390 + $0x48] sm:$0xff]
          %v2401 = vld [vmem:[%s2390 + $0x50] sm:$0xff]
          %v2402 = vld [vmem:[%s2390 + $0x58] sm:$0xff]
          %v2403 = vld [vmem:[%s2390 + $0x60] sm:$0xff]
          %v2404 = vld [vmem:[%s2390 + $0x68] sm:$0xff]
          %v2405 = vld [vmem:[%s2390 + $0x70] sm:$0xff]
          %v2406 = vld [vmem:[%s2390 + $0x78] sm:$0xff]
          %v2407 = vpack.c.bf16 %v2383, %v2381
          %v2408 = vpack.c.bf16 %v2384, %v2382
          %v2409 = vpack.c.bf16 %v2387, %v2385
          %v2410 = vpack.c.bf16 %v2388, %v2386
          %s2411 = scalar_lea.vmem %s11, %s751
          %v2412 = vld [vmem:[%s2411] sm:$0x1]
          %v2414 = vlaneseq
          %v2415 = vshrl.u32 %v2414, 7
          %v2416 = vsub.s32 0, %v2415
          %v2417 = vrot.slane %v2412, %v2416
          %v2435 = vunpack.c.l.b16 %v2391
          %v2436 = vunpack.c.h.b16 %v2391
          %v2437 = vunpack.c.l.b16 %v2392
          %v2438 = vunpack.c.h.b16 %v2392
          %v2439 = vunpack.c.l.b16 %v2393
          %v2440 = vunpack.c.h.b16 %v2393
          %v2441 = vunpack.c.l.b16 %v2394
          %v2442 = vunpack.c.h.b16 %v2394
          %v2443 = vunpack.c.l.b16 %v2395
          %v2444 = vunpack.c.h.b16 %v2395
          %v2445 = vunpack.c.l.b16 %v2396
          %v2446 = vunpack.c.h.b16 %v2396
          %v2447 = vunpack.c.l.b16 %v2397
          %v2448 = vunpack.c.h.b16 %v2397
          %v2449 = vunpack.c.l.b16 %v2398
          %v2450 = vunpack.c.h.b16 %v2398
          %v2451 = vunpack.c.l.b16 %v2399
          %v2452 = vunpack.c.h.b16 %v2399
          %v2453 = vunpack.c.l.b16 %v2400
          %v2454 = vunpack.c.h.b16 %v2400
          %v2455 = vunpack.c.l.b16 %v2401
          %v2456 = vunpack.c.h.b16 %v2401
          %v2457 = vunpack.c.l.b16 %v2402
          %v2458 = vunpack.c.h.b16 %v2402
          %v2459 = vunpack.c.l.b16 %v2403
          %v2460 = vunpack.c.h.b16 %v2403
          %v2461 = vunpack.c.l.b16 %v2404
          %v2462 = vunpack.c.h.b16 %v2404
          %v2463 = vunpack.c.l.b16 %v2405
          %v2464 = vunpack.c.h.b16 %v2405
          %v2465 = vunpack.c.l.b16 %v2406
          %v2466 = vunpack.c.h.b16 %v2406
          %v2467 = vpack.c.b16 %v2437, %v2435
          %v2468 = vpack.c.b16 %v2438, %v2436
          %v2469 = vpack.c.b16 %v2441, %v2439
          %v2470 = vpack.c.b16 %v2442, %v2440
          %v2471 = vpack.c.b16 %v2445, %v2443
          %v2472 = vpack.c.b16 %v2446, %v2444
          %v2473 = vpack.c.b16 %v2449, %v2447
          %v2474 = vpack.c.b16 %v2450, %v2448
          %v2475 = vpack.c.b16 %v2453, %v2451
          %v2476 = vpack.c.b16 %v2454, %v2452
          %v2477 = vpack.c.b16 %v2457, %v2455
          %v2478 = vpack.c.b16 %v2458, %v2456
          %v2479 = vpack.c.b16 %v2461, %v2459
          %v2480 = vpack.c.b16 %v2462, %v2460
          %v2481 = vpack.c.b16 %v2465, %v2463
          %v2482 = vpack.c.b16 %v2466, %v2464
          %2499 = vmatprep.subr.bf16.mxu0 %v2468
          %2500 = vmatpush1.bf16.xpose.msra.mxu0 %v2467
          %2501 = vmatprep.subr.bf16.mxu0 %v2470
          %2502 = vmatpush1.bf16.xpose.msra.mxu0 %v2469
          %2503 = vmatprep.subr.bf16.mxu0 %v2472
          %2504 = vmatpush1.bf16.xpose.msra.mxu0 %v2471
          %2505 = vmatprep.subr.bf16.mxu0 %v2474
          %2506 = vmatpush1.bf16.xpose.msra.mxu0 %v2473
          %2507 = vmatprep.subr.bf16.mxu0 %v2476
          %2508 = vmatpush1.bf16.xpose.msra.mxu0 %v2475
          %2509 = vmatprep.subr.bf16.mxu0 %v2478
          %2510 = vmatpush1.bf16.xpose.msra.mxu0 %v2477
          %2511 = vmatprep.subr.bf16.mxu0 %v2480
          %2512 = vmatpush1.bf16.xpose.msra.mxu0 %v2479
          %2513 = vmatprep.subr.bf16.mxu0 %v2482
          %2514 = vmatpush1.bf16.xpose.msra.mxu0 %v2481
          %2515 = vmatprep.subr.bf16.mxu0 0
          %2516 = vmatpush1.bf16.xpose.msra.mxu0 0
          %2517 = vmatprep.subr.bf16.mxu0 0
          %2518 = vmatpush1.bf16.xpose.msra.mxu0 0
          %2519 = vmatprep.subr.bf16.mxu0 0
          %2520 = vmatpush1.bf16.xpose.msra.mxu0 0
          %2521 = vmatprep.subr.bf16.mxu0 0
          %2522 = vmatpush1.bf16.xpose.msra.mxu0 0
          %2523 = vmatprep.subr.bf16.mxu0 0
          %2524 = vmatpush1.bf16.xpose.msra.mxu0 0
          %2525 = vmatprep.subr.bf16.mxu0 0
          %2526 = vmatpush1.bf16.xpose.msra.mxu0 0
          %2527 = vmatprep.subr.bf16.mxu0 0
          %2528 = vmatpush1.bf16.xpose.msra.mxu0 0
          %2529 = vmatprep.subr.bf16.mxu0 0
          %2530 = vmatpush1.bf16.xpose.msra.mxu0 0
          %2531 = vmatprep.mubr.bf16.mxu0 %v2408
          %2532 = vmatmul.mubr.bf16.gmra.mrb[0].mxu0 %v2407
          %v2533 = vpop.f32.mrb[0].mxu0
          %v2534 = vadd.f32 %v2417, %v2533
          %v2535 = vpop.f32.mrb[0].mxu0
          %v2536 = vpop.f32.mrb[0].mxu0
          %v2537 = vadd.f32 %v2417, %v2536
          %v2538 = vpop.f32.mrb[0].mxu0
          %2539 = vmatprep.mubr.bf16.mxu0 %v2410
          %2540 = vmatmul.mubr.bf16.gmra.mrb[0].mxu0 %v2409
          %v2541 = vpop.f32.mrb[0].mxu0
          %v2542 = vadd.f32 %v2417, %v2541
          %v2543 = vpop.f32.mrb[0].mxu0
          %v2544 = vpop.f32.mrb[0].mxu0
          %v2545 = vadd.f32 %v2417, %v2544
          %v2546 = vpop.f32.mrb[0].mxu0
          %2547 = vdwg.mxu0
          %v2548 = vadd.f32 %v2179, %v2534
          %v2549 = vadd.f32 %v2180, %v2537
          %v2550 = vadd.f32 %v2181, %v2542
          %v2551 = vadd.f32 %v2182, %v2545
          %s2552 = scalar_lea.vmem %s14, %s751
          %v2553 = vld [vmem:[%s2552] sm:$0x1]
          %s2554 = scalar_lea.vmem %s15, %s751
          %v2555 = vld [vmem:[%s2554] sm:$0x1]
          %2556 = vadd.xlane.f32.xlu0 %v2548
          %v2557 = vpop.xlane.xlu0 %2556
          %2558 = vadd.xlane.f32.xlu0 %v2549
          %v2559 = vpop.xlane.xlu0 %2558
          %2560 = vadd.xlane.f32.xlu0 %v2550
          %v2561 = vpop.xlane.xlu0 %2560
          %2562 = vadd.xlane.f32.xlu0 %v2551
          %v2563 = vpop.xlane.xlu0 %2562
          %v2564 = vmul.f32 %v2557, %v2126
          %v2565 = vmul.f32 %v2559, %v2126
          %v2566 = vmul.f32 %v2561, %v2126
          %v2567 = vmul.f32 %v2563, %v2126
          %v2568 = vsub.f32 %v2548, %v2564
          %v2569 = vsub.f32 %v2549, %v2565
          %v2570 = vsub.f32 %v2550, %v2566
          %v2571 = vsub.f32 %v2551, %v2567
          %v2572 = vmul.f32 %v2568, %v2568
          %v2573 = vmul.f32 %v2569, %v2569
          %v2574 = vmul.f32 %v2570, %v2570
          %v2575 = vmul.f32 %v2571, %v2571
          %2576 = vadd.xlane.f32.xlu0 %v2572
          %v2577 = vpop.xlane.xlu0 %2576
          %2578 = vadd.xlane.f32.xlu0 %v2573
          %v2579 = vpop.xlane.xlu0 %2578
          %2580 = vadd.xlane.f32.xlu0 %v2574
          %v2581 = vpop.xlane.xlu0 %2580
          %2582 = vadd.xlane.f32.xlu0 %v2575
          %v2583 = vpop.xlane.xlu0 %2582
          %v2584 = vmul.f32 %v2577, %v2126
          %v2585 = vmul.f32 %v2579, %v2126
          %v2586 = vmul.f32 %v2581, %v2126
          %v2587 = vmul.f32 %v2583, %v2126
          %v2588 = vadd.f32 %v2584, 1e-05
          %v2589 = vadd.f32 %v2585, 1e-05
          %v2590 = vadd.f32 %v2586, 1e-05
          %v2591 = vadd.f32 %v2587, 1e-05
          %v2592 = vrsqrt.pop %v2588
          %v2593 = vrsqrt.pop %v2589
          %v2594 = vrsqrt.pop %v2590
          %v2595 = vrsqrt.pop %v2591
          %v2596 = vmul.f32 %v2568, %v2592
          %v2597 = vmul.f32 %v2569, %v2593
          %v2598 = vmul.f32 %v2570, %v2594
          %v2599 = vmul.f32 %v2571, %v2595
          %v2601 = vlaneseq
          %v2602 = vshrl.u32 %v2601, 7
          %v2603 = vsub.s32 0, %v2602
          %v2604 = vrot.slane %v2553, %v2603
          %v2606 = vmul.f32 %v2596, %v2604
          %v2607 = vmul.f32 %v2597, %v2604
          %v2608 = vmul.f32 %v2598, %v2604
          %v2609 = vmul.f32 %v2599, %v2604
          %v2611 = vlaneseq
          %v2612 = vshrl.u32 %v2611, 7
          %v2613 = vsub.s32 0, %v2612
          %v2614 = vrot.slane %v2555, %v2613
          %v2616 = vadd.f32 %v2606, %v2614
          %v2617 = vadd.f32 %v2607, %v2614
          %v2618 = vadd.f32 %v2608, %v2614
          %v2619 = vadd.f32 %v2609, %v2614
          %2620 = vst [vmem:[#allocation2] sm:$0xff] %v2616
          %2621 = vst [vmem:[#allocation2 + $0x8] sm:$0xff] %v2617
          %2622 = vst [vmem:[#allocation2 + $0x10] sm:$0xff] %v2618
          %2623 = vst [vmem:[#allocation2 + $0x18] sm:$0xff] %v2619
        $region125: #{tpu_custom_call.1} parent=91 // loop_footer
          %s755 = sadd.s32 1, %s751
        $region126: #{tpu_custom_call.1} parent=91 // loop_footer_branch
          %750 = sbr.rel target = $region122
        $region127: #{tpu_custom_call.1} parent=91 // loop_exit
          _
        %v2624 = vld [vmem:[#allocation2] sm:$0xff]
        %v2625 = vld [vmem:[#allocation2 + $0x8] sm:$0xff]
        %v2626 = vld [vmem:[#allocation2 + $0x10] sm:$0xff]
        %v2627 = vld [vmem:[#allocation2 + $0x18] sm:$0xff]
        %v2628 = vld [vmem:[%s16] sm:$0x1]
        %v2629 = vld [vmem:[%s17] sm:$0x1]
        %2630 = vadd.xlane.f32.xlu0 %v2624
        %v2631 = vpop.xlane.xlu0 %2630
        %2632 = vadd.xlane.f32.xlu0 %v2625
        %v2633 = vpop.xlane.xlu0 %2632
        %2634 = vadd.xlane.f32.xlu0 %v2626
        %v2635 = vpop.xlane.xlu0 %2634
        %2636 = vadd.xlane.f32.xlu0 %v2627
        %v2637 = vpop.xlane.xlu0 %2636
        %v2638 = vrcp.pop 128.0
        %v2639 = vmul.f32 %v2631, %v2638
        %v2640 = vmul.f32 %v2633, %v2638
        %v2641 = vmul.f32 %v2635, %v2638
        %v2642 = vmul.f32 %v2637, %v2638
        %v2643 = vsub.f32 %v2624, %v2639
        %v2644 = vsub.f32 %v2625, %v2640
        %v2645 = vsub.f32 %v2626, %v2641
        %v2646 = vsub.f32 %v2627, %v2642
        %v2647 = vmul.f32 %v2643, %v2643
        %v2648 = vmul.f32 %v2644, %v2644
        %v2649 = vmul.f32 %v2645, %v2645
        %v2650 = vmul.f32 %v2646, %v2646
        %2651 = vadd.xlane.f32.xlu0 %v2647
        %v2652 = vpop.xlane.xlu0 %2651
        %2653 = vadd.xlane.f32.xlu0 %v2648
        %v2654 = vpop.xlane.xlu0 %2653
        %2655 = vadd.xlane.f32.xlu0 %v2649
        %v2656 = vpop.xlane.xlu0 %2655
        %2657 = vadd.xlane.f32.xlu0 %v2650
        %v2658 = vpop.xlane.xlu0 %2657
        %v2659 = vmul.f32 %v2652, %v2638
        %v2660 = vmul.f32 %v2654, %v2638
        %v2661 = vmul.f32 %v2656, %v2638
        %v2662 = vmul.f32 %v2658, %v2638
        %v2663 = vadd.f32 %v2659, 1e-05
        %v2664 = vadd.f32 %v2660, 1e-05
        %v2665 = vadd.f32 %v2661, 1e-05
        %v2666 = vadd.f32 %v2662, 1e-05
        %v2667 = vrsqrt.pop %v2663
        %v2668 = vrsqrt.pop %v2664
        %v2669 = vrsqrt.pop %v2665
        %v2670 = vrsqrt.pop %v2666
        %v2671 = vmul.f32 %v2643, %v2667
        %v2672 = vmul.f32 %v2644, %v2668
        %v2673 = vmul.f32 %v2645, %v2669
        %v2674 = vmul.f32 %v2646, %v2670
        %v2676 = vlaneseq
        %v2677 = vshrl.u32 %v2676, 7
        %v2678 = vsub.s32 0, %v2677
        %v2679 = vrot.slane %v2628, %v2678
        %v2681 = vmul.f32 %v2671, %v2679
        %v2682 = vmul.f32 %v2672, %v2679
        %v2683 = vmul.f32 %v2673, %v2679
        %v2684 = vmul.f32 %v2674, %v2679
        %v2686 = vlaneseq
        %v2687 = vshrl.u32 %v2686, 7
        %v2688 = vsub.s32 0, %v2687
        %v2689 = vrot.slane %v2629, %v2688
        %v2691 = vadd.f32 %v2681, %v2689
        %v2692 = vadd.f32 %v2682, %v2689
        %v2693 = vadd.f32 %v2683, %v2689
        %v2694 = vadd.f32 %v2684, %v2689
        %2695 = vst [vmem:[%s707] sm:$0xff] %v2691
        %2696 = vst [vmem:[%s707 + $0x8] sm:$0xff] %v2692
        %2697 = vst [vmem:[%s707 + $0x10] sm:$0xff] %v2693
        %2698 = vst [vmem:[%s707 + $0x18] sm:$0xff] %v2694
        %s2699 = sand.u32 %s436, 1
        %s2700 = scalar_lea.sflag [#allocation5], %s2699
        %s2701 = sand.u32 %s436, 1
        %s2702 = smul.addr %s2701, 32
        %s2703 = scalar_lea.vmem [#allocation15], %s2702
        // Predicated region
        $region128: #{tpu_custom_call.1} parent=91 // pred_check
          %p2704 = pneg %p446
        $region129: #{tpu_custom_call.1} parent=91 // pred_check_branch
          %2706 = sbr.rel (%p2704) target = $region131
        $region130: #{tpu_custom_call.1} parent=91 // pred_region
          %s2707 = smul.u32 2, %s40
          %s2709 = ssub.s32 512, 512
          %2710 = vsyncadd %s2700, %s2709
          %s2711 = smul.addr %s2707, 2
          %s2712 = smul.addr %s2711, 128
          %s2713 = scalar_lea.hbm %s18, %s2712
          %s2714 = sshll.u32 %s2703, 4
          %s2715 = int_to_ptr.vmem [resolvable:$true] %s2714
          %2720 = dma.vmem_to_hbm [thread:$0]  %s2715, 512, %s2713, %s2700, 128, 128, 8
        $region131: #{tpu_custom_call.1} parent=91 // pred_fallthru
          _
      $region92: #{tpu_custom_call.1} parent=5 // pred_fallthru
        _
      %p2721 = scmp.le.s32.totalorder 2, %s35
      // Predicated region
      $region132: #{tpu_custom_call.1} parent=5 // pred_check
        %p2722 = pneg %p2721
      $region133: #{tpu_custom_call.1} parent=5 // pred_check_branch
        %2724 = sbr.rel (%p2722) target = $region135
      $region134: #{tpu_custom_call.1} parent=5 // pred_region
        %s2725 = ssub.s32 %s35, 2
        // Predicated region
        $region136: #{tpu_custom_call.1} parent=134 // pred_check
          %p2726 = pneg %p452
        $region137: #{tpu_custom_call.1} parent=134 // pred_check_branch
          %2728 = sbr.rel (%p2726) target = $region139
        $region138: #{tpu_custom_call.1} parent=134 // pred_region
          %s2729 = sand.u32 %s437, 1
          %s2730 = scalar_lea.sflag [#allocation5], %s2729
          %s2731 = sand.u32 %s437, 1
          %s2732 = smul.addr %s2731, 32
          %s2733 = scalar_lea.vmem [#allocation15], %s2732
          %2734 = dma.done %s2730, 512
        $region139: #{tpu_custom_call.1} parent=134 // pred_fallthru
          _
      $region135: #{tpu_custom_call.1} parent=5 // pred_fallthru
        _
    $region6: #{tpu_custom_call.1} parent=1 // loop_footer
      %s39 = sadd.s32 1, %s35
    $region7: #{tpu_custom_call.1} parent=1 // loop_footer_branch
      %34 = sbr.rel target = $region3
    $region8: #{tpu_custom_call.1} parent=1 // loop_exit
      _
    %2735 = vsyncpa [#allocation4], 1
    %s2736 = scalar_lea.sflag [#allocation4], 1
    %2737 = vsyncpa %s2736, 1
    %2738 = vsyncpa [#allocation7], 1
    %s2739 = scalar_lea.sflag [#allocation7], 1
    %2740 = vsyncpa %s2739, 1
    %2741 = vsyncpa [#allocation10], 1
    %2742 = vsyncpa [#allocation13], 1
    %2743 = vsyncpa [#allocation5], 1
    %s2744 = scalar_lea.sflag [#allocation5], 1
    %2745 = vsyncpa %s2744, 1

</llo_original>
